<compile_context>
chip_gen: v6e
topology: v6e:2x2x1
jax: 0.10.0
libtpu: 0.0.40
codegen_flags: <defaults>
</compile_context>

<pallas_src>
import jax
import jax.numpy as jnp
from jax import lax
from jax.experimental import pallas as pl
from jax.experimental.pallas import tpu as pltpu

BN_EPS = 1e-5
CP = 128          # zero-padded channel / lane width for intermediate activations
C2OUT = 256       # layer2 output channels (64 * expansion 4)
NUM_CLASSES = 10


# ---------------------------------------------------------------------------
# Weight-slab layout: 128 K-rows, one 128-aligned lane band per matmul operand.
# Column offsets are compile-time constants shared by the wrapper (packing)
# and the kernel (slicing).
# ---------------------------------------------------------------------------
def _slab_cols():
  cols = {
      'l1a': 0,      # [l1 conv1 (BN folded) | l1 downsample]          width 256
      'l1b': 256,    # l1 conv2 (BN folded)                            width 128
      'l1c': 384,    # l1 conv3 (BN folded)                            width 128
      'l2a': 512,    # [l2 conv1 | pad | l2 downsample (256 wide)]     width 384
      'l2b': 896,    # l2 conv2                                        width 128
      'l2c': 1024,   # l2 conv3                                        width 256
      'stem': 1280,  # 3x3 im2col weight (27 rows) + bias row          width 128
  }
  width = 1280 + 128
  return cols, width


# ---------------------------------------------------------------------------
# Pallas kernel: stem conv + two Bottleneck blocks + fc, fully fused.
# Activations are 2-D: rows = (b, ho, wo) over the stride-2-kept positions
# only (b-major), cols = channels padded to 128 lanes; every 1x1 conv is a
# channel matmul on the MXU.
# ---------------------------------------------------------------------------
def _make_kernel(B, S2, cols):
  f32, bf16 = jnp.float32, jnp.bfloat16

  def kernel(xcols_ref, wslab_ref, wfc_ref, bfc_ref, out_ref):
    def wsec(name, nrows, ncols):    # static, sublane/lane-aligned window read
      return wslab_ref[pl.ds(0, nrows), pl.ds(cols[name], ncols)]

    def mm(a, b):                    # bf16 MXU operands, f32 accumulation
      return jnp.dot(a, b, preferred_element_type=f32)

    relu = lambda v: jnp.maximum(v, 0.0)

    # Stem: conv1 (3x3, stride 1, pad 1) as an im2col matmul over the kept
    # positions only.  The conv bias is folded in via a trailing ones column.
    h0 = relu(mm(xcols_ref[...], wsec('stem', 32, CP)))              # (S2B, 128)

    # layer1 bottleneck (16->16->16->64): conv1 and the 1x1 downsample share
    # their LHS, so they are one matmul against [conv1 | downsample].
    u = mm(h0.astype(bf16), wsec('l1a', CP, 2 * CP))                 # (S2B, 256)
    t = relu(u[:, :CP])
    res = u[:, CP:]
    t = relu(mm(t.astype(bf16), wsec('l1b', CP, CP)))
    t = mm(t.astype(bf16), wsec('l1c', CP, CP))
    h1 = relu(t + res)                                               # (S2B, 128)

    # layer2 bottleneck (64->64->64->256), fused conv1 + downsample.  The
    # stride-2 subsample is already baked into the row set, so no selection
    # matmul / slice is needed here.
    u = mm(h1.astype(bf16), wsec('l2a', CP, CP + C2OUT))             # (S2B, 384)
    t = relu(u[:, :CP])
    res = u[:, CP:]
    t = relu(mm(t.astype(bf16), wsec('l2b', CP, CP)))
    t = mm(t.astype(bf16), wsec('l2c', CP, C2OUT))
    h2 = relu(t + res)                                               # (S2B, 256)

    # fc head: rows are b-major, so the torch NCHW flatten per batch becomes a
    # single aligned reshape (lane index = s*256 + c; wfc is pre-permuted from
    # torch's c*S2 + s), feeding ONE K = S2*256 = 4096 matmul with a
    # 128-lane-padded output (unmasked stores).
    h2_flat = h2.reshape(B, S2 * C2OUT).astype(bf16)                 # (B, 4096)
    out_ref[...] = mm(h2_flat, wfc_ref[...]) + bfc_ref[...]          # (B, 128)

  return kernel


# ---------------------------------------------------------------------------
# JAX glue: parameter init, strided im2col, weight packing, wrapper.
# ---------------------------------------------------------------------------
def make_params(key):
  ks = jax.random.split(key, 12)

  def conv_w(k, out_c, in_c, kh, kw):
    # nn.Conv2d init in TinyBagNet.__init__: normal(0, sqrt(2 / (kh*kw*out_c)))
    std = (2.0 / (kh * kw * out_c)) ** 0.5
    return std * jax.random.normal(k, (out_c, in_c, kh, kw), jnp.float32)

  p = {}
  p['w1'] = conv_w(ks[0], 16, 3, 3, 3)
  bound = 1.0 / ((3 * 3 * 3) ** 0.5)
  p['b1'] = jax.random.uniform(ks[1], (16,), jnp.float32, -bound, bound)
  # layer1 Bottleneck: 16 -> 16 -> 16 -> 64, downsample 16 -> 64
  p['l1w1'] = conv_w(ks[2], 16, 16, 1, 1)
  p['l1w2'] = conv_w(ks[3], 16, 16, 1, 1)
  p['l1w3'] = conv_w(ks[4], 64, 16, 1, 1)
  p['l1wd'] = conv_w(ks[5], 64, 16, 1, 1)
  # layer2 Bottleneck: 64 -> 64 -> 64 -> 256, downsample 64 -> 256
  p['l2w1'] = conv_w(ks[6], 64, 64, 1, 1)
  p['l2w2'] = conv_w(ks[7], 64, 64, 1, 1)
  p['l2w3'] = conv_w(ks[8], 256, 64, 1, 1)
  p['l2wd'] = conv_w(ks[9], 256, 64, 1, 1)
  # fc (4096 -> 10)
  bound = 1.0 / (4096.0 ** 0.5)
  p['wfc'] = jax.random.uniform(ks[10], (NUM_CLASSES, 4096), jnp.float32, -bound, bound)
  p['bfc'] = jax.random.uniform(ks[11], (NUM_CLASSES,), jnp.float32, -bound, bound)
  # BatchNorm as initialized by TinyBagNet.__init__ (eval mode, scalar scale).
  p['bn_scale'] = jnp.float32(1.0 / (1.0 + BN_EPS) ** 0.5)
  return p


def _im2col_3x3_strided_bmajor(x_nchw):
  """3x3/pad-1 im2col evaluated only at the stride-2-kept positions (2ho, 2wo).

  Rows ordered (b, ho, wo) (b-major); columns ordered (ky, kx, cin) to match
  the packed stem weight."""
  B, C, H, W = x_nchw.shape
  assert H % 2 == 0 and W % 2 == 0
  H2, W2 = H // 2, W // 2
  x = jnp.transpose(x_nchw, (0, 2, 3, 1))                       # NHWC
  xp = jnp.pad(x, ((0, 0), (1, 1), (1, 1), (0, 0)))             # (B, H+2, W+2, C)
  cols = [xp[:, ky:ky + H:2, kx:kx + W:2, :]                    # (B, H2, W2, C)
          for ky in range(3) for kx in range(3)]
  patches = jnp.stack(cols, axis=3)                             # (B, H2, W2, 9, C)
  return patches.reshape(B * H2 * W2, 9 * C)


def prepare_weights(p, B, H, W):
  """One-time: fold eval-mode BN, lane-concatenate all small weights into one
  bf16 slab, pre-permute + lane-pad the fc weight for the kernel's
  (spatial, channel) flatten."""
  s = p['bn_scale']
  assert H % 2 == 0 and W % 2 == 0, "stride-2 row layout assumes even H, W"
  H2, W2 = H // 2, W // 2
  S2 = H2 * W2
  assert p['wfc'].shape == (NUM_CLASSES, S2 * C2OUT), p['wfc'].shape
  assert S2 % 8 == 0 and (B * S2) % 8 == 0   # sublane alignment of the fc flatten

  cols, width = _slab_cols()

  def w1x1(w, scale):   # torch (out, in, 1, 1) -> (in, out) with BN scale folded
    return jnp.transpose(w[:, :, 0, 0]) * scale

  slab = jnp.zeros((CP, width), jnp.float32)
  # layer1: 16 -> 16 -> 16 -> 64, downsample 16 -> 64 (no BN in downsample).
  slab = slab.at[0:16, cols['l1a'] + 0:cols['l1a'] + 16].set(w1x1(p['l1w1'], s))
  slab = slab.at[0:16, cols['l1a'] + CP:cols['l1a'] + CP + 64].set(w1x1(p['l1wd'], 1.0))
  slab = slab.at[0:16, cols['l1b']:cols['l1b'] + 16].set(w1x1(p['l1w2'], s))
  slab = slab.at[0:16, cols['l1c']:cols['l1c'] + 64].set(w1x1(p['l1w3'], s))
  # layer2: 64 -> 64 -> 64 -> 256, downsample 64 -> 256 (no BN in downsample).
  slab = slab.at[0:64, cols['l2a'] + 0:cols['l2a'] + 64].set(w1x1(p['l2w1'], s))
  slab = slab.at[0:64, cols['l2a'] + CP:cols['l2a'] + CP + C2OUT].set(w1x1(p['l2wd'], 1.0))
  slab = slab.at[0:64, cols['l2b']:cols['l2b'] + 64].set(w1x1(p['l2w2'], s))
  slab = slab.at[0:64, cols['l2c']:cols['l2c'] + C2OUT].set(w1x1(p['l2w3'], s))
  # stem: (ky,kx,cin)-ordered 3x3 weight (27 rows) + bias row (row 27, consumed
  # by the ones column of xcols); rows 28..31 stay zero for the K padding.
  wstem = jnp.transpose(p['w1'], (2, 3, 1, 0)).reshape(27, 16)
  slab = slab.at[0:27, cols['stem']:cols['stem'] + 16].set(wstem)
  slab = slab.at[27, cols['stem']:cols['stem'] + 16].set(p['b1'])

  # fc weight: torch flatten index is c*S2 + s; kernel lane index is s*256 + c.
  # Pad the output dim to 128 lanes (kernel output is lane-dense, sliced later).
  wfc = (p['wfc'].reshape(NUM_CLASSES, C2OUT, S2)
         .transpose(2, 1, 0).reshape(S2 * C2OUT, NUM_CLASSES))
  wfc_pad = jnp.zeros((S2 * C2OUT, CP), jnp.float32).at[:, :NUM_CLASSES].set(wfc)
  bfc_pad = jnp.zeros((1, CP), jnp.float32).at[0, :NUM_CLASSES].set(p['bfc'])
  return slab.astype(jnp.bfloat16), wfc_pad.astype(jnp.bfloat16), bfc_pad


@jax.jit
def tinybagnet_forward(x_nchw, wslab, wfc, bfc):
  B, C, H, W = x_nchw.shape
  assert C == 3 and H % 2 == 0 and W % 2 == 0
  H2, W2 = H // 2, W // 2
  S2 = H2 * W2
  S2B = B * S2
  cols, width = _slab_cols()
  assert wslab.shape == (CP, width)
  assert wfc.shape == (S2 * C2OUT, CP)

  # im2col only at the stride-2-kept positions: every block conv is 1x1, so
  # no other spatial position can influence the logits (this removes both the
  # dead 3/4 of the rows and the dense stride-2 selection matmul of v2).
  xcols = _im2col_3x3_strided_bmajor(x_nchw)                          # (S2B, 27)
  ones = jnp.ones((S2B, 1), jnp.float32)                              # stem-bias column
  pad = jnp.zeros((S2B, 4), jnp.float32)                              # pad K to 32
  xcols_aug = jnp.concatenate([xcols, ones, pad], axis=1).astype(jnp.bfloat16)

  vmem = pl.BlockSpec(memory_space=pltpu.MemorySpace.VMEM)
  # Gridless whole-array-in-VMEM call: total operand footprint is ~1.4 MiB,
  # far below every generation's VMEM limit (see TODOs at the top for the
  # row-tile grid plan at realistic sizes).
  out = pl.pallas_call(
      _make_kernel(B, S2, cols),
      out_shape=jax.ShapeDtypeStruct((B, CP), jnp.float32),
      in_specs=[vmem, vmem, vmem, vmem],
      out_specs=vmem,
  )(xcols_aug, wslab, wfc, bfc)
  return out[:, :NUM_CLASSES]


# ---------------------------------------------------------------------------
# Pure-JAX f32 reference (NCHW, mirrors the PyTorch forward in eval mode)
# ---------------------------------------------------------------------------
def reference_forward(x_nchw, p):
  s = p['bn_scale']

  def conv(x, w, stride=1, pad=0):
    return lax.conv_general_dilated(
        x, w, (stride, stride), ((pad, pad), (pad, pad)),
        dimension_numbers=('NCHW', 'OIHW', 'NCHW'))

  relu = lambda v: jnp.maximum(v, 0.0)
  y = relu(conv(x_nchw, p['w1'], 1, 1) + p['b1'][None, :, None, None])

  def bottleneck(y, w1, w2, w3, wd, stride):
    t = relu(conv(y, w1) * s)
    t = relu(conv(t, w2, stride) * s)
    t = conv(t, w3) * s
    r = conv(y, wd, stride)                 # downsample has no BN (per _make_layer)
    return relu(t + r)

  y = bottleneck(y, p['l1w1'], p['l1w2'], p['l1w3'], p['l1wd'], 1)
  y = bottleneck(y, p['l2w1'], p['l2w2'], p['l2w3'], p['l2wd'], 2)
  flat = y.reshape(y.shape[0], -1)          # NCHW flatten == torch .view(B, -1)
  return flat @ p['wfc'].T + p['bfc'][None, :]


if __name__ == "__main__":
  key = jax.random.PRNGKey(0)
  kx, kp = jax.random.split(key)
  # 8x8 input -> layer2 output (B, 256, 4, 4) -> 4096 features for the fc head.
  x = jax.random.normal(kx, (2, 3, 8, 8), jnp.float32)
  params = make_params(kp)

  wslab, wfc, bfc = prepare_weights(params, 2, 8, 8)   # constants, built once
  out = tinybagnet_forward(x, wslab, wfc, bfc)
  out = jax.block_until_ready(out)

  ref = reference_forward(x, params)
  assert out.shape == (2, NUM_CLASSES), out.shape
  # bf16 MXU operands (f32 accumulation) vs the f32 reference -> loosened tol.
  if not bool(jnp.allclose(out, ref, atol=2e-2, rtol=2e-2)):
    err = float(jnp.max(jnp.abs(out - ref)))
    raise AssertionError(f"Pallas kernel does not match JAX reference (max |err|={err})")
  print("KERNEL_OK")
</pallas_src>

<mosaic_0001>
module attributes {stable_mosaic.version = 11 : i64} {
  func.func @kernel(%arg0: memref<32x32xbf16, #tpu.memory_space<vmem>>, %arg1: memref<128x1408xbf16, #tpu.memory_space<vmem>>, %arg2: memref<4096x128xbf16, #tpu.memory_space<vmem>>, %arg3: memref<1x128xf32, #tpu.memory_space<vmem>>, %arg4: memref<2x128xf32, #tpu.memory_space<vmem>>) attributes {dimension_semantics = [], scalar_prefetch = 0 : i64, scratch_operands = 0 : i64, tpu.core_type = #tpu.core_type<tc>} {
    %c0 = arith.constant 0 : index
    %c0_0 = arith.constant 0 : index
    %0 = vector.load %arg0[%c0, %c0_0] : memref<32x32xbf16, #tpu.memory_space<vmem>>, vector<32x32xbf16>
    %c0_1 = arith.constant 0 : index
    %c1280 = arith.constant 1280 : index
    %1 = vector.load %arg1[%c0_1, %c1280] : memref<128x1408xbf16, #tpu.memory_space<vmem>>, vector<32x128xbf16>
    %cst = arith.constant dense<0.000000e+00> : vector<32x128xf32>
    %2 = tpu.matmul %0, %1, %cst {dimension_numbers = #tpu.dot_dimension_numbers<[1], [0], [0], [1], [0, 0, 1, 1], [], []>} : vector<32x32xbf16>, vector<32x128xbf16>, vector<32x128xf32> -> vector<32x128xf32>
    %cst_2 = arith.constant 0.000000e+00 : f32
    %3 = vector.broadcast %cst_2 : f32 to vector<32x128xf32>
    %4 = arith.maximumf %2, %3 : vector<32x128xf32>
    %5 = arith.truncf %4 : vector<32x128xf32> to vector<32x128xbf16>
    %c0_3 = arith.constant 0 : index
    %c0_4 = arith.constant 0 : index
    %6 = vector.load %arg1[%c0_3, %c0_4] : memref<128x1408xbf16, #tpu.memory_space<vmem>>, vector<128x256xbf16>
    %cst_5 = arith.constant dense<0.000000e+00> : vector<32x256xf32>
    %7 = tpu.matmul %5, %6, %cst_5 {dimension_numbers = #tpu.dot_dimension_numbers<[1], [0], [0], [1], [0, 0, 1, 1], [], []>} : vector<32x128xbf16>, vector<128x256xbf16>, vector<32x256xf32> -> vector<32x256xf32>
    %8 = vector.extract_strided_slice %7 {offsets = [0, 0], sizes = [32, 128], strides = [1, 1]} : vector<32x256xf32> to vector<32x128xf32>
    %cst_6 = arith.constant 0.000000e+00 : f32
    %9 = vector.broadcast %cst_6 : f32 to vector<32x128xf32>
    %10 = arith.maximumf %8, %9 : vector<32x128xf32>
    %11 = vector.extract_strided_slice %7 {offsets = [0, 128], sizes = [32, 128], strides = [1, 1]} : vector<32x256xf32> to vector<32x128xf32>
    %12 = arith.truncf %10 : vector<32x128xf32> to vector<32x128xbf16>
    %c0_7 = arith.constant 0 : index
    %c256 = arith.constant 256 : index
    %13 = vector.load %arg1[%c0_7, %c256] : memref<128x1408xbf16, #tpu.memory_space<vmem>>, vector<128x128xbf16>
    %cst_8 = arith.constant dense<0.000000e+00> : vector<32x128xf32>
    %14 = tpu.matmul %12, %13, %cst_8 {dimension_numbers = #tpu.dot_dimension_numbers<[1], [0], [0], [1], [0, 0, 1, 1], [], []>} : vector<32x128xbf16>, vector<128x128xbf16>, vector<32x128xf32> -> vector<32x128xf32>
    %cst_9 = arith.constant 0.000000e+00 : f32
    %15 = vector.broadcast %cst_9 : f32 to vector<32x128xf32>
    %16 = arith.maximumf %14, %15 : vector<32x128xf32>
    %17 = arith.truncf %16 : vector<32x128xf32> to vector<32x128xbf16>
    %c0_10 = arith.constant 0 : index
    %c384 = arith.constant 384 : index
    %18 = vector.load %arg1[%c0_10, %c384] : memref<128x1408xbf16, #tpu.memory_space<vmem>>, vector<128x128xbf16>
    %cst_11 = arith.constant dense<0.000000e+00> : vector<32x128xf32>
    %19 = tpu.matmul %17, %18, %cst_11 {dimension_numbers = #tpu.dot_dimension_numbers<[1], [0], [0], [1], [0, 0, 1, 1], [], []>} : vector<32x128xbf16>, vector<128x128xbf16>, vector<32x128xf32> -> vector<32x128xf32>
    %20 = arith.addf %19, %11 : vector<32x128xf32>
    %cst_12 = arith.constant 0.000000e+00 : f32
    %21 = vector.broadcast %cst_12 : f32 to vector<32x128xf32>
    %22 = arith.maximumf %20, %21 : vector<32x128xf32>
    %23 = arith.truncf %22 : vector<32x128xf32> to vector<32x128xbf16>
    %c0_13 = arith.constant 0 : index
    %c512 = arith.constant 512 : index
    %24 = vector.load %arg1[%c0_13, %c512] : memref<128x1408xbf16, #tpu.memory_space<vmem>>, vector<128x384xbf16>
    %cst_14 = arith.constant dense<0.000000e+00> : vector<32x384xf32>
    %25 = tpu.matmul %23, %24, %cst_14 {dimension_numbers = #tpu.dot_dimension_numbers<[1], [0], [0], [1], [0, 0, 1, 1], [], []>} : vector<32x128xbf16>, vector<128x384xbf16>, vector<32x384xf32> -> vector<32x384xf32>
    %26 = vector.extract_strided_slice %25 {offsets = [0, 0], sizes = [32, 128], strides = [1, 1]} : vector<32x384xf32> to vector<32x128xf32>
    %cst_15 = arith.constant 0.000000e+00 : f32
    %27 = vector.broadcast %cst_15 : f32 to vector<32x128xf32>
    %28 = arith.maximumf %26, %27 : vector<32x128xf32>
    %29 = vector.extract_strided_slice %25 {offsets = [0, 128], sizes = [32, 256], strides = [1, 1]} : vector<32x384xf32> to vector<32x256xf32>
    %30 = arith.truncf %28 : vector<32x128xf32> to vector<32x128xbf16>
    %c0_16 = arith.constant 0 : index
    %c896 = arith.constant 896 : index
    %31 = vector.load %arg1[%c0_16, %c896] : memref<128x1408xbf16, #tpu.memory_space<vmem>>, vector<128x128xbf16>
    %cst_17 = arith.constant dense<0.000000e+00> : vector<32x128xf32>
    %32 = tpu.matmul %30, %31, %cst_17 {dimension_numbers = #tpu.dot_dimension_numbers<[1], [0], [0], [1], [0, 0, 1, 1], [], []>} : vector<32x128xbf16>, vector<128x128xbf16>, vector<32x128xf32> -> vector<32x128xf32>
    %cst_18 = arith.constant 0.000000e+00 : f32
    %33 = vector.broadcast %cst_18 : f32 to vector<32x128xf32>
    %34 = arith.maximumf %32, %33 : vector<32x128xf32>
    %35 = arith.truncf %34 : vector<32x128xf32> to vector<32x128xbf16>
    %c0_19 = arith.constant 0 : index
    %c1024 = arith.constant 1024 : index
    %36 = vector.load %arg1[%c0_19, %c1024] : memref<128x1408xbf16, #tpu.memory_space<vmem>>, vector<128x256xbf16>
    %cst_20 = arith.constant dense<0.000000e+00> : vector<32x256xf32>
    %37 = tpu.matmul %35, %36, %cst_20 {dimension_numbers = #tpu.dot_dimension_numbers<[1], [0], [0], [1], [0, 0, 1, 1], [], []>} : vector<32x128xbf16>, vector<128x256xbf16>, vector<32x256xf32> -> vector<32x256xf32>
    %38 = arith.addf %37, %29 : vector<32x256xf32>
    %cst_21 = arith.constant 0.000000e+00 : f32
    %39 = vector.broadcast %cst_21 : f32 to vector<32x256xf32>
    %40 = arith.maximumf %38, %39 : vector<32x256xf32>
    %41 = vector.shape_cast %40 : vector<32x256xf32> to vector<2x4096xf32>
    %42 = arith.truncf %41 : vector<2x4096xf32> to vector<2x4096xbf16>
    %c0_22 = arith.constant 0 : index
    %c0_23 = arith.constant 0 : index
    %43 = vector.load %arg2[%c0_22, %c0_23] : memref<4096x128xbf16, #tpu.memory_space<vmem>>, vector<4096x128xbf16>
    %cst_24 = arith.constant dense<0.000000e+00> : vector<2x128xf32>
    %44 = tpu.matmul %42, %43, %cst_24 {dimension_numbers = #tpu.dot_dimension_numbers<[1], [0], [0], [1], [0, 0, 1, 1], [], []>} : vector<2x4096xbf16>, vector<4096x128xbf16>, vector<2x128xf32> -> vector<2x128xf32>
    %c0_25 = arith.constant 0 : index
    %c0_26 = arith.constant 0 : index
    %45 = vector.load %arg3[%c0_25, %c0_26] : memref<1x128xf32, #tpu.memory_space<vmem>>, vector<1x128xf32>
    %46 = vector.broadcast %45 : vector<1x128xf32> to vector<2x128xf32>
    %47 = arith.addf %44, %46 : vector<2x128xf32>
    %c0_27 = arith.constant 0 : index
    %c0_28 = arith.constant 0 : index
    %48 = vector.load %arg4[%c0_27, %c0_28] : memref<2x128xf32, #tpu.memory_space<vmem>>, vector<2x128xf32>
    tpu.vector_store %arg4[%c0_27, %c0_28], %47 {strides = array<i32>} : memref<2x128xf32, #tpu.memory_space<vmem>>, vector<2x128xf32>,
    return
  }
}

</mosaic_0001>

<llo_original>
// kernel: tinybagnet_forward.1
$region0: #{tinybagnet_forward.1}
  #allocation0 [shape = 'u32[]', space=smem, size = 0x4, offset = 0x4, fixed_abs, tag = 'smem constant byte address 0x4 - core index']
  #allocation1 [shape = 'u32[144,128]{1,0:T(1,128)}', space=vmem, size = 0x12000, scoped, tag = 'internal scratch']
  %s0 = inlined_call_operand.vmem [shape: bf16[32,32], index: 0, kind: input, shape index: {}]
  %s1 = inlined_call_operand.vmem [shape: bf16[128,1408], index: 1, kind: input, shape index: {}]
  %s2 = inlined_call_operand.hbm [shape: bf16[4096,128], index: 2, kind: input, shape index: {}]
  %s3 = inlined_call_operand.vmem [shape: f32[1,128], index: 3, kind: input, shape index: {}]
  %s4 = inlined_call_operand.hbm [shape: f32[2,128], index: 4, kind: output, shape index: {}]
  %s5 = sld [smem:[#allocation0]]
  $region30: #{tinybagnet_forward.1} parent=0
    _
  %s7 = ssub.s32 1, %s5
  %s8 = scalar_select 0, %s7, %s5
  $region1: #{tinybagnet_forward.1} parent=0
    #allocation2 [shape = 'u8[1048576]{0}', space=vmem, size = 0x100000, scoped, tag = 'input window, operand 2, single buffered']
    #allocation3 [shape = 's32[1]{0}', space=sflag, size = 0x4, scoped, tag = 'scoped memory for tinybagnet_forward.1']
    #allocation4 [shape = 's32[1]{0}', space=sflag, size = 0x4, scoped, tag = 'scoped memory for tinybagnet_forward.1']
    #allocation5 [shape = 'u8[1024]{0}', space=vmem, size = 0x400, scoped, tag = 'output window, operand 0, single buffered']
    %9 = vsyncpa [#allocation3], 0
    %10 = vsyncpa [#allocation4], 0
    // Predicated region
    $region2: #{tinybagnet_forward.1} parent=1 // pred_check
      _
    $region3: #{tinybagnet_forward.1} parent=1 // pred_check_branch
      %12 = sbr.rel (0) target = $region5
    $region4: #{tinybagnet_forward.1} parent=1 // pred_region
      _
    $region5: #{tinybagnet_forward.1} parent=1 // pred_fallthru
      _
    // Predicated region
    $region6: #{tinybagnet_forward.1} parent=1 // pred_check
      _
    $region7: #{tinybagnet_forward.1} parent=1 // pred_check_branch
      %14 = sbr.rel (0) target = $region9
    $region8: #{tinybagnet_forward.1} parent=1 // pred_region
      _
    $region9: #{tinybagnet_forward.1} parent=1 // pred_fallthru
      _
    // Predicated region
    $region10: #{tinybagnet_forward.1} parent=1 // pred_check
      _
    $region11: #{tinybagnet_forward.1} parent=1 // pred_check_branch
      %16 = sbr.rel (0) target = $region13
    $region12: #{tinybagnet_forward.1} parent=1 // pred_region
      %s18 = ssub.s32 32768, 32768
      %19 = vsyncadd [#allocation3], %s18
      %s20 = sshll.u32 [#allocation2], 4
      %s21 = int_to_ptr.vmem [resolvable:$true] %s20
      %26 = dma.hbm_to_vmem [thread:$0]  %s2, 32768, %s21, [#allocation3], 64, 64, 4
    $region13: #{tinybagnet_forward.1} parent=1 // pred_fallthru
      _
    // Predicated region
    $region14: #{tinybagnet_forward.1} parent=1 // pred_check
      _
    $region15: #{tinybagnet_forward.1} parent=1 // pred_check_branch
      %28 = sbr.rel (0) target = $region17
    $region16: #{tinybagnet_forward.1} parent=1 // pred_region
      _
    $region17: #{tinybagnet_forward.1} parent=1 // pred_fallthru
      _
    // Predicated region
    $region18: #{tinybagnet_forward.1} parent=1 // pred_check
      _
    $region19: #{tinybagnet_forward.1} parent=1 // pred_check_branch
      %30 = sbr.rel (0) target = $region21
    $region20: #{tinybagnet_forward.1} parent=1 // pred_region
      %31 = dma.done [#allocation3], 32768
    $region21: #{tinybagnet_forward.1} parent=1 // pred_fallthru
      _
    %v33 = vld [vmem:[%s0] sm:$0xf]
    %v34 = vld [vmem:[%s0 + $0x4] sm:$0xf]
    %v35 = vld [vmem:[%s0 + $0x8] sm:$0xf]
    %v36 = vld [vmem:[%s0 + $0xc] sm:$0xf]
    %v37 = vld [vmem:[%s1 + $0x28] sm:$0xf]
    %v38 = vld [vmem:[%s1 + $0x54] sm:$0xf]
    %v39 = vld [vmem:[%s1 + $0x80] sm:$0xf]
    %v40 = vld [vmem:[%s1 + $0xac] sm:$0xf]
    %v45 = vunpack.c.l.b16 %v33
    %v46 = vunpack.c.l.b16 %v34
    %v47 = vunpack.c.l.b16 %v35
    %v48 = vunpack.c.l.b16 %v36
    %v49 = vpack.c.b16 %v46, %v45
    %v50 = vpack.c.b16 %v48, %v47
    %v55 = vunpack.c.l.b16 %v37
    %v56 = vunpack.c.l.b16 %v38
    %v57 = vunpack.c.l.b16 %v39
    %v58 = vunpack.c.l.b16 %v40
    %v59 = vpack.c.b16 %v56, %v55
    %v60 = vpack.c.b16 %v58, %v57
    %vm63 = vcmask 261120
    %v65 = vsel %vm63, %v49, 0
    %v68 = vsel %vm63, %v50, 0
    %70 = vmatprep.subr.bf16.mxu0 0
    %71 = vmatpush1.bf16.msra.mxu0 0
    %72 = vmatprep.subr.bf16.mxu0 0
    %73 = vmatpush1.bf16.msra.mxu0 0
    %74 = vmatprep.subr.bf16.mxu0 0
    %75 = vmatpush1.bf16.msra.mxu0 0
    %76 = vmatprep.subr.bf16.mxu0 0
    %77 = vmatpush1.bf16.msra.mxu0 0
    %78 = vmatprep.subr.bf16.mxu0 0
    %79 = vmatpush1.bf16.msra.mxu0 0
    %80 = vmatprep.subr.bf16.mxu0 0
    %81 = vmatpush1.bf16.msra.mxu0 0
    %82 = vmatprep.subr.bf16.mxu0 0
    %83 = vmatpush1.bf16.msra.mxu0 %v60
    %84 = vmatprep.subr.bf16.mxu0 0
    %85 = vmatpush1.bf16.msra.mxu0 %v59
    %86 = vmatprep.subr.bf16.mxu0 0
    %87 = vmatpush2.bf16.msra.mxu0 0
    %88 = vmatprep.subr.bf16.mxu0 0
    %89 = vmatpush2.bf16.msra.mxu0 0
    %90 = vmatprep.subr.bf16.mxu0 0
    %91 = vmatpush2.bf16.msra.mxu0 0
    %92 = vmatprep.subr.bf16.mxu0 0
    %93 = vmatpush2.bf16.msra.mxu0 0
    %94 = vmatprep.subr.bf16.mxu0 0
    %95 = vmatpush2.bf16.msra.mxu0 0
    %96 = vmatprep.subr.bf16.mxu0 0
    %97 = vmatpush2.bf16.msra.mxu0 0
    %98 = vmatprep.subr.bf16.mxu0 0
    %99 = vmatpush2.bf16.msra.mxu0 0
    %100 = vmatprep.subr.bf16.mxu0 0
    %101 = vmatpush2.bf16.msra.mxu0 0
    %102 = vmatprep.mubr.bf16.mxu0 0
    %103 = vmatmul.mubr.bf16.gmra.mxu0 %v65
    %v104 = vpop.f32.mrf.mxu0
    %v105 = vadd.f32 0.0, %v104
    %v106 = vpop.f32.mrf.mxu0
    %v107 = vpop.f32.mrf.mxu0
    %v108 = vadd.f32 0.0, %v107
    %v109 = vpop.f32.mrf.mxu0
    %110 = vmatprep.mubr.bf16.mxu0 0
    %111 = vmatmul.mubr.bf16.gmra.mxu0 %v68
    %v112 = vpop.f32.mrf.mxu0
    %v113 = vadd.f32 0.0, %v112
    %v114 = vpop.f32.mrf.mxu0
    %v115 = vpop.f32.mrf.mxu0
    %v116 = vadd.f32 0.0, %v115
    %v117 = vpop.f32.mrf.mxu0
    %118 = vdwg.mxu0
    %v119 = vmax.f32 %v105, 0.0
    %v120 = vmax.f32 %v108, 0.0
    %v121 = vmax.f32 %v113, 0.0
    %v122 = vmax.f32 %v116, 0.0
    %v123 = vpack.c.bf16 %v120, %v119
    %v124 = vpack.c.bf16 %v122, %v121
    %v125 = vld [vmem:[%s1] sm:$0xff]
    %v126 = vld [vmem:[%s1 + $0x2c] sm:$0xff]
    %v127 = vld [vmem:[%s1 + $0x58] sm:$0xff]
    %v128 = vld [vmem:[%s1 + $0x84] sm:$0xff]
    %v129 = vld [vmem:[%s1 + $0xb0] sm:$0xff]
    %v130 = vld [vmem:[%s1 + $0xdc] sm:$0xff]
    %v131 = vld [vmem:[%s1 + $0x108] sm:$0xff]
    %v132 = vld [vmem:[%s1 + $0x134] sm:$0xff]
    %v133 = vld [vmem:[%s1 + $0x160] sm:$0xff]
    %v134 = vld [vmem:[%s1 + $0x18c] sm:$0xff]
    %v135 = vld [vmem:[%s1 + $0x1b8] sm:$0xff]
    %v136 = vld [vmem:[%s1 + $0x1e4] sm:$0xff]
    %v137 = vld [vmem:[%s1 + $0x210] sm:$0xff]
    %v138 = vld [vmem:[%s1 + $0x23c] sm:$0xff]
    %v139 = vld [vmem:[%s1 + $0x268] sm:$0xff]
    %v140 = vld [vmem:[%s1 + $0x294] sm:$0xff]
    %v157 = vunpack.c.l.b16 %v125
    %v158 = vunpack.c.h.b16 %v125
    %v159 = vunpack.c.l.b16 %v126
    %v160 = vunpack.c.h.b16 %v126
    %v161 = vunpack.c.l.b16 %v127
    %v162 = vunpack.c.h.b16 %v127
    %v163 = vunpack.c.l.b16 %v128
    %v164 = vunpack.c.h.b16 %v128
    %v165 = vunpack.c.l.b16 %v129
    %v166 = vunpack.c.h.b16 %v129
    %v167 = vunpack.c.l.b16 %v130
    %v168 = vunpack.c.h.b16 %v130
    %v169 = vunpack.c.l.b16 %v131
    %v170 = vunpack.c.h.b16 %v131
    %v171 = vunpack.c.l.b16 %v132
    %v172 = vunpack.c.h.b16 %v132
    %v173 = vunpack.c.l.b16 %v133
    %v174 = vunpack.c.h.b16 %v133
    %v175 = vunpack.c.l.b16 %v134
    %v176 = vunpack.c.h.b16 %v134
    %v177 = vunpack.c.l.b16 %v135
    %v178 = vunpack.c.h.b16 %v135
    %v179 = vunpack.c.l.b16 %v136
    %v180 = vunpack.c.h.b16 %v136
    %v181 = vunpack.c.l.b16 %v137
    %v182 = vunpack.c.h.b16 %v137
    %v183 = vunpack.c.l.b16 %v138
    %v184 = vunpack.c.h.b16 %v138
    %v185 = vunpack.c.l.b16 %v139
    %v186 = vunpack.c.h.b16 %v139
    %v187 = vunpack.c.l.b16 %v140
    %v188 = vunpack.c.h.b16 %v140
    %v189 = vpack.c.b16 %v159, %v157
    %v190 = vpack.c.b16 %v160, %v158
    %v191 = vpack.c.b16 %v163, %v161
    %v192 = vpack.c.b16 %v164, %v162
    %v193 = vpack.c.b16 %v167, %v165
    %v194 = vpack.c.b16 %v168, %v166
    %v195 = vpack.c.b16 %v171, %v169
    %v196 = vpack.c.b16 %v172, %v170
    %v197 = vpack.c.b16 %v175, %v173
    %v198 = vpack.c.b16 %v176, %v174
    %v199 = vpack.c.b16 %v179, %v177
    %v200 = vpack.c.b16 %v180, %v178
    %v201 = vpack.c.b16 %v183, %v181
    %v202 = vpack.c.b16 %v184, %v182
    %v203 = vpack.c.b16 %v187, %v185
    %v204 = vpack.c.b16 %v188, %v186
    %221 = vmatprep.subr.bf16.mxu0 %v204
    %222 = vmatpush1.bf16.msra.mxu0 %v203
    %223 = vmatprep.subr.bf16.mxu0 %v202
    %224 = vmatpush1.bf16.msra.mxu0 %v201
    %225 = vmatprep.subr.bf16.mxu0 %v200
    %226 = vmatpush1.bf16.msra.mxu0 %v199
    %227 = vmatprep.subr.bf16.mxu0 %v198
    %228 = vmatpush1.bf16.msra.mxu0 %v197
    %229 = vmatprep.subr.bf16.mxu0 %v196
    %230 = vmatpush1.bf16.msra.mxu0 %v195
    %231 = vmatprep.subr.bf16.mxu0 %v194
    %232 = vmatpush1.bf16.msra.mxu0 %v193
    %233 = vmatprep.subr.bf16.mxu0 %v192
    %234 = vmatpush1.bf16.msra.mxu0 %v191
    %235 = vmatprep.subr.bf16.mxu0 %v190
    %236 = vmatpush1.bf16.msra.mxu0 %v189
    %237 = vmatprep.subr.bf16.mxu0 0
    %238 = vmatpush2.bf16.msra.mxu0 0
    %239 = vmatprep.subr.bf16.mxu0 0
    %240 = vmatpush2.bf16.msra.mxu0 0
    %241 = vmatprep.subr.bf16.mxu0 0
    %242 = vmatpush2.bf16.msra.mxu0 0
    %243 = vmatprep.subr.bf16.mxu0 0
    %244 = vmatpush2.bf16.msra.mxu0 0
    %245 = vmatprep.subr.bf16.mxu0 0
    %246 = vmatpush2.bf16.msra.mxu0 0
    %247 = vmatprep.subr.bf16.mxu0 0
    %248 = vmatpush2.bf16.msra.mxu0 0
    %249 = vmatprep.subr.bf16.mxu0 0
    %250 = vmatpush2.bf16.msra.mxu0 0
    %251 = vmatprep.subr.bf16.mxu0 0
    %252 = vmatpush2.bf16.msra.mxu0 0
    %253 = vmatprep.mubr.bf16.mxu0 0
    %254 = vmatmul.mubr.bf16.gmra.mxu0 %v123
    %v255 = vpop.f32.mrf.mxu0
    %v256 = vadd.f32 0.0, %v255
    %v257 = vpop.f32.mrf.mxu0
    %v258 = vadd.f32 0.0, %v257
    %v259 = vpop.f32.mrf.mxu0
    %v260 = vadd.f32 0.0, %v259
    %v261 = vpop.f32.mrf.mxu0
    %v262 = vadd.f32 0.0, %v261
    %263 = vmatprep.mubr.bf16.mxu0 0
    %264 = vmatmul.mubr.bf16.gmra.mxu0 %v124
    %v265 = vpop.f32.mrf.mxu0
    %v266 = vadd.f32 0.0, %v265
    %v267 = vpop.f32.mrf.mxu0
    %v268 = vadd.f32 0.0, %v267
    %v269 = vpop.f32.mrf.mxu0
    %v270 = vadd.f32 0.0, %v269
    %v271 = vpop.f32.mrf.mxu0
    %v272 = vadd.f32 0.0, %v271
    %273 = vdwg.mxu0
    %v274 = vmax.f32 %v256, 0.0
    %v275 = vmax.f32 %v260, 0.0
    %v276 = vmax.f32 %v266, 0.0
    %v277 = vmax.f32 %v270, 0.0
    %v278 = vpack.c.bf16 %v275, %v274
    %v279 = vpack.c.bf16 %v277, %v276
    %v280 = vld [vmem:[%s1 + $0x8] sm:$0xf]
    %v281 = vld [vmem:[%s1 + $0x34] sm:$0xf]
    %v282 = vld [vmem:[%s1 + $0x60] sm:$0xf]
    %v283 = vld [vmem:[%s1 + $0x8c] sm:$0xf]
    %v284 = vld [vmem:[%s1 + $0xb8] sm:$0xf]
    %v285 = vld [vmem:[%s1 + $0xe4] sm:$0xf]
    %v286 = vld [vmem:[%s1 + $0x110] sm:$0xf]
    %v287 = vld [vmem:[%s1 + $0x13c] sm:$0xf]
    %v288 = vld [vmem:[%s1 + $0x168] sm:$0xf]
    %v289 = vld [vmem:[%s1 + $0x194] sm:$0xf]
    %v290 = vld [vmem:[%s1 + $0x1c0] sm:$0xf]
    %v291 = vld [vmem:[%s1 + $0x1ec] sm:$0xf]
    %v292 = vld [vmem:[%s1 + $0x218] sm:$0xf]
    %v293 = vld [vmem:[%s1 + $0x244] sm:$0xf]
    %v294 = vld [vmem:[%s1 + $0x270] sm:$0xf]
    %v295 = vld [vmem:[%s1 + $0x29c] sm:$0xf]
    %v312 = vunpack.c.l.b16 %v280
    %v313 = vunpack.c.l.b16 %v281
    %v314 = vunpack.c.l.b16 %v282
    %v315 = vunpack.c.l.b16 %v283
    %v316 = vunpack.c.l.b16 %v284
    %v317 = vunpack.c.l.b16 %v285
    %v318 = vunpack.c.l.b16 %v286
    %v319 = vunpack.c.l.b16 %v287
    %v320 = vunpack.c.l.b16 %v288
    %v321 = vunpack.c.l.b16 %v289
    %v322 = vunpack.c.l.b16 %v290
    %v323 = vunpack.c.l.b16 %v291
    %v324 = vunpack.c.l.b16 %v292
    %v325 = vunpack.c.l.b16 %v293
    %v326 = vunpack.c.l.b16 %v294
    %v327 = vunpack.c.l.b16 %v295
    %v328 = vpack.c.b16 %v313, %v312
    %v329 = vpack.c.b16 %v315, %v314
    %v330 = vpack.c.b16 %v317, %v316
    %v331 = vpack.c.b16 %v319, %v318
    %v332 = vpack.c.b16 %v321, %v320
    %v333 = vpack.c.b16 %v323, %v322
    %v334 = vpack.c.b16 %v325, %v324
    %v335 = vpack.c.b16 %v327, %v326
    %344 = vmatprep.subr.bf16.mxu0 0
    %345 = vmatpush1.bf16.msra.mxu0 %v335
    %346 = vmatprep.subr.bf16.mxu0 0
    %347 = vmatpush1.bf16.msra.mxu0 %v334
    %348 = vmatprep.subr.bf16.mxu0 0
    %349 = vmatpush1.bf16.msra.mxu0 %v333
    %350 = vmatprep.subr.bf16.mxu0 0
    %351 = vmatpush1.bf16.msra.mxu0 %v332
    %352 = vmatprep.subr.bf16.mxu0 0
    %353 = vmatpush1.bf16.msra.mxu0 %v331
    %354 = vmatprep.subr.bf16.mxu0 0
    %355 = vmatpush1.bf16.msra.mxu0 %v330
    %356 = vmatprep.subr.bf16.mxu0 0
    %357 = vmatpush1.bf16.msra.mxu0 %v329
    %358 = vmatprep.subr.bf16.mxu0 0
    %359 = vmatpush1.bf16.msra.mxu0 %v328
    %360 = vmatprep.subr.bf16.mxu0 0
    %361 = vmatpush2.bf16.msra.mxu0 0
    %362 = vmatprep.subr.bf16.mxu0 0
    %363 = vmatpush2.bf16.msra.mxu0 0
    %364 = vmatprep.subr.bf16.mxu0 0
    %365 = vmatpush2.bf16.msra.mxu0 0
    %366 = vmatprep.subr.bf16.mxu0 0
    %367 = vmatpush2.bf16.msra.mxu0 0
    %368 = vmatprep.subr.bf16.mxu0 0
    %369 = vmatpush2.bf16.msra.mxu0 0
    %370 = vmatprep.subr.bf16.mxu0 0
    %371 = vmatpush2.bf16.msra.mxu0 0
    %372 = vmatprep.subr.bf16.mxu0 0
    %373 = vmatpush2.bf16.msra.mxu0 0
    %374 = vmatprep.subr.bf16.mxu0 0
    %375 = vmatpush2.bf16.msra.mxu0 0
    %376 = vmatprep.mubr.bf16.mxu0 0
    %377 = vmatmul.mubr.bf16.gmra.mxu0 %v278
    %v378 = vpop.f32.mrf.mxu0
    %v379 = vadd.f32 0.0, %v378
    %v380 = vpop.f32.mrf.mxu0
    %v381 = vpop.f32.mrf.mxu0
    %v382 = vadd.f32 0.0, %v381
    %v383 = vpop.f32.mrf.mxu0
    %384 = vmatprep.mubr.bf16.mxu0 0
    %385 = vmatmul.mubr.bf16.gmra.mxu0 %v279
    %v386 = vpop.f32.mrf.mxu0
    %v387 = vadd.f32 0.0, %v386
    %v388 = vpop.f32.mrf.mxu0
    %v389 = vpop.f32.mrf.mxu0
    %v390 = vadd.f32 0.0, %v389
    %v391 = vpop.f32.mrf.mxu0
    %392 = vdwg.mxu0
    %v393 = vmax.f32 %v379, 0.0
    %v394 = vmax.f32 %v382, 0.0
    %v395 = vmax.f32 %v387, 0.0
    %v396 = vmax.f32 %v390, 0.0
    %v397 = vpack.c.bf16 %v394, %v393
    %v398 = vpack.c.bf16 %v396, %v395
    %v399 = vld [vmem:[%s1 + $0xc] sm:$0xf]
    %v400 = vld [vmem:[%s1 + $0x38] sm:$0xf]
    %v401 = vld [vmem:[%s1 + $0x64] sm:$0xf]
    %v402 = vld [vmem:[%s1 + $0x90] sm:$0xf]
    %v403 = vld [vmem:[%s1 + $0xbc] sm:$0xf]
    %v404 = vld [vmem:[%s1 + $0xe8] sm:$0xf]
    %v405 = vld [vmem:[%s1 + $0x114] sm:$0xf]
    %v406 = vld [vmem:[%s1 + $0x140] sm:$0xf]
    %v407 = vld [vmem:[%s1 + $0x16c] sm:$0xf]
    %v408 = vld [vmem:[%s1 + $0x198] sm:$0xf]
    %v409 = vld [vmem:[%s1 + $0x1c4] sm:$0xf]
    %v410 = vld [vmem:[%s1 + $0x1f0] sm:$0xf]
    %v411 = vld [vmem:[%s1 + $0x21c] sm:$0xf]
    %v412 = vld [vmem:[%s1 + $0x248] sm:$0xf]
    %v413 = vld [vmem:[%s1 + $0x274] sm:$0xf]
    %v414 = vld [vmem:[%s1 + $0x2a0] sm:$0xf]
    %v431 = vunpack.c.l.b16 %v399
    %v432 = vunpack.c.l.b16 %v400
    %v433 = vunpack.c.l.b16 %v401
    %v434 = vunpack.c.l.b16 %v402
    %v435 = vunpack.c.l.b16 %v403
    %v436 = vunpack.c.l.b16 %v404
    %v437 = vunpack.c.l.b16 %v405
    %v438 = vunpack.c.l.b16 %v406
    %v439 = vunpack.c.l.b16 %v407
    %v440 = vunpack.c.l.b16 %v408
    %v441 = vunpack.c.l.b16 %v409
    %v442 = vunpack.c.l.b16 %v410
    %v443 = vunpack.c.l.b16 %v411
    %v444 = vunpack.c.l.b16 %v412
    %v445 = vunpack.c.l.b16 %v413
    %v446 = vunpack.c.l.b16 %v414
    %v447 = vpack.c.b16 %v432, %v431
    %v448 = vpack.c.b16 %v434, %v433
    %v449 = vpack.c.b16 %v436, %v435
    %v450 = vpack.c.b16 %v438, %v437
    %v451 = vpack.c.b16 %v440, %v439
    %v452 = vpack.c.b16 %v442, %v441
    %v453 = vpack.c.b16 %v444, %v443
    %v454 = vpack.c.b16 %v446, %v445
    %463 = vmatprep.subr.bf16.mxu0 0
    %464 = vmatpush1.bf16.msra.mxu0 %v454
    %465 = vmatprep.subr.bf16.mxu0 0
    %466 = vmatpush1.bf16.msra.mxu0 %v453
    %467 = vmatprep.subr.bf16.mxu0 0
    %468 = vmatpush1.bf16.msra.mxu0 %v452
    %469 = vmatprep.subr.bf16.mxu0 0
    %470 = vmatpush1.bf16.msra.mxu0 %v451
    %471 = vmatprep.subr.bf16.mxu0 0
    %472 = vmatpush1.bf16.msra.mxu0 %v450
    %473 = vmatprep.subr.bf16.mxu0 0
    %474 = vmatpush1.bf16.msra.mxu0 %v449
    %475 = vmatprep.subr.bf16.mxu0 0
    %476 = vmatpush1.bf16.msra.mxu0 %v448
    %477 = vmatprep.subr.bf16.mxu0 0
    %478 = vmatpush1.bf16.msra.mxu0 %v447
    %479 = vmatprep.subr.bf16.mxu0 0
    %480 = vmatpush2.bf16.msra.mxu0 0
    %481 = vmatprep.subr.bf16.mxu0 0
    %482 = vmatpush2.bf16.msra.mxu0 0
    %483 = vmatprep.subr.bf16.mxu0 0
    %484 = vmatpush2.bf16.msra.mxu0 0
    %485 = vmatprep.subr.bf16.mxu0 0
    %486 = vmatpush2.bf16.msra.mxu0 0
    %487 = vmatprep.subr.bf16.mxu0 0
    %488 = vmatpush2.bf16.msra.mxu0 0
    %489 = vmatprep.subr.bf16.mxu0 0
    %490 = vmatpush2.bf16.msra.mxu0 0
    %491 = vmatprep.subr.bf16.mxu0 0
    %492 = vmatpush2.bf16.msra.mxu0 0
    %493 = vmatprep.subr.bf16.mxu0 0
    %494 = vmatpush2.bf16.msra.mxu0 0
    %495 = vmatprep.mubr.bf16.mxu0 0
    %496 = vmatmul.mubr.bf16.gmra.mxu0 %v397
    %v497 = vpop.f32.mrf.mxu0
    %v498 = vadd.f32 %v258, %v497
    %v499 = vpop.f32.mrf.mxu0
    %v500 = vpop.f32.mrf.mxu0
    %v501 = vadd.f32 %v262, %v500
    %v502 = vpop.f32.mrf.mxu0
    %503 = vmatprep.mubr.bf16.mxu0 0
    %504 = vmatmul.mubr.bf16.gmra.mxu0 %v398
    %v505 = vpop.f32.mrf.mxu0
    %v506 = vadd.f32 %v268, %v505
    %v507 = vpop.f32.mrf.mxu0
    %v508 = vpop.f32.mrf.mxu0
    %v509 = vadd.f32 %v272, %v508
    %v510 = vpop.f32.mrf.mxu0
    %511 = vdwg.mxu0
    %v512 = vmax.f32 %v498, 0.0
    %v513 = vmax.f32 %v501, 0.0
    %v514 = vmax.f32 %v506, 0.0
    %v515 = vmax.f32 %v509, 0.0
    %v516 = vpack.c.bf16 %v513, %v512
    %v517 = vpack.c.bf16 %v515, %v514
    %v518 = vld [vmem:[%s1 + $0x10] sm:$0xff]
    %v519 = vld [vmem:[%s1 + $0x18] sm:$0xf]
    %v520 = vld [vmem:[%s1 + $0x3c] sm:$0xff]
    %v521 = vld [vmem:[%s1 + $0x44] sm:$0xf]
    %v522 = vld [vmem:[%s1 + $0x68] sm:$0xff]
    %v523 = vld [vmem:[%s1 + $0x70] sm:$0xf]
    %v524 = vld [vmem:[%s1 + $0x94] sm:$0xff]
    %v525 = vld [vmem:[%s1 + $0x9c] sm:$0xf]
    %v526 = vld [vmem:[%s1 + $0xc0] sm:$0xff]
    %v527 = vld [vmem:[%s1 + $0xc8] sm:$0xf]
    %v528 = vld [vmem:[%s1 + $0xec] sm:$0xff]
    %v529 = vld [vmem:[%s1 + $0xf4] sm:$0xf]
    %v530 = vld [vmem:[%s1 + $0x118] sm:$0xff]
    %v531 = vld [vmem:[%s1 + $0x120] sm:$0xf]
    %v532 = vld [vmem:[%s1 + $0x144] sm:$0xff]
    %v533 = vld [vmem:[%s1 + $0x14c] sm:$0xf]
    %v534 = vld [vmem:[%s1 + $0x170] sm:$0xff]
    %v535 = vld [vmem:[%s1 + $0x178] sm:$0xf]
    %v536 = vld [vmem:[%s1 + $0x19c] sm:$0xff]
    %v537 = vld [vmem:[%s1 + $0x1a4] sm:$0xf]
    %v538 = vld [vmem:[%s1 + $0x1c8] sm:$0xff]
    %v539 = vld [vmem:[%s1 + $0x1d0] sm:$0xf]
    %v540 = vld [vmem:[%s1 + $0x1f4] sm:$0xff]
    %v541 = vld [vmem:[%s1 + $0x1fc] sm:$0xf]
    %v542 = vld [vmem:[%s1 + $0x220] sm:$0xff]
    %v543 = vld [vmem:[%s1 + $0x228] sm:$0xf]
    %v544 = vld [vmem:[%s1 + $0x24c] sm:$0xff]
    %v545 = vld [vmem:[%s1 + $0x254] sm:$0xf]
    %v546 = vld [vmem:[%s1 + $0x278] sm:$0xff]
    %v547 = vld [vmem:[%s1 + $0x280] sm:$0xf]
    %v548 = vld [vmem:[%s1 + $0x2a4] sm:$0xff]
    %v549 = vld [vmem:[%s1 + $0x2ac] sm:$0xf]
    %v582 = vunpack.c.l.b16 %v518
    %v583 = vunpack.c.h.b16 %v518
    %v584 = vunpack.c.l.b16 %v519
    %v585 = vunpack.c.l.b16 %v520
    %v586 = vunpack.c.h.b16 %v520
    %v587 = vunpack.c.l.b16 %v521
    %v588 = vunpack.c.l.b16 %v522
    %v589 = vunpack.c.h.b16 %v522
    %v590 = vunpack.c.l.b16 %v523
    %v591 = vunpack.c.l.b16 %v524
    %v592 = vunpack.c.h.b16 %v524
    %v593 = vunpack.c.l.b16 %v525
    %v594 = vunpack.c.l.b16 %v526
    %v595 = vunpack.c.h.b16 %v526
    %v596 = vunpack.c.l.b16 %v527
    %v597 = vunpack.c.l.b16 %v528
    %v598 = vunpack.c.h.b16 %v528
    %v599 = vunpack.c.l.b16 %v529
    %v600 = vunpack.c.l.b16 %v530
    %v601 = vunpack.c.h.b16 %v530
    %v602 = vunpack.c.l.b16 %v531
    %v603 = vunpack.c.l.b16 %v532
    %v604 = vunpack.c.h.b16 %v532
    %v605 = vunpack.c.l.b16 %v533
    %v606 = vunpack.c.l.b16 %v534
    %v607 = vunpack.c.h.b16 %v534
    %v608 = vunpack.c.l.b16 %v535
    %v609 = vunpack.c.l.b16 %v536
    %v610 = vunpack.c.h.b16 %v536
    %v611 = vunpack.c.l.b16 %v537
    %v612 = vunpack.c.l.b16 %v538
    %v613 = vunpack.c.h.b16 %v538
    %v614 = vunpack.c.l.b16 %v539
    %v615 = vunpack.c.l.b16 %v540
    %v616 = vunpack.c.h.b16 %v540
    %v617 = vunpack.c.l.b16 %v541
    %v618 = vunpack.c.l.b16 %v542
    %v619 = vunpack.c.h.b16 %v542
    %v620 = vunpack.c.l.b16 %v543
    %v621 = vunpack.c.l.b16 %v544
    %v622 = vunpack.c.h.b16 %v544
    %v623 = vunpack.c.l.b16 %v545
    %v624 = vunpack.c.l.b16 %v546
    %v625 = vunpack.c.h.b16 %v546
    %v626 = vunpack.c.l.b16 %v547
    %v627 = vunpack.c.l.b16 %v548
    %v628 = vunpack.c.h.b16 %v548
    %v629 = vunpack.c.l.b16 %v549
    %v630 = vpack.c.b16 %v585, %v582
    %v631 = vpack.c.b16 %v586, %v583
    %v632 = vpack.c.b16 %v587, %v584
    %v633 = vpack.c.b16 %v591, %v588
    %v634 = vpack.c.b16 %v592, %v589
    %v635 = vpack.c.b16 %v593, %v590
    %v636 = vpack.c.b16 %v597, %v594
    %v637 = vpack.c.b16 %v598, %v595
    %v638 = vpack.c.b16 %v599, %v596
    %v639 = vpack.c.b16 %v603, %v600
    %v640 = vpack.c.b16 %v604, %v601
    %v641 = vpack.c.b16 %v605, %v602
    %v642 = vpack.c.b16 %v609, %v606
    %v643 = vpack.c.b16 %v610, %v607
    %v644 = vpack.c.b16 %v611, %v608
    %v645 = vpack.c.b16 %v615, %v612
    %v646 = vpack.c.b16 %v616, %v613
    %v647 = vpack.c.b16 %v617, %v614
    %v648 = vpack.c.b16 %v621, %v618
    %v649 = vpack.c.b16 %v622, %v619
    %v650 = vpack.c.b16 %v623, %v620
    %v651 = vpack.c.b16 %v627, %v624
    %v652 = vpack.c.b16 %v628, %v625
    %v653 = vpack.c.b16 %v629, %v626
    %678 = vmatprep.subr.bf16.mxu0 %v652
    %679 = vmatpush1.bf16.msra.mxu0 %v651
    %680 = vmatprep.subr.bf16.mxu0 %v649
    %681 = vmatpush1.bf16.msra.mxu0 %v648
    %682 = vmatprep.subr.bf16.mxu0 %v646
    %683 = vmatpush1.bf16.msra.mxu0 %v645
    %684 = vmatprep.subr.bf16.mxu0 %v643
    %685 = vmatpush1.bf16.msra.mxu0 %v642
    %686 = vmatprep.subr.bf16.mxu0 %v640
    %687 = vmatpush1.bf16.msra.mxu0 %v639
    %688 = vmatprep.subr.bf16.mxu0 %v637
    %689 = vmatpush1.bf16.msra.mxu0 %v636
    %690 = vmatprep.subr.bf16.mxu0 %v634
    %691 = vmatpush1.bf16.msra.mxu0 %v633
    %692 = vmatprep.subr.bf16.mxu0 %v631
    %693 = vmatpush1.bf16.msra.mxu0 %v630
    %694 = vmatprep.subr.bf16.mxu0 0
    %695 = vmatpush2.bf16.msra.mxu0 0
    %696 = vmatprep.subr.bf16.mxu0 0
    %697 = vmatpush2.bf16.msra.mxu0 0
    %698 = vmatprep.subr.bf16.mxu0 0
    %699 = vmatpush2.bf16.msra.mxu0 0
    %700 = vmatprep.subr.bf16.mxu0 0
    %701 = vmatpush2.bf16.msra.mxu0 0
    %702 = vmatprep.subr.bf16.mxu0 0
    %703 = vmatpush2.bf16.msra.mxu0 0
    %704 = vmatprep.subr.bf16.mxu0 0
    %705 = vmatpush2.bf16.msra.mxu0 0
    %706 = vmatprep.subr.bf16.mxu0 0
    %707 = vmatpush2.bf16.msra.mxu0 0
    %708 = vmatprep.subr.bf16.mxu0 0
    %709 = vmatpush2.bf16.msra.mxu0 0
    %710 = vmatprep.mubr.bf16.mxu0 0
    %711 = vmatmul.mubr.bf16.gmra.mxu0 %v516
    %v712 = vpop.f32.mrf.mxu0
    %v713 = vadd.f32 0.0, %v712
    %v714 = vpop.f32.mrf.mxu0
    %v715 = vadd.f32 0.0, %v714
    %v716 = vpop.f32.mrf.mxu0
    %v717 = vadd.f32 0.0, %v716
    %v718 = vpop.f32.mrf.mxu0
    %v719 = vadd.f32 0.0, %v718
    %720 = vmatprep.mubr.bf16.mxu0 0
    %721 = vmatmul.mubr.bf16.gmra.mxu0 %v517
    %v722 = vpop.f32.mrf.mxu0
    %v723 = vadd.f32 0.0, %v722
    %v724 = vpop.f32.mrf.mxu0
    %v725 = vadd.f32 0.0, %v724
    %v726 = vpop.f32.mrf.mxu0
    %v727 = vadd.f32 0.0, %v726
    %v728 = vpop.f32.mrf.mxu0
    %v729 = vadd.f32 0.0, %v728
    %730 = vdwg.mxu0
    %731 = vmatprep.subr.bf16.mxu0 0
    %732 = vmatpush1.bf16.msra.mxu0 %v653
    %733 = vmatprep.subr.bf16.mxu0 0
    %734 = vmatpush1.bf16.msra.mxu0 %v650
    %735 = vmatprep.subr.bf16.mxu0 0
    %736 = vmatpush1.bf16.msra.mxu0 %v647
    %737 = vmatprep.subr.bf16.mxu0 0
    %738 = vmatpush1.bf16.msra.mxu0 %v644
    %739 = vmatprep.subr.bf16.mxu0 0
    %740 = vmatpush1.bf16.msra.mxu0 %v641
    %741 = vmatprep.subr.bf16.mxu0 0
    %742 = vmatpush1.bf16.msra.mxu0 %v638
    %743 = vmatprep.subr.bf16.mxu0 0
    %744 = vmatpush1.bf16.msra.mxu0 %v635
    %745 = vmatprep.subr.bf16.mxu0 0
    %746 = vmatpush1.bf16.msra.mxu0 %v632
    %747 = vmatprep.subr.bf16.mxu0 0
    %748 = vmatpush2.bf16.msra.mxu0 0
    %749 = vmatprep.subr.bf16.mxu0 0
    %750 = vmatpush2.bf16.msra.mxu0 0
    %751 = vmatprep.subr.bf16.mxu0 0
    %752 = vmatpush2.bf16.msra.mxu0 0
    %753 = vmatprep.subr.bf16.mxu0 0
    %754 = vmatpush2.bf16.msra.mxu0 0
    %755 = vmatprep.subr.bf16.mxu0 0
    %756 = vmatpush2.bf16.msra.mxu0 0
    %757 = vmatprep.subr.bf16.mxu0 0
    %758 = vmatpush2.bf16.msra.mxu0 0
    %759 = vmatprep.subr.bf16.mxu0 0
    %760 = vmatpush2.bf16.msra.mxu0 0
    %761 = vmatprep.subr.bf16.mxu0 0
    %762 = vmatpush2.bf16.msra.mxu0 0
    %763 = vmatprep.mubr.bf16.mxu0 0
    %764 = vmatmul.mubr.bf16.gmra.mxu0 %v516
    %v765 = vpop.f32.mrf.mxu0
    %v766 = vadd.f32 0.0, %v765
    %v767 = vpop.f32.mrf.mxu0
    %v768 = vpop.f32.mrf.mxu0
    %v769 = vadd.f32 0.0, %v768
    %v770 = vpop.f32.mrf.mxu0
    %771 = vmatprep.mubr.bf16.mxu0 0
    %772 = vmatmul.mubr.bf16.gmra.mxu0 %v517
    %v773 = vpop.f32.mrf.mxu0
    %v774 = vadd.f32 0.0, %v773
    %v775 = vpop.f32.mrf.mxu0
    %v776 = vpop.f32.mrf.mxu0
    %v777 = vadd.f32 0.0, %v776
    %v778 = vpop.f32.mrf.mxu0
    %779 = vdwg.mxu0
    %v780 = vmax.f32 %v713, 0.0
    %v781 = vmax.f32 %v717, 0.0
    %v782 = vmax.f32 %v723, 0.0
    %v783 = vmax.f32 %v727, 0.0
    %v784 = vpack.c.bf16 %v781, %v780
    %v785 = vpack.c.bf16 %v783, %v782
    %v786 = vld [vmem:[%s1 + $0x1c] sm:$0xf]
    %v787 = vld [vmem:[%s1 + $0x48] sm:$0xf]
    %v788 = vld [vmem:[%s1 + $0x74] sm:$0xf]
    %v789 = vld [vmem:[%s1 + $0xa0] sm:$0xf]
    %v790 = vld [vmem:[%s1 + $0xcc] sm:$0xf]
    %v791 = vld [vmem:[%s1 + $0xf8] sm:$0xf]
    %v792 = vld [vmem:[%s1 + $0x124] sm:$0xf]
    %v793 = vld [vmem:[%s1 + $0x150] sm:$0xf]
    %v794 = vld [vmem:[%s1 + $0x17c] sm:$0xf]
    %v795 = vld [vmem:[%s1 + $0x1a8] sm:$0xf]
    %v796 = vld [vmem:[%s1 + $0x1d4] sm:$0xf]
    %v797 = vld [vmem:[%s1 + $0x200] sm:$0xf]
    %v798 = vld [vmem:[%s1 + $0x22c] sm:$0xf]
    %v799 = vld [vmem:[%s1 + $0x258] sm:$0xf]
    %v800 = vld [vmem:[%s1 + $0x284] sm:$0xf]
    %v801 = vld [vmem:[%s1 + $0x2b0] sm:$0xf]
    %v818 = vunpack.c.l.b16 %v786
    %v819 = vunpack.c.l.b16 %v787
    %v820 = vunpack.c.l.b16 %v788
    %v821 = vunpack.c.l.b16 %v789
    %v822 = vunpack.c.l.b16 %v790
    %v823 = vunpack.c.l.b16 %v791
    %v824 = vunpack.c.l.b16 %v792
    %v825 = vunpack.c.l.b16 %v793
    %v826 = vunpack.c.l.b16 %v794
    %v827 = vunpack.c.l.b16 %v795
    %v828 = vunpack.c.l.b16 %v796
    %v829 = vunpack.c.l.b16 %v797
    %v830 = vunpack.c.l.b16 %v798
    %v831 = vunpack.c.l.b16 %v799
    %v832 = vunpack.c.l.b16 %v800
    %v833 = vunpack.c.l.b16 %v801
    %v834 = vpack.c.b16 %v819, %v818
    %v835 = vpack.c.b16 %v821, %v820
    %v836 = vpack.c.b16 %v823, %v822
    %v837 = vpack.c.b16 %v825, %v824
    %v838 = vpack.c.b16 %v827, %v826
    %v839 = vpack.c.b16 %v829, %v828
    %v840 = vpack.c.b16 %v831, %v830
    %v841 = vpack.c.b16 %v833, %v832
    %850 = vmatprep.subr.bf16.mxu0 0
    %851 = vmatpush1.bf16.msra.mxu0 %v841
    %852 = vmatprep.subr.bf16.mxu0 0
    %853 = vmatpush1.bf16.msra.mxu0 %v840
    %854 = vmatprep.subr.bf16.mxu0 0
    %855 = vmatpush1.bf16.msra.mxu0 %v839
    %856 = vmatprep.subr.bf16.mxu0 0
    %857 = vmatpush1.bf16.msra.mxu0 %v838
    %858 = vmatprep.subr.bf16.mxu0 0
    %859 = vmatpush1.bf16.msra.mxu0 %v837
    %860 = vmatprep.subr.bf16.mxu0 0
    %861 = vmatpush1.bf16.msra.mxu0 %v836
    %862 = vmatprep.subr.bf16.mxu0 0
    %863 = vmatpush1.bf16.msra.mxu0 %v835
    %864 = vmatprep.subr.bf16.mxu0 0
    %865 = vmatpush1.bf16.msra.mxu0 %v834
    %866 = vmatprep.subr.bf16.mxu0 0
    %867 = vmatpush2.bf16.msra.mxu0 0
    %868 = vmatprep.subr.bf16.mxu0 0
    %869 = vmatpush2.bf16.msra.mxu0 0
    %870 = vmatprep.subr.bf16.mxu0 0
    %871 = vmatpush2.bf16.msra.mxu0 0
    %872 = vmatprep.subr.bf16.mxu0 0
    %873 = vmatpush2.bf16.msra.mxu0 0
    %874 = vmatprep.subr.bf16.mxu0 0
    %875 = vmatpush2.bf16.msra.mxu0 0
    %876 = vmatprep.subr.bf16.mxu0 0
    %877 = vmatpush2.bf16.msra.mxu0 0
    %878 = vmatprep.subr.bf16.mxu0 0
    %879 = vmatpush2.bf16.msra.mxu0 0
    %880 = vmatprep.subr.bf16.mxu0 0
    %881 = vmatpush2.bf16.msra.mxu0 0
    %882 = vmatprep.mubr.bf16.mxu0 0
    %883 = vmatmul.mubr.bf16.gmra.mxu0 %v784
    %v884 = vpop.f32.mrf.mxu0
    %v885 = vadd.f32 0.0, %v884
    %v886 = vpop.f32.mrf.mxu0
    %v887 = vpop.f32.mrf.mxu0
    %v888 = vadd.f32 0.0, %v887
    %v889 = vpop.f32.mrf.mxu0
    %890 = vmatprep.mubr.bf16.mxu0 0
    %891 = vmatmul.mubr.bf16.gmra.mxu0 %v785
    %v892 = vpop.f32.mrf.mxu0
    %v893 = vadd.f32 0.0, %v892
    %v894 = vpop.f32.mrf.mxu0
    %v895 = vpop.f32.mrf.mxu0
    %v896 = vadd.f32 0.0, %v895
    %v897 = vpop.f32.mrf.mxu0
    %898 = vdwg.mxu0
    %v899 = vmax.f32 %v885, 0.0
    %v900 = vmax.f32 %v888, 0.0
    %v901 = vmax.f32 %v893, 0.0
    %v902 = vmax.f32 %v896, 0.0
    %v903 = vpack.c.bf16 %v900, %v899
    %v904 = vpack.c.bf16 %v902, %v901
    %v905 = vld [vmem:[%s1 + $0x20] sm:$0xff]
    %v906 = vld [vmem:[%s1 + $0x4c] sm:$0xff]
    %v907 = vld [vmem:[%s1 + $0x78] sm:$0xff]
    %v908 = vld [vmem:[%s1 + $0xa4] sm:$0xff]
    %v909 = vld [vmem:[%s1 + $0xd0] sm:$0xff]
    %v910 = vld [vmem:[%s1 + $0xfc] sm:$0xff]
    %v911 = vld [vmem:[%s1 + $0x128] sm:$0xff]
    %v912 = vld [vmem:[%s1 + $0x154] sm:$0xff]
    %v913 = vld [vmem:[%s1 + $0x180] sm:$0xff]
    %v914 = vld [vmem:[%s1 + $0x1ac] sm:$0xff]
    %v915 = vld [vmem:[%s1 + $0x1d8] sm:$0xff]
    %v916 = vld [vmem:[%s1 + $0x204] sm:$0xff]
    %v917 = vld [vmem:[%s1 + $0x230] sm:$0xff]
    %v918 = vld [vmem:[%s1 + $0x25c] sm:$0xff]
    %v919 = vld [vmem:[%s1 + $0x288] sm:$0xff]
    %v920 = vld [vmem:[%s1 + $0x2b4] sm:$0xff]
    %v937 = vunpack.c.l.b16 %v905
    %v938 = vunpack.c.h.b16 %v905
    %v939 = vunpack.c.l.b16 %v906
    %v940 = vunpack.c.h.b16 %v906
    %v941 = vunpack.c.l.b16 %v907
    %v942 = vunpack.c.h.b16 %v907
    %v943 = vunpack.c.l.b16 %v908
    %v944 = vunpack.c.h.b16 %v908
    %v945 = vunpack.c.l.b16 %v909
    %v946 = vunpack.c.h.b16 %v909
    %v947 = vunpack.c.l.b16 %v910
    %v948 = vunpack.c.h.b16 %v910
    %v949 = vunpack.c.l.b16 %v911
    %v950 = vunpack.c.h.b16 %v911
    %v951 = vunpack.c.l.b16 %v912
    %v952 = vunpack.c.h.b16 %v912
    %v953 = vunpack.c.l.b16 %v913
    %v954 = vunpack.c.h.b16 %v913
    %v955 = vunpack.c.l.b16 %v914
    %v956 = vunpack.c.h.b16 %v914
    %v957 = vunpack.c.l.b16 %v915
    %v958 = vunpack.c.h.b16 %v915
    %v959 = vunpack.c.l.b16 %v916
    %v960 = vunpack.c.h.b16 %v916
    %v961 = vunpack.c.l.b16 %v917
    %v962 = vunpack.c.h.b16 %v917
    %v963 = vunpack.c.l.b16 %v918
    %v964 = vunpack.c.h.b16 %v918
    %v965 = vunpack.c.l.b16 %v919
    %v966 = vunpack.c.h.b16 %v919
    %v967 = vunpack.c.l.b16 %v920
    %v968 = vunpack.c.h.b16 %v920
    %v969 = vpack.c.b16 %v939, %v937
    %v970 = vpack.c.b16 %v940, %v938
    %v971 = vpack.c.b16 %v943, %v941
    %v972 = vpack.c.b16 %v944, %v942
    %v973 = vpack.c.b16 %v947, %v945
    %v974 = vpack.c.b16 %v948, %v946
    %v975 = vpack.c.b16 %v951, %v949
    %v976 = vpack.c.b16 %v952, %v950
    %v977 = vpack.c.b16 %v955, %v953
    %v978 = vpack.c.b16 %v956, %v954
    %v979 = vpack.c.b16 %v959, %v957
    %v980 = vpack.c.b16 %v960, %v958
    %v981 = vpack.c.b16 %v963, %v961
    %v982 = vpack.c.b16 %v964, %v962
    %v983 = vpack.c.b16 %v967, %v965
    %v984 = vpack.c.b16 %v968, %v966
    %1001 = vmatprep.subr.bf16.mxu0 %v984
    %1002 = vmatpush1.bf16.msra.mxu0 %v983
    %1003 = vmatprep.subr.bf16.mxu0 %v982
    %1004 = vmatpush1.bf16.msra.mxu0 %v981
    %1005 = vmatprep.subr.bf16.mxu0 %v980
    %1006 = vmatpush1.bf16.msra.mxu0 %v979
    %1007 = vmatprep.subr.bf16.mxu0 %v978
    %1008 = vmatpush1.bf16.msra.mxu0 %v977
    %1009 = vmatprep.subr.bf16.mxu0 %v976
    %1010 = vmatpush1.bf16.msra.mxu0 %v975
    %1011 = vmatprep.subr.bf16.mxu0 %v974
    %1012 = vmatpush1.bf16.msra.mxu0 %v973
    %1013 = vmatprep.subr.bf16.mxu0 %v972
    %1014 = vmatpush1.bf16.msra.mxu0 %v971
    %1015 = vmatprep.subr.bf16.mxu0 %v970
    %1016 = vmatpush1.bf16.msra.mxu0 %v969
    %1017 = vmatprep.subr.bf16.mxu0 0
    %1018 = vmatpush2.bf16.msra.mxu0 0
    %1019 = vmatprep.subr.bf16.mxu0 0
    %1020 = vmatpush2.bf16.msra.mxu0 0
    %1021 = vmatprep.subr.bf16.mxu0 0
    %1022 = vmatpush2.bf16.msra.mxu0 0
    %1023 = vmatprep.subr.bf16.mxu0 0
    %1024 = vmatpush2.bf16.msra.mxu0 0
    %1025 = vmatprep.subr.bf16.mxu0 0
    %1026 = vmatpush2.bf16.msra.mxu0 0
    %1027 = vmatprep.subr.bf16.mxu0 0
    %1028 = vmatpush2.bf16.msra.mxu0 0
    %1029 = vmatprep.subr.bf16.mxu0 0
    %1030 = vmatpush2.bf16.msra.mxu0 0
    %1031 = vmatprep.subr.bf16.mxu0 0
    %1032 = vmatpush2.bf16.msra.mxu0 0
    %1033 = vmatprep.mubr.bf16.mxu0 0
    %1034 = vmatmul.mubr.bf16.gmra.mxu0 %v903
    %v1035 = vpop.f32.mrf.mxu0
    %v1036 = vadd.f32 %v715, %v1035
    %v1037 = vpop.f32.mrf.mxu0
    %v1038 = vadd.f32 %v766, %v1037
    %v1039 = vpop.f32.mrf.mxu0
    %v1040 = vadd.f32 %v719, %v1039
    %v1041 = vpop.f32.mrf.mxu0
    %v1042 = vadd.f32 %v769, %v1041
    %1043 = vmatprep.mubr.bf16.mxu0 0
    %1044 = vmatmul.mubr.bf16.gmra.mxu0 %v904
    %v1045 = vpop.f32.mrf.mxu0
    %v1046 = vadd.f32 %v725, %v1045
    %v1047 = vpop.f32.mrf.mxu0
    %v1048 = vadd.f32 %v774, %v1047
    %v1049 = vpop.f32.mrf.mxu0
    %v1050 = vadd.f32 %v729, %v1049
    %v1051 = vpop.f32.mrf.mxu0
    %v1052 = vadd.f32 %v777, %v1051
    %1053 = vdwg.mxu0
    %v1054 = vmax.f32 %v1036, 0.0
    %v1055 = vmax.f32 %v1038, 0.0
    %v1056 = vmax.f32 %v1040, 0.0
    %v1057 = vmax.f32 %v1042, 0.0
    %v1058 = vmax.f32 %v1046, 0.0
    %v1059 = vmax.f32 %v1048, 0.0
    %v1060 = vmax.f32 %v1050, 0.0
    %v1061 = vmax.f32 %v1052, 0.0
    %v1070 = vcombine.low %v1054, %v1055
    %v1071 = vcombine.high %v1054, %v1055
    %v1072 = vcombine.low %v1056, %v1057
    %v1073 = vcombine.high %v1056, %v1057
    %v1074 = vcombine.low %v1058, %v1059
    %v1075 = vcombine.high %v1058, %v1059
    %v1076 = vcombine.low %v1060, %v1061
    %v1077 = vcombine.high %v1060, %v1061
    %v1087 = vunpack.c.l.s4 1935823168
    %v1088 = vunpack.c.0.s8 %v1087
    %v1089 = vlaneseq
    %v1090 = vshrl.u32 %v1089, 7
    %v1091 = vsub.s32 %v1088, %v1090
    %v1092 = vrot.slane %v1070, %v1091
    %v1094 = vunpack.c.l.s4 1935823168
    %v1095 = vunpack.c.0.s8 %v1094
    %v1096 = vlaneseq
    %v1097 = vshrl.u32 %v1096, 7
    %v1098 = vsub.s32 %v1095, %v1097
    %v1099 = vrot.slane %v1071, %v1098
    %v1101 = vunpack.c.l.s4 1935823168
    %v1102 = vunpack.c.0.s8 %v1101
    %v1103 = vlaneseq
    %v1104 = vshrl.u32 %v1103, 7
    %v1105 = vsub.s32 %v1102, %v1104
    %v1106 = vrot.slane %v1072, %v1105
    %v1108 = vunpack.c.l.s4 1935823168
    %v1109 = vunpack.c.0.s8 %v1108
    %v1110 = vlaneseq
    %v1111 = vshrl.u32 %v1110, 7
    %v1112 = vsub.s32 %v1109, %v1111
    %v1113 = vrot.slane %v1073, %v1112
    %v1115 = vunpack.c.l.s4 1935823168
    %v1116 = vunpack.c.0.s8 %v1115
    %v1117 = vlaneseq
    %v1118 = vshrl.u32 %v1117, 7
    %v1119 = vsub.s32 %v1116, %v1118
    %v1120 = vrot.slane %v1074, %v1119
    %v1122 = vunpack.c.l.s4 1935823168
    %v1123 = vunpack.c.0.s8 %v1122
    %v1124 = vlaneseq
    %v1125 = vshrl.u32 %v1124, 7
    %v1126 = vsub.s32 %v1123, %v1125
    %v1127 = vrot.slane %v1075, %v1126
    %v1129 = vunpack.c.l.s4 1935823168
    %v1130 = vunpack.c.0.s8 %v1129
    %v1131 = vlaneseq
    %v1132 = vshrl.u32 %v1131, 7
    %v1133 = vsub.s32 %v1130, %v1132
    %v1134 = vrot.slane %v1076, %v1133
    %v1136 = vunpack.c.l.s4 1935823168
    %v1137 = vunpack.c.0.s8 %v1136
    %v1138 = vlaneseq
    %v1139 = vshrl.u32 %v1138, 7
    %v1140 = vsub.s32 %v1137, %v1139
    %v1141 = vrot.slane %v1077, %v1140
    %v1150 = vcombine.low %v1092, %v1120
    %v1151 = vcombine.high %v1092, %v1120
    %v1153 = vunpack.c.l.s4 1966171168
    %v1154 = vunpack.c.0.s8 %v1153
    %v1155 = vlaneseq
    %v1156 = vshrl.u32 %v1155, 7
    %v1157 = vsub.s32 %v1154, %v1156
    %v1158 = vrot.slane %v1150, %v1157
    %v1160 = vunpack.c.l.s4 1966171168
    %v1161 = vunpack.c.0.s8 %v1160
    %v1162 = vlaneseq
    %v1163 = vshrl.u32 %v1162, 7
    %v1164 = vsub.s32 %v1161, %v1163
    %v1165 = vrot.slane %v1151, %v1164
    %v1166 = vcombine.high %v1158, %v1158
    %v1167 = vcombine.high %v1165, %v1165
    %v1169 = vunpack.c.l.s4 1966171168
    %v1170 = vunpack.c.0.s8 %v1169
    %v1171 = vlaneseq
    %v1172 = vshrl.u32 %v1171, 7
    %v1173 = vsub.s32 %v1170, %v1172
    %v1174 = vrot.slane %v1158, %v1173
    %v1176 = vunpack.c.l.s4 1966171168
    %v1177 = vunpack.c.0.s8 %v1176
    %v1178 = vlaneseq
    %v1179 = vshrl.u32 %v1178, 7
    %v1180 = vsub.s32 %v1177, %v1179
    %v1181 = vrot.slane %v1165, %v1180
    %v1183 = vunpack.c.l.s4 1966171168
    %v1184 = vunpack.c.0.s8 %v1183
    %v1185 = vlaneseq
    %v1186 = vshrl.u32 %v1185, 7
    %v1187 = vsub.s32 %v1184, %v1186
    %v1188 = vrot.slane %v1166, %v1187
    %v1190 = vunpack.c.l.s4 1966171168
    %v1191 = vunpack.c.0.s8 %v1190
    %v1192 = vlaneseq
    %v1193 = vshrl.u32 %v1192, 7
    %v1194 = vsub.s32 %v1191, %v1193
    %v1195 = vrot.slane %v1167, %v1194
    %v1196 = vcombine.high %v1174, %v1174
    %v1197 = vcombine.high %v1181, %v1181
    %v1198 = vcombine.high %v1188, %v1188
    %v1199 = vcombine.high %v1195, %v1195
    %v1200 = vcombine.low %v1099, %v1127
    %v1201 = vcombine.high %v1099, %v1127
    %v1203 = vunpack.c.l.s4 1966171168
    %v1204 = vunpack.c.0.s8 %v1203
    %v1205 = vlaneseq
    %v1206 = vshrl.u32 %v1205, 7
    %v1207 = vsub.s32 %v1204, %v1206
    %v1208 = vrot.slane %v1200, %v1207
    %v1210 = vunpack.c.l.s4 1966171168
    %v1211 = vunpack.c.0.s8 %v1210
    %v1212 = vlaneseq
    %v1213 = vshrl.u32 %v1212, 7
    %v1214 = vsub.s32 %v1211, %v1213
    %v1215 = vrot.slane %v1201, %v1214
    %v1216 = vcombine.high %v1208, %v1208
    %v1217 = vcombine.high %v1215, %v1215
    %v1219 = vunpack.c.l.s4 1966171168
    %v1220 = vunpack.c.0.s8 %v1219
    %v1221 = vlaneseq
    %v1222 = vshrl.u32 %v1221, 7
    %v1223 = vsub.s32 %v1220, %v1222
    %v1224 = vrot.slane %v1208, %v1223
    %v1226 = vunpack.c.l.s4 1966171168
    %v1227 = vunpack.c.0.s8 %v1226
    %v1228 = vlaneseq
    %v1229 = vshrl.u32 %v1228, 7
    %v1230 = vsub.s32 %v1227, %v1229
    %v1231 = vrot.slane %v1215, %v1230
    %v1233 = vunpack.c.l.s4 1966171168
    %v1234 = vunpack.c.0.s8 %v1233
    %v1235 = vlaneseq
    %v1236 = vshrl.u32 %v1235, 7
    %v1237 = vsub.s32 %v1234, %v1236
    %v1238 = vrot.slane %v1216, %v1237
    %v1240 = vunpack.c.l.s4 1966171168
    %v1241 = vunpack.c.0.s8 %v1240
    %v1242 = vlaneseq
    %v1243 = vshrl.u32 %v1242, 7
    %v1244 = vsub.s32 %v1241, %v1243
    %v1245 = vrot.slane %v1217, %v1244
    %v1246 = vcombine.high %v1224, %v1224
    %v1247 = vcombine.high %v1231, %v1231
    %v1248 = vcombine.high %v1238, %v1238
    %v1249 = vcombine.high %v1245, %v1245
    %v1250 = vcombine.low %v1106, %v1134
    %v1251 = vcombine.high %v1106, %v1134
    %v1253 = vunpack.c.l.s4 1966171168
    %v1254 = vunpack.c.0.s8 %v1253
    %v1255 = vlaneseq
    %v1256 = vshrl.u32 %v1255, 7
    %v1257 = vsub.s32 %v1254, %v1256
    %v1258 = vrot.slane %v1250, %v1257
    %v1260 = vunpack.c.l.s4 1966171168
    %v1261 = vunpack.c.0.s8 %v1260
    %v1262 = vlaneseq
    %v1263 = vshrl.u32 %v1262, 7
    %v1264 = vsub.s32 %v1261, %v1263
    %v1265 = vrot.slane %v1251, %v1264
    %v1266 = vcombine.high %v1258, %v1258
    %v1267 = vcombine.high %v1265, %v1265
    %v1269 = vunpack.c.l.s4 1966171168
    %v1270 = vunpack.c.0.s8 %v1269
    %v1271 = vlaneseq
    %v1272 = vshrl.u32 %v1271, 7
    %v1273 = vsub.s32 %v1270, %v1272
    %v1274 = vrot.slane %v1258, %v1273
    %v1276 = vunpack.c.l.s4 1966171168
    %v1277 = vunpack.c.0.s8 %v1276
    %v1278 = vlaneseq
    %v1279 = vshrl.u32 %v1278, 7
    %v1280 = vsub.s32 %v1277, %v1279
    %v1281 = vrot.slane %v1265, %v1280
    %v1283 = vunpack.c.l.s4 1966171168
    %v1284 = vunpack.c.0.s8 %v1283
    %v1285 = vlaneseq
    %v1286 = vshrl.u32 %v1285, 7
    %v1287 = vsub.s32 %v1284, %v1286
    %v1288 = vrot.slane %v1266, %v1287
    %v1290 = vunpack.c.l.s4 1966171168
    %v1291 = vunpack.c.0.s8 %v1290
    %v1292 = vlaneseq
    %v1293 = vshrl.u32 %v1292, 7
    %v1294 = vsub.s32 %v1291, %v1293
    %v1295 = vrot.slane %v1267, %v1294
    %v1296 = vcombine.high %v1274, %v1274
    %v1297 = vcombine.high %v1281, %v1281
    %v1298 = vcombine.high %v1288, %v1288
    %v1299 = vcombine.high %v1295, %v1295
    %v1300 = vcombine.low %v1113, %v1141
    %v1301 = vcombine.high %v1113, %v1141
    %v1303 = vunpack.c.l.s4 1966171168
    %v1304 = vunpack.c.0.s8 %v1303
    %v1305 = vlaneseq
    %v1306 = vshrl.u32 %v1305, 7
    %v1307 = vsub.s32 %v1304, %v1306
    %v1308 = vrot.slane %v1300, %v1307
    %v1310 = vunpack.c.l.s4 1966171168
    %v1311 = vunpack.c.0.s8 %v1310
    %v1312 = vlaneseq
    %v1313 = vshrl.u32 %v1312, 7
    %v1314 = vsub.s32 %v1311, %v1313
    %v1315 = vrot.slane %v1301, %v1314
    %v1316 = vcombine.high %v1308, %v1308
    %v1317 = vcombine.high %v1315, %v1315
    %v1319 = vunpack.c.l.s4 1966171168
    %v1320 = vunpack.c.0.s8 %v1319
    %v1321 = vlaneseq
    %v1322 = vshrl.u32 %v1321, 7
    %v1323 = vsub.s32 %v1320, %v1322
    %v1324 = vrot.slane %v1308, %v1323
    %v1326 = vunpack.c.l.s4 1966171168
    %v1327 = vunpack.c.0.s8 %v1326
    %v1328 = vlaneseq
    %v1329 = vshrl.u32 %v1328, 7
    %v1330 = vsub.s32 %v1327, %v1329
    %v1331 = vrot.slane %v1315, %v1330
    %v1333 = vunpack.c.l.s4 1966171168
    %v1334 = vunpack.c.0.s8 %v1333
    %v1335 = vlaneseq
    %v1336 = vshrl.u32 %v1335, 7
    %v1337 = vsub.s32 %v1334, %v1336
    %v1338 = vrot.slane %v1316, %v1337
    %v1340 = vunpack.c.l.s4 1966171168
    %v1341 = vunpack.c.0.s8 %v1340
    %v1342 = vlaneseq
    %v1343 = vshrl.u32 %v1342, 7
    %v1344 = vsub.s32 %v1341, %v1343
    %v1345 = vrot.slane %v1317, %v1344
    %v1346 = vcombine.high %v1324, %v1324
    %v1347 = vcombine.high %v1331, %v1331
    %v1348 = vcombine.high %v1338, %v1338
    %v1349 = vcombine.high %v1345, %v1345
    %v1382 = vpack.c.bf16 %v1174, %v1174
    %v1383 = vpack.c.bf16 %v1188, %v1188
    %v1384 = vpack.c.bf16 %v1196, %v1196
    %v1385 = vpack.c.bf16 %v1198, %v1198
    %v1386 = vpack.c.bf16 %v1181, %v1181
    %v1387 = vpack.c.bf16 %v1195, %v1195
    %v1388 = vpack.c.bf16 %v1197, %v1197
    %v1389 = vpack.c.bf16 %v1199, %v1199
    %v1390 = vpack.c.bf16 %v1224, %v1224
    %v1391 = vpack.c.bf16 %v1238, %v1238
    %v1392 = vpack.c.bf16 %v1246, %v1246
    %v1393 = vpack.c.bf16 %v1248, %v1248
    %v1394 = vpack.c.bf16 %v1231, %v1231
    %v1395 = vpack.c.bf16 %v1245, %v1245
    %v1396 = vpack.c.bf16 %v1247, %v1247
    %v1397 = vpack.c.bf16 %v1249, %v1249
    %v1398 = vpack.c.bf16 %v1274, %v1274
    %v1399 = vpack.c.bf16 %v1288, %v1288
    %v1400 = vpack.c.bf16 %v1296, %v1296
    %v1401 = vpack.c.bf16 %v1298, %v1298
    %v1402 = vpack.c.bf16 %v1281, %v1281
    %v1403 = vpack.c.bf16 %v1295, %v1295
    %v1404 = vpack.c.bf16 %v1297, %v1297
    %v1405 = vpack.c.bf16 %v1299, %v1299
    %v1406 = vpack.c.bf16 %v1324, %v1324
    %v1407 = vpack.c.bf16 %v1338, %v1338
    %v1408 = vpack.c.bf16 %v1346, %v1346
    %v1409 = vpack.c.bf16 %v1348, %v1348
    %v1410 = vpack.c.bf16 %v1331, %v1331
    %v1411 = vpack.c.bf16 %v1345, %v1345
    %v1412 = vpack.c.bf16 %v1347, %v1347
    %v1413 = vpack.c.bf16 %v1349, %v1349
    %v1414 = vld [vmem:[#allocation2] sm:$0xf]
    %v1415 = vld [vmem:[#allocation2 + $0x4] sm:$0xf]
    %v1416 = vld [vmem:[#allocation2 + $0x8] sm:$0xf]
    %v1417 = vld [vmem:[#allocation2 + $0xc] sm:$0xf]
    %v1418 = vld [vmem:[#allocation2 + $0x10] sm:$0xf]
    %v1419 = vld [vmem:[#allocation2 + $0x14] sm:$0xf]
    %v1420 = vld [vmem:[#allocation2 + $0x18] sm:$0xf]
    %v1421 = vld [vmem:[#allocation2 + $0x1c] sm:$0xf]
    %v1422 = vld [vmem:[#allocation2 + $0x20] sm:$0xf]
    %v1423 = vld [vmem:[#allocation2 + $0x24] sm:$0xf]
    %v1424 = vld [vmem:[#allocation2 + $0x28] sm:$0xf]
    %v1425 = vld [vmem:[#allocation2 + $0x2c] sm:$0xf]
    %v1426 = vld [vmem:[#allocation2 + $0x30] sm:$0xf]
    %v1427 = vld [vmem:[#allocation2 + $0x34] sm:$0xf]
    %v1428 = vld [vmem:[#allocation2 + $0x38] sm:$0xf]
    %v1429 = vld [vmem:[#allocation2 + $0x3c] sm:$0xf]
    %v1430 = vld [vmem:[#allocation2 + $0x40] sm:$0xf]
    %v1431 = vld [vmem:[#allocation2 + $0x44] sm:$0xf]
    %v1432 = vld [vmem:[#allocation2 + $0x48] sm:$0xf]
    %v1433 = vld [vmem:[#allocation2 + $0x4c] sm:$0xf]
    %v1434 = vld [vmem:[#allocation2 + $0x50] sm:$0xf]
    %v1435 = vld [vmem:[#allocation2 + $0x54] sm:$0xf]
    %v1436 = vld [vmem:[#allocation2 + $0x58] sm:$0xf]
    %v1437 = vld [vmem:[#allocation2 + $0x5c] sm:$0xf]
    %v1438 = vld [vmem:[#allocation2 + $0x60] sm:$0xf]
    %v1439 = vld [vmem:[#allocation2 + $0x64] sm:$0xf]
    %v1440 = vld [vmem:[#allocation2 + $0x68] sm:$0xf]
    %v1441 = vld [vmem:[#allocation2 + $0x6c] sm:$0xf]
    %v1442 = vld [vmem:[#allocation2 + $0x70] sm:$0xf]
    %v1443 = vld [vmem:[#allocation2 + $0x74] sm:$0xf]
    %v1444 = vld [vmem:[#allocation2 + $0x78] sm:$0xf]
    %v1445 = vld [vmem:[#allocation2 + $0x7c] sm:$0xf]
    %v1446 = vld [vmem:[#allocation2 + $0x80] sm:$0xf]
    %v1447 = vld [vmem:[#allocation2 + $0x84] sm:$0xf]
    %v1448 = vld [vmem:[#allocation2 + $0x88] sm:$0xf]
    %v1449 = vld [vmem:[#allocation2 + $0x8c] sm:$0xf]
    %v1450 = vld [vmem:[#allocation2 + $0x90] sm:$0xf]
    %v1451 = vld [vmem:[#allocation2 + $0x94] sm:$0xf]
    %v1452 = vld [vmem:[#allocation2 + $0x98] sm:$0xf]
    %v1453 = vld [vmem:[#allocation2 + $0x9c] sm:$0xf]
    %v1454 = vld [vmem:[#allocation2 + $0xa0] sm:$0xf]
    %v1455 = vld [vmem:[#allocation2 + $0xa4] sm:$0xf]
    %v1456 = vld [vmem:[#allocation2 + $0xa8] sm:$0xf]
    %v1457 = vld [vmem:[#allocation2 + $0xac] sm:$0xf]
    %v1458 = vld [vmem:[#allocation2 + $0xb0] sm:$0xf]
    %v1459 = vld [vmem:[#allocation2 + $0xb4] sm:$0xf]
    %v1460 = vld [vmem:[#allocation2 + $0xb8] sm:$0xf]
    %v1461 = vld [vmem:[#allocation2 + $0xbc] sm:$0xf]
    %v1462 = vld [vmem:[#allocation2 + $0xc0] sm:$0xf]
    %v1463 = vld [vmem:[#allocation2 + $0xc4] sm:$0xf]
    %v1464 = vld [vmem:[#allocation2 + $0xc8] sm:$0xf]
    %v1465 = vld [vmem:[#allocation2 + $0xcc] sm:$0xf]
    %v1466 = vld [vmem:[#allocation2 + $0xd0] sm:$0xf]
    %v1467 = vld [vmem:[#allocation2 + $0xd4] sm:$0xf]
    %v1468 = vld [vmem:[#allocation2 + $0xd8] sm:$0xf]
    %v1469 = vld [vmem:[#allocation2 + $0xdc] sm:$0xf]
    %v1470 = vld [vmem:[#allocation2 + $0xe0] sm:$0xf]
    %v1471 = vld [vmem:[#allocation2 + $0xe4] sm:$0xf]
    %v1472 = vld [vmem:[#allocation2 + $0xe8] sm:$0xf]
    %v1473 = vld [vmem:[#allocation2 + $0xec] sm:$0xf]
    %v1474 = vld [vmem:[#allocation2 + $0xf0] sm:$0xf]
    %v1475 = vld [vmem:[#allocation2 + $0xf4] sm:$0xf]
    %v1476 = vld [vmem:[#allocation2 + $0xf8] sm:$0xf]
    %v1477 = vld [vmem:[#allocation2 + $0xfc] sm:$0xf]
    %v1478 = vld [vmem:[#allocation2 + $0x100] sm:$0xf]
    %v1479 = vld [vmem:[#allocation2 + $0x104] sm:$0xf]
    %v1480 = vld [vmem:[#allocation2 + $0x108] sm:$0xf]
    %v1481 = vld [vmem:[#allocation2 + $0x10c] sm:$0xf]
    %v1482 = vld [vmem:[#allocation2 + $0x110] sm:$0xf]
    %v1483 = vld [vmem:[#allocation2 + $0x114] sm:$0xf]
    %v1484 = vld [vmem:[#allocation2 + $0x118] sm:$0xf]
    %v1485 = vld [vmem:[#allocation2 + $0x11c] sm:$0xf]
    %v1486 = vld [vmem:[#allocation2 + $0x120] sm:$0xf]
    %v1487 = vld [vmem:[#allocation2 + $0x124] sm:$0xf]
    %v1488 = vld [vmem:[#allocation2 + $0x128] sm:$0xf]
    %v1489 = vld [vmem:[#allocation2 + $0x12c] sm:$0xf]
    %v1490 = vld [vmem:[#allocation2 + $0x130] sm:$0xf]
    %v1491 = vld [vmem:[#allocation2 + $0x134] sm:$0xf]
    %v1492 = vld [vmem:[#allocation2 + $0x138] sm:$0xf]
    %v1493 = vld [vmem:[#allocation2 + $0x13c] sm:$0xf]
    %v1494 = vld [vmem:[#allocation2 + $0x140] sm:$0xf]
    %v1495 = vld [vmem:[#allocation2 + $0x144] sm:$0xf]
    %v1496 = vld [vmem:[#allocation2 + $0x148] sm:$0xf]
    %v1497 = vld [vmem:[#allocation2 + $0x14c] sm:$0xf]
    %v1498 = vld [vmem:[#allocation2 + $0x150] sm:$0xf]
    %v1499 = vld [vmem:[#allocation2 + $0x154] sm:$0xf]
    %v1500 = vld [vmem:[#allocation2 + $0x158] sm:$0xf]
    %v1501 = vld [vmem:[#allocation2 + $0x15c] sm:$0xf]
    %v1502 = vld [vmem:[#allocation2 + $0x160] sm:$0xf]
    %v1503 = vld [vmem:[#allocation2 + $0x164] sm:$0xf]
    %v1504 = vld [vmem:[#allocation2 + $0x168] sm:$0xf]
    %v1505 = vld [vmem:[#allocation2 + $0x16c] sm:$0xf]
    %v1506 = vld [vmem:[#allocation2 + $0x170] sm:$0xf]
    %v1507 = vld [vmem:[#allocation2 + $0x174] sm:$0xf]
    %v1508 = vld [vmem:[#allocation2 + $0x178] sm:$0xf]
    %v1509 = vld [vmem:[#allocation2 + $0x17c] sm:$0xf]
    %v1510 = vld [vmem:[#allocation2 + $0x180] sm:$0xf]
    %v1511 = vld [vmem:[#allocation2 + $0x184] sm:$0xf]
    %v1512 = vld [vmem:[#allocation2 + $0x188] sm:$0xf]
    %v1513 = vld [vmem:[#allocation2 + $0x18c] sm:$0xf]
    %v1514 = vld [vmem:[#allocation2 + $0x190] sm:$0xf]
    %v1515 = vld [vmem:[#allocation2 + $0x194] sm:$0xf]
    %v1516 = vld [vmem:[#allocation2 + $0x198] sm:$0xf]
    %v1517 = vld [vmem:[#allocation2 + $0x19c] sm:$0xf]
    %v1518 = vld [vmem:[#allocation2 + $0x1a0] sm:$0xf]
    %v1519 = vld [vmem:[#allocation2 + $0x1a4] sm:$0xf]
    %v1520 = vld [vmem:[#allocation2 + $0x1a8] sm:$0xf]
    %v1521 = vld [vmem:[#allocation2 + $0x1ac] sm:$0xf]
    %v1522 = vld [vmem:[#allocation2 + $0x1b0] sm:$0xf]
    %v1523 = vld [vmem:[#allocation2 + $0x1b4] sm:$0xf]
    %v1524 = vld [vmem:[#allocation2 + $0x1b8] sm:$0xf]
    %v1525 = vld [vmem:[#allocation2 + $0x1bc] sm:$0xf]
    %v1526 = vld [vmem:[#allocation2 + $0x1c0] sm:$0xf]
    %v1527 = vld [vmem:[#allocation2 + $0x1c4] sm:$0xf]
    %v1528 = vld [vmem:[#allocation2 + $0x1c8] sm:$0xf]
    %v1529 = vld [vmem:[#allocation2 + $0x1cc] sm:$0xf]
    %v1530 = vld [vmem:[#allocation2 + $0x1d0] sm:$0xf]
    %v1531 = vld [vmem:[#allocation2 + $0x1d4] sm:$0xf]
    %v1532 = vld [vmem:[#allocation2 + $0x1d8] sm:$0xf]
    %v1533 = vld [vmem:[#allocation2 + $0x1dc] sm:$0xf]
    %v1534 = vld [vmem:[#allocation2 + $0x1e0] sm:$0xf]
    %v1535 = vld [vmem:[#allocation2 + $0x1e4] sm:$0xf]
    %v1536 = vld [vmem:[#allocation2 + $0x1e8] sm:$0xf]
    %v1537 = vld [vmem:[#allocation2 + $0x1ec] sm:$0xf]
    %v1538 = vld [vmem:[#allocation2 + $0x1f0] sm:$0xf]
    %v1539 = vld [vmem:[#allocation2 + $0x1f4] sm:$0xf]
    %v1540 = vld [vmem:[#allocation2 + $0x1f8] sm:$0xf]
    %v1541 = vld [vmem:[#allocation2 + $0x1fc] sm:$0xf]
    %v1542 = vld [vmem:[#allocation2 + $0x200] sm:$0xf]
    %v1543 = vld [vmem:[#allocation2 + $0x204] sm:$0xf]
    %v1544 = vld [vmem:[#allocation2 + $0x208] sm:$0xf]
    %v1545 = vld [vmem:[#allocation2 + $0x20c] sm:$0xf]
    %v1546 = vld [vmem:[#allocation2 + $0x210] sm:$0xf]
    %v1547 = vld [vmem:[#allocation2 + $0x214] sm:$0xf]
    %v1548 = vld [vmem:[#allocation2 + $0x218] sm:$0xf]
    %v1549 = vld [vmem:[#allocation2 + $0x21c] sm:$0xf]
    %v1550 = vld [vmem:[#allocation2 + $0x220] sm:$0xf]
    %v1551 = vld [vmem:[#allocation2 + $0x224] sm:$0xf]
    %v1552 = vld [vmem:[#allocation2 + $0x228] sm:$0xf]
    %v1553 = vld [vmem:[#allocation2 + $0x22c] sm:$0xf]
    %v1554 = vld [vmem:[#allocation2 + $0x230] sm:$0xf]
    %v1555 = vld [vmem:[#allocation2 + $0x234] sm:$0xf]
    %v1556 = vld [vmem:[#allocation2 + $0x238] sm:$0xf]
    %v1557 = vld [vmem:[#allocation2 + $0x23c] sm:$0xf]
    %v1558 = vld [vmem:[#allocation2 + $0x240] sm:$0xf]
    %v1559 = vld [vmem:[#allocation2 + $0x244] sm:$0xf]
    %v1560 = vld [vmem:[#allocation2 + $0x248] sm:$0xf]
    %v1561 = vld [vmem:[#allocation2 + $0x24c] sm:$0xf]
    %v1562 = vld [vmem:[#allocation2 + $0x250] sm:$0xf]
    %v1563 = vld [vmem:[#allocation2 + $0x254] sm:$0xf]
    %v1564 = vld [vmem:[#allocation2 + $0x258] sm:$0xf]
    %v1565 = vld [vmem:[#allocation2 + $0x25c] sm:$0xf]
    %v1566 = vld [vmem:[#allocation2 + $0x260] sm:$0xf]
    %v1567 = vld [vmem:[#allocation2 + $0x264] sm:$0xf]
    %v1568 = vld [vmem:[#allocation2 + $0x268] sm:$0xf]
    %v1569 = vld [vmem:[#allocation2 + $0x26c] sm:$0xf]
    %v1570 = vld [vmem:[#allocation2 + $0x270] sm:$0xf]
    %v1571 = vld [vmem:[#allocation2 + $0x274] sm:$0xf]
    %v1572 = vld [vmem:[#allocation2 + $0x278] sm:$0xf]
    %v1573 = vld [vmem:[#allocation2 + $0x27c] sm:$0xf]
    %v1574 = vld [vmem:[#allocation2 + $0x280] sm:$0xf]
    %v1575 = vld [vmem:[#allocation2 + $0x284] sm:$0xf]
    %v1576 = vld [vmem:[#allocation2 + $0x288] sm:$0xf]
    %v1577 = vld [vmem:[#allocation2 + $0x28c] sm:$0xf]
    %v1578 = vld [vmem:[#allocation2 + $0x290] sm:$0xf]
    %v1579 = vld [vmem:[#allocation2 + $0x294] sm:$0xf]
    %v1580 = vld [vmem:[#allocation2 + $0x298] sm:$0xf]
    %v1581 = vld [vmem:[#allocation2 + $0x29c] sm:$0xf]
    %v1582 = vld [vmem:[#allocation2 + $0x2a0] sm:$0xf]
    %v1583 = vld [vmem:[#allocation2 + $0x2a4] sm:$0xf]
    %v1584 = vld [vmem:[#allocation2 + $0x2a8] sm:$0xf]
    %v1585 = vld [vmem:[#allocation2 + $0x2ac] sm:$0xf]
    %v1586 = vld [vmem:[#allocation2 + $0x2b0] sm:$0xf]
    %v1587 = vld [vmem:[#allocation2 + $0x2b4] sm:$0xf]
    %v1588 = vld [vmem:[#allocation2 + $0x2b8] sm:$0xf]
    %v1589 = vld [vmem:[#allocation2 + $0x2bc] sm:$0xf]
    %v1590 = vld [vmem:[#allocation2 + $0x2c0] sm:$0xf]
    %v1591 = vld [vmem:[#allocation2 + $0x2c4] sm:$0xf]
    %v1592 = vld [vmem:[#allocation2 + $0x2c8] sm:$0xf]
    %v1593 = vld [vmem:[#allocation2 + $0x2cc] sm:$0xf]
    %v1594 = vld [vmem:[#allocation2 + $0x2d0] sm:$0xf]
    %v1595 = vld [vmem:[#allocation2 + $0x2d4] sm:$0xf]
    %v1596 = vld [vmem:[#allocation2 + $0x2d8] sm:$0xf]
    %v1597 = vld [vmem:[#allocation2 + $0x2dc] sm:$0xf]
    %v1598 = vld [vmem:[#allocation2 + $0x2e0] sm:$0xf]
    %v1599 = vld [vmem:[#allocation2 + $0x2e4] sm:$0xf]
    %v1600 = vld [vmem:[#allocation2 + $0x2e8] sm:$0xf]
    %v1601 = vld [vmem:[#allocation2 + $0x2ec] sm:$0xf]
    %v1602 = vld [vmem:[#allocation2 + $0x2f0] sm:$0xf]
    %v1603 = vld [vmem:[#allocation2 + $0x2f4] sm:$0xf]
    %v1604 = vld [vmem:[#allocation2 + $0x2f8] sm:$0xf]
    %v1605 = vld [vmem:[#allocation2 + $0x2fc] sm:$0xf]
    %v1606 = vld [vmem:[#allocation2 + $0x300] sm:$0xf]
    %v1607 = vld [vmem:[#allocation2 + $0x304] sm:$0xf]
    %v1608 = vld [vmem:[#allocation2 + $0x308] sm:$0xf]
    %v1609 = vld [vmem:[#allocation2 + $0x30c] sm:$0xf]
    %v1610 = vld [vmem:[#allocation2 + $0x310] sm:$0xf]
    %v1611 = vld [vmem:[#allocation2 + $0x314] sm:$0xf]
    %v1612 = vld [vmem:[#allocation2 + $0x318] sm:$0xf]
    %v1613 = vld [vmem:[#allocation2 + $0x31c] sm:$0xf]
    %v1614 = vld [vmem:[#allocation2 + $0x320] sm:$0xf]
    %v1615 = vld [vmem:[#allocation2 + $0x324] sm:$0xf]
    %v1616 = vld [vmem:[#allocation2 + $0x328] sm:$0xf]
    %v1617 = vld [vmem:[#allocation2 + $0x32c] sm:$0xf]
    %v1618 = vld [vmem:[#allocation2 + $0x330] sm:$0xf]
    %v1619 = vld [vmem:[#allocation2 + $0x334] sm:$0xf]
    %v1620 = vld [vmem:[#allocation2 + $0x338] sm:$0xf]
    %v1621 = vld [vmem:[#allocation2 + $0x33c] sm:$0xf]
    %v1622 = vld [vmem:[#allocation2 + $0x340] sm:$0xf]
    %v1623 = vld [vmem:[#allocation2 + $0x344] sm:$0xf]
    %v1624 = vld [vmem:[#allocation2 + $0x348] sm:$0xf]
    %v1625 = vld [vmem:[#allocation2 + $0x34c] sm:$0xf]
    %v1626 = vld [vmem:[#allocation2 + $0x350] sm:$0xf]
    %v1627 = vld [vmem:[#allocation2 + $0x354] sm:$0xf]
    %v1628 = vld [vmem:[#allocation2 + $0x358] sm:$0xf]
    %v1629 = vld [vmem:[#allocation2 + $0x35c] sm:$0xf]
    %v1630 = vld [vmem:[#allocation2 + $0x360] sm:$0xf]
    %v1631 = vld [vmem:[#allocation2 + $0x364] sm:$0xf]
    %v1632 = vld [vmem:[#allocation2 + $0x368] sm:$0xf]
    %v1633 = vld [vmem:[#allocation2 + $0x36c] sm:$0xf]
    %v1634 = vld [vmem:[#allocation2 + $0x370] sm:$0xf]
    %v1635 = vld [vmem:[#allocation2 + $0x374] sm:$0xf]
    %v1636 = vld [vmem:[#allocation2 + $0x378] sm:$0xf]
    %v1637 = vld [vmem:[#allocation2 + $0x37c] sm:$0xf]
    %v1638 = vld [vmem:[#allocation2 + $0x380] sm:$0xf]
    %v1639 = vld [vmem:[#allocation2 + $0x384] sm:$0xf]
    %v1640 = vld [vmem:[#allocation2 + $0x388] sm:$0xf]
    %v1641 = vld [vmem:[#allocation2 + $0x38c] sm:$0xf]
    %v1642 = vld [vmem:[#allocation2 + $0x390] sm:$0xf]
    %v1643 = vld [vmem:[#allocation2 + $0x394] sm:$0xf]
    %v1644 = vld [vmem:[#allocation2 + $0x398] sm:$0xf]
    %v1645 = vld [vmem:[#allocation2 + $0x39c] sm:$0xf]
    %v1646 = vld [vmem:[#allocation2 + $0x3a0] sm:$0xf]
    %v1647 = vld [vmem:[#allocation2 + $0x3a4] sm:$0xf]
    %v1648 = vld [vmem:[#allocation2 + $0x3a8] sm:$0xf]
    %v1649 = vld [vmem:[#allocation2 + $0x3ac] sm:$0xf]
    %v1650 = vld [vmem:[#allocation2 + $0x3b0] sm:$0xf]
    %v1651 = vld [vmem:[#allocation2 + $0x3b4] sm:$0xf]
    %v1652 = vld [vmem:[#allocation2 + $0x3b8] sm:$0xf]
    %v1653 = vld [vmem:[#allocation2 + $0x3bc] sm:$0xf]
    %v1654 = vld [vmem:[#allocation2 + $0x3c0] sm:$0xf]
    %v1655 = vld [vmem:[#allocation2 + $0x3c4] sm:$0xf]
    %v1656 = vld [vmem:[#allocation2 + $0x3c8] sm:$0xf]
    %v1657 = vld [vmem:[#allocation2 + $0x3cc] sm:$0xf]
    %v1658 = vld [vmem:[#allocation2 + $0x3d0] sm:$0xf]
    %v1659 = vld [vmem:[#allocation2 + $0x3d4] sm:$0xf]
    %v1660 = vld [vmem:[#allocation2 + $0x3d8] sm:$0xf]
    %v1661 = vld [vmem:[#allocation2 + $0x3dc] sm:$0xf]
    %v1662 = vld [vmem:[#allocation2 + $0x3e0] sm:$0xf]
    %v1663 = vld [vmem:[#allocation2 + $0x3e4] sm:$0xf]
    %v1664 = vld [vmem:[#allocation2 + $0x3e8] sm:$0xf]
    %v1665 = vld [vmem:[#allocation2 + $0x3ec] sm:$0xf]
    %v1666 = vld [vmem:[#allocation2 + $0x3f0] sm:$0xf]
    %v1667 = vld [vmem:[#allocation2 + $0x3f4] sm:$0xf]
    %v1668 = vld [vmem:[#allocation2 + $0x3f8] sm:$0xf]
    %v1669 = vld [vmem:[#allocation2 + $0x3fc] sm:$0xf]
    %v1670 = vld [vmem:[#allocation2 + $0x400] sm:$0xf]
    %v1671 = vld [vmem:[#allocation2 + $0x404] sm:$0xf]
    %v1672 = vld [vmem:[#allocation2 + $0x408] sm:$0xf]
    %v1673 = vld [vmem:[#allocation2 + $0x40c] sm:$0xf]
    %v1674 = vld [vmem:[#allocation2 + $0x410] sm:$0xf]
    %v1675 = vld [vmem:[#allocation2 + $0x414] sm:$0xf]
    %v1676 = vld [vmem:[#allocation2 + $0x418] sm:$0xf]
    %v1677 = vld [vmem:[#allocation2 + $0x41c] sm:$0xf]
    %v1678 = vld [vmem:[#allocation2 + $0x420] sm:$0xf]
    %v1679 = vld [vmem:[#allocation2 + $0x424] sm:$0xf]
    %v1680 = vld [vmem:[#allocation2 + $0x428] sm:$0xf]
    %v1681 = vld [vmem:[#allocation2 + $0x42c] sm:$0xf]
    %v1682 = vld [vmem:[#allocation2 + $0x430] sm:$0xf]
    %v1683 = vld [vmem:[#allocation2 + $0x434] sm:$0xf]
    %v1684 = vld [vmem:[#allocation2 + $0x438] sm:$0xf]
    %v1685 = vld [vmem:[#allocation2 + $0x43c] sm:$0xf]
    %v1686 = vld [vmem:[#allocation2 + $0x440] sm:$0xf]
    %v1687 = vld [vmem:[#allocation2 + $0x444] sm:$0xf]
    %v1688 = vld [vmem:[#allocation2 + $0x448] sm:$0xf]
    %v1689 = vld [vmem:[#allocation2 + $0x44c] sm:$0xf]
    %v1690 = vld [vmem:[#allocation2 + $0x450] sm:$0xf]
    %v1691 = vld [vmem:[#allocation2 + $0x454] sm:$0xf]
    %v1692 = vld [vmem:[#allocation2 + $0x458] sm:$0xf]
    %v1693 = vld [vmem:[#allocation2 + $0x45c] sm:$0xf]
    %v1694 = vld [vmem:[#allocation2 + $0x460] sm:$0xf]
    %v1695 = vld [vmem:[#allocation2 + $0x464] sm:$0xf]
    %v1696 = vld [vmem:[#allocation2 + $0x468] sm:$0xf]
    %v1697 = vld [vmem:[#allocation2 + $0x46c] sm:$0xf]
    %v1698 = vld [vmem:[#allocation2 + $0x470] sm:$0xf]
    %v1699 = vld [vmem:[#allocation2 + $0x474] sm:$0xf]
    %v1700 = vld [vmem:[#allocation2 + $0x478] sm:$0xf]
    %v1701 = vld [vmem:[#allocation2 + $0x47c] sm:$0xf]
    %v1702 = vld [vmem:[#allocation2 + $0x480] sm:$0xf]
    %v1703 = vld [vmem:[#allocation2 + $0x484] sm:$0xf]
    %v1704 = vld [vmem:[#allocation2 + $0x488] sm:$0xf]
    %v1705 = vld [vmem:[#allocation2 + $0x48c] sm:$0xf]
    %v1706 = vld [vmem:[#allocation2 + $0x490] sm:$0xf]
    %v1707 = vld [vmem:[#allocation2 + $0x494] sm:$0xf]
    %v1708 = vld [vmem:[#allocation2 + $0x498] sm:$0xf]
    %v1709 = vld [vmem:[#allocation2 + $0x49c] sm:$0xf]
    %v1710 = vld [vmem:[#allocation2 + $0x4a0] sm:$0xf]
    %v1711 = vld [vmem:[#allocation2 + $0x4a4] sm:$0xf]
    %v1712 = vld [vmem:[#allocation2 + $0x4a8] sm:$0xf]
    %v1713 = vld [vmem:[#allocation2 + $0x4ac] sm:$0xf]
    %v1714 = vld [vmem:[#allocation2 + $0x4b0] sm:$0xf]
    %v1715 = vld [vmem:[#allocation2 + $0x4b4] sm:$0xf]
    %v1716 = vld [vmem:[#allocation2 + $0x4b8] sm:$0xf]
    %v1717 = vld [vmem:[#allocation2 + $0x4bc] sm:$0xf]
    %v1718 = vld [vmem:[#allocation2 + $0x4c0] sm:$0xf]
    %v1719 = vld [vmem:[#allocation2 + $0x4c4] sm:$0xf]
    %v1720 = vld [vmem:[#allocation2 + $0x4c8] sm:$0xf]
    %v1721 = vld [vmem:[#allocation2 + $0x4cc] sm:$0xf]
    %v1722 = vld [vmem:[#allocation2 + $0x4d0] sm:$0xf]
    %v1723 = vld [vmem:[#allocation2 + $0x4d4] sm:$0xf]
    %v1724 = vld [vmem:[#allocation2 + $0x4d8] sm:$0xf]
    %v1725 = vld [vmem:[#allocation2 + $0x4dc] sm:$0xf]
    %v1726 = vld [vmem:[#allocation2 + $0x4e0] sm:$0xf]
    %v1727 = vld [vmem:[#allocation2 + $0x4e4] sm:$0xf]
    %v1728 = vld [vmem:[#allocation2 + $0x4e8] sm:$0xf]
    %v1729 = vld [vmem:[#allocation2 + $0x4ec] sm:$0xf]
    %v1730 = vld [vmem:[#allocation2 + $0x4f0] sm:$0xf]
    %v1731 = vld [vmem:[#allocation2 + $0x4f4] sm:$0xf]
    %v1732 = vld [vmem:[#allocation2 + $0x4f8] sm:$0xf]
    %v1733 = vld [vmem:[#allocation2 + $0x4fc] sm:$0xf]
    %v1734 = vld [vmem:[#allocation2 + $0x500] sm:$0xf]
    %v1735 = vld [vmem:[#allocation2 + $0x504] sm:$0xf]
    %v1736 = vld [vmem:[#allocation2 + $0x508] sm:$0xf]
    %v1737 = vld [vmem:[#allocation2 + $0x50c] sm:$0xf]
    %v1738 = vld [vmem:[#allocation2 + $0x510] sm:$0xf]
    %v1739 = vld [vmem:[#allocation2 + $0x514] sm:$0xf]
    %v1740 = vld [vmem:[#allocation2 + $0x518] sm:$0xf]
    %v1741 = vld [vmem:[#allocation2 + $0x51c] sm:$0xf]
    %v1742 = vld [vmem:[#allocation2 + $0x520] sm:$0xf]
    %v1743 = vld [vmem:[#allocation2 + $0x524] sm:$0xf]
    %v1744 = vld [vmem:[#allocation2 + $0x528] sm:$0xf]
    %v1745 = vld [vmem:[#allocation2 + $0x52c] sm:$0xf]
    %v1746 = vld [vmem:[#allocation2 + $0x530] sm:$0xf]
    %v1747 = vld [vmem:[#allocation2 + $0x534] sm:$0xf]
    %v1748 = vld [vmem:[#allocation2 + $0x538] sm:$0xf]
    %v1749 = vld [vmem:[#allocation2 + $0x53c] sm:$0xf]
    %v1750 = vld [vmem:[#allocation2 + $0x540] sm:$0xf]
    %v1751 = vld [vmem:[#allocation2 + $0x544] sm:$0xf]
    %v1752 = vld [vmem:[#allocation2 + $0x548] sm:$0xf]
    %v1753 = vld [vmem:[#allocation2 + $0x54c] sm:$0xf]
    %v1754 = vld [vmem:[#allocation2 + $0x550] sm:$0xf]
    %v1755 = vld [vmem:[#allocation2 + $0x554] sm:$0xf]
    %v1756 = vld [vmem:[#allocation2 + $0x558] sm:$0xf]
    %v1757 = vld [vmem:[#allocation2 + $0x55c] sm:$0xf]
    %v1758 = vld [vmem:[#allocation2 + $0x560] sm:$0xf]
    %v1759 = vld [vmem:[#allocation2 + $0x564] sm:$0xf]
    %v1760 = vld [vmem:[#allocation2 + $0x568] sm:$0xf]
    %v1761 = vld [vmem:[#allocation2 + $0x56c] sm:$0xf]
    %v1762 = vld [vmem:[#allocation2 + $0x570] sm:$0xf]
    %v1763 = vld [vmem:[#allocation2 + $0x574] sm:$0xf]
    %v1764 = vld [vmem:[#allocation2 + $0x578] sm:$0xf]
    %v1765 = vld [vmem:[#allocation2 + $0x57c] sm:$0xf]
    %v1766 = vld [vmem:[#allocation2 + $0x580] sm:$0xf]
    %v1767 = vld [vmem:[#allocation2 + $0x584] sm:$0xf]
    %v1768 = vld [vmem:[#allocation2 + $0x588] sm:$0xf]
    %v1769 = vld [vmem:[#allocation2 + $0x58c] sm:$0xf]
    %v1770 = vld [vmem:[#allocation2 + $0x590] sm:$0xf]
    %v1771 = vld [vmem:[#allocation2 + $0x594] sm:$0xf]
    %v1772 = vld [vmem:[#allocation2 + $0x598] sm:$0xf]
    %v1773 = vld [vmem:[#allocation2 + $0x59c] sm:$0xf]
    %v1774 = vld [vmem:[#allocation2 + $0x5a0] sm:$0xf]
    %v1775 = vld [vmem:[#allocation2 + $0x5a4] sm:$0xf]
    %v1776 = vld [vmem:[#allocation2 + $0x5a8] sm:$0xf]
    %v1777 = vld [vmem:[#allocation2 + $0x5ac] sm:$0xf]
    %v1778 = vld [vmem:[#allocation2 + $0x5b0] sm:$0xf]
    %v1779 = vld [vmem:[#allocation2 + $0x5b4] sm:$0xf]
    %v1780 = vld [vmem:[#allocation2 + $0x5b8] sm:$0xf]
    %v1781 = vld [vmem:[#allocation2 + $0x5bc] sm:$0xf]
    %v1782 = vld [vmem:[#allocation2 + $0x5c0] sm:$0xf]
    %v1783 = vld [vmem:[#allocation2 + $0x5c4] sm:$0xf]
    %v1784 = vld [vmem:[#allocation2 + $0x5c8] sm:$0xf]
    %v1785 = vld [vmem:[#allocation2 + $0x5cc] sm:$0xf]
    %v1786 = vld [vmem:[#allocation2 + $0x5d0] sm:$0xf]
    %v1787 = vld [vmem:[#allocation2 + $0x5d4] sm:$0xf]
    %v1788 = vld [vmem:[#allocation2 + $0x5d8] sm:$0xf]
    %v1789 = vld [vmem:[#allocation2 + $0x5dc] sm:$0xf]
    %v1790 = vld [vmem:[#allocation2 + $0x5e0] sm:$0xf]
    %v1791 = vld [vmem:[#allocation2 + $0x5e4] sm:$0xf]
    %v1792 = vld [vmem:[#allocation2 + $0x5e8] sm:$0xf]
    %v1793 = vld [vmem:[#allocation2 + $0x5ec] sm:$0xf]
    %v1794 = vld [vmem:[#allocation2 + $0x5f0] sm:$0xf]
    %v1795 = vld [vmem:[#allocation2 + $0x5f4] sm:$0xf]
    %v1796 = vld [vmem:[#allocation2 + $0x5f8] sm:$0xf]
    %v1797 = vld [vmem:[#allocation2 + $0x5fc] sm:$0xf]
    %v1798 = vld [vmem:[#allocation2 + $0x600] sm:$0xf]
    %v1799 = vld [vmem:[#allocation2 + $0x604] sm:$0xf]
    %v1800 = vld [vmem:[#allocation2 + $0x608] sm:$0xf]
    %v1801 = vld [vmem:[#allocation2 + $0x60c] sm:$0xf]
    %v1802 = vld [vmem:[#allocation2 + $0x610] sm:$0xf]
    %v1803 = vld [vmem:[#allocation2 + $0x614] sm:$0xf]
    %v1804 = vld [vmem:[#allocation2 + $0x618] sm:$0xf]
    %v1805 = vld [vmem:[#allocation2 + $0x61c] sm:$0xf]
    %v1806 = vld [vmem:[#allocation2 + $0x620] sm:$0xf]
    %v1807 = vld [vmem:[#allocation2 + $0x624] sm:$0xf]
    %v1808 = vld [vmem:[#allocation2 + $0x628] sm:$0xf]
    %v1809 = vld [vmem:[#allocation2 + $0x62c] sm:$0xf]
    %v1810 = vld [vmem:[#allocation2 + $0x630] sm:$0xf]
    %v1811 = vld [vmem:[#allocation2 + $0x634] sm:$0xf]
    %v1812 = vld [vmem:[#allocation2 + $0x638] sm:$0xf]
    %v1813 = vld [vmem:[#allocation2 + $0x63c] sm:$0xf]
    %v1814 = vld [vmem:[#allocation2 + $0x640] sm:$0xf]
    %v1815 = vld [vmem:[#allocation2 + $0x644] sm:$0xf]
    %v1816 = vld [vmem:[#allocation2 + $0x648] sm:$0xf]
    %v1817 = vld [vmem:[#allocation2 + $0x64c] sm:$0xf]
    %v1818 = vld [vmem:[#allocation2 + $0x650] sm:$0xf]
    %v1819 = vld [vmem:[#allocation2 + $0x654] sm:$0xf]
    %v1820 = vld [vmem:[#allocation2 + $0x658] sm:$0xf]
    %v1821 = vld [vmem:[#allocation2 + $0x65c] sm:$0xf]
    %v1822 = vld [vmem:[#allocation2 + $0x660] sm:$0xf]
    %v1823 = vld [vmem:[#allocation2 + $0x664] sm:$0xf]
    %v1824 = vld [vmem:[#allocation2 + $0x668] sm:$0xf]
    %v1825 = vld [vmem:[#allocation2 + $0x66c] sm:$0xf]
    %v1826 = vld [vmem:[#allocation2 + $0x670] sm:$0xf]
    %v1827 = vld [vmem:[#allocation2 + $0x674] sm:$0xf]
    %v1828 = vld [vmem:[#allocation2 + $0x678] sm:$0xf]
    %v1829 = vld [vmem:[#allocation2 + $0x67c] sm:$0xf]
    %v1830 = vld [vmem:[#allocation2 + $0x680] sm:$0xf]
    %v1831 = vld [vmem:[#allocation2 + $0x684] sm:$0xf]
    %v1832 = vld [vmem:[#allocation2 + $0x688] sm:$0xf]
    %v1833 = vld [vmem:[#allocation2 + $0x68c] sm:$0xf]
    %v1834 = vld [vmem:[#allocation2 + $0x690] sm:$0xf]
    %v1835 = vld [vmem:[#allocation2 + $0x694] sm:$0xf]
    %v1836 = vld [vmem:[#allocation2 + $0x698] sm:$0xf]
    %v1837 = vld [vmem:[#allocation2 + $0x69c] sm:$0xf]
    %v1838 = vld [vmem:[#allocation2 + $0x6a0] sm:$0xf]
    %v1839 = vld [vmem:[#allocation2 + $0x6a4] sm:$0xf]
    %v1840 = vld [vmem:[#allocation2 + $0x6a8] sm:$0xf]
    %v1841 = vld [vmem:[#allocation2 + $0x6ac] sm:$0xf]
    %v1842 = vld [vmem:[#allocation2 + $0x6b0] sm:$0xf]
    %v1843 = vld [vmem:[#allocation2 + $0x6b4] sm:$0xf]
    %v1844 = vld [vmem:[#allocation2 + $0x6b8] sm:$0xf]
    %v1845 = vld [vmem:[#allocation2 + $0x6bc] sm:$0xf]
    %v1846 = vld [vmem:[#allocation2 + $0x6c0] sm:$0xf]
    %v1847 = vld [vmem:[#allocation2 + $0x6c4] sm:$0xf]
    %v1848 = vld [vmem:[#allocation2 + $0x6c8] sm:$0xf]
    %v1849 = vld [vmem:[#allocation2 + $0x6cc] sm:$0xf]
    %v1850 = vld [vmem:[#allocation2 + $0x6d0] sm:$0xf]
    %v1851 = vld [vmem:[#allocation2 + $0x6d4] sm:$0xf]
    %v1852 = vld [vmem:[#allocation2 + $0x6d8] sm:$0xf]
    %v1853 = vld [vmem:[#allocation2 + $0x6dc] sm:$0xf]
    %v1854 = vld [vmem:[#allocation2 + $0x6e0] sm:$0xf]
    %v1855 = vld [vmem:[#allocation2 + $0x6e4] sm:$0xf]
    %v1856 = vld [vmem:[#allocation2 + $0x6e8] sm:$0xf]
    %v1857 = vld [vmem:[#allocation2 + $0x6ec] sm:$0xf]
    %v1858 = vld [vmem:[#allocation2 + $0x6f0] sm:$0xf]
    %v1859 = vld [vmem:[#allocation2 + $0x6f4] sm:$0xf]
    %v1860 = vld [vmem:[#allocation2 + $0x6f8] sm:$0xf]
    %v1861 = vld [vmem:[#allocation2 + $0x6fc] sm:$0xf]
    %v1862 = vld [vmem:[#allocation2 + $0x700] sm:$0xf]
    %v1863 = vld [vmem:[#allocation2 + $0x704] sm:$0xf]
    %v1864 = vld [vmem:[#allocation2 + $0x708] sm:$0xf]
    %v1865 = vld [vmem:[#allocation2 + $0x70c] sm:$0xf]
    %v1866 = vld [vmem:[#allocation2 + $0x710] sm:$0xf]
    %v1867 = vld [vmem:[#allocation2 + $0x714] sm:$0xf]
    %v1868 = vld [vmem:[#allocation2 + $0x718] sm:$0xf]
    %v1869 = vld [vmem:[#allocation2 + $0x71c] sm:$0xf]
    %v1870 = vld [vmem:[#allocation2 + $0x720] sm:$0xf]
    %v1871 = vld [vmem:[#allocation2 + $0x724] sm:$0xf]
    %v1872 = vld [vmem:[#allocation2 + $0x728] sm:$0xf]
    %v1873 = vld [vmem:[#allocation2 + $0x72c] sm:$0xf]
    %v1874 = vld [vmem:[#allocation2 + $0x730] sm:$0xf]
    %v1875 = vld [vmem:[#allocation2 + $0x734] sm:$0xf]
    %v1876 = vld [vmem:[#allocation2 + $0x738] sm:$0xf]
    %v1877 = vld [vmem:[#allocation2 + $0x73c] sm:$0xf]
    %v1878 = vld [vmem:[#allocation2 + $0x740] sm:$0xf]
    %v1879 = vld [vmem:[#allocation2 + $0x744] sm:$0xf]
    %v1880 = vld [vmem:[#allocation2 + $0x748] sm:$0xf]
    %v1881 = vld [vmem:[#allocation2 + $0x74c] sm:$0xf]
    %v1882 = vld [vmem:[#allocation2 + $0x750] sm:$0xf]
    %v1883 = vld [vmem:[#allocation2 + $0x754] sm:$0xf]
    %v1884 = vld [vmem:[#allocation2 + $0x758] sm:$0xf]
    %v1885 = vld [vmem:[#allocation2 + $0x75c] sm:$0xf]
    %v1886 = vld [vmem:[#allocation2 + $0x760] sm:$0xf]
    %v1887 = vld [vmem:[#allocation2 + $0x764] sm:$0xf]
    %v1888 = vld [vmem:[#allocation2 + $0x768] sm:$0xf]
    %v1889 = vld [vmem:[#allocation2 + $0x76c] sm:$0xf]
    %v1890 = vld [vmem:[#allocation2 + $0x770] sm:$0xf]
    %v1891 = vld [vmem:[#allocation2 + $0x774] sm:$0xf]
    %v1892 = vld [vmem:[#allocation2 + $0x778] sm:$0xf]
    %v1893 = vld [vmem:[#allocation2 + $0x77c] sm:$0xf]
    %v1894 = vld [vmem:[#allocation2 + $0x780] sm:$0xf]
    %v1895 = vld [vmem:[#allocation2 + $0x784] sm:$0xf]
    %v1896 = vld [vmem:[#allocation2 + $0x788] sm:$0xf]
    %v1897 = vld [vmem:[#allocation2 + $0x78c] sm:$0xf]
    %v1898 = vld [vmem:[#allocation2 + $0x790] sm:$0xf]
    %v1899 = vld [vmem:[#allocation2 + $0x794] sm:$0xf]
    %v1900 = vld [vmem:[#allocation2 + $0x798] sm:$0xf]
    %v1901 = vld [vmem:[#allocation2 + $0x79c] sm:$0xf]
    %v1902 = vld [vmem:[#allocation2 + $0x7a0] sm:$0xf]
    %v1903 = vld [vmem:[#allocation2 + $0x7a4] sm:$0xf]
    %v1904 = vld [vmem:[#allocation2 + $0x7a8] sm:$0xf]
    %v1905 = vld [vmem:[#allocation2 + $0x7ac] sm:$0xf]
    %v1906 = vld [vmem:[#allocation2 + $0x7b0] sm:$0xf]
    %v1907 = vld [vmem:[#allocation2 + $0x7b4] sm:$0xf]
    %v1908 = vld [vmem:[#allocation2 + $0x7b8] sm:$0xf]
    %v1909 = vld [vmem:[#allocation2 + $0x7bc] sm:$0xf]
    %v1910 = vld [vmem:[#allocation2 + $0x7c0] sm:$0xf]
    %v1911 = vld [vmem:[#allocation2 + $0x7c4] sm:$0xf]
    %v1912 = vld [vmem:[#allocation2 + $0x7c8] sm:$0xf]
    %v1913 = vld [vmem:[#allocation2 + $0x7cc] sm:$0xf]
    %v1914 = vld [vmem:[#allocation2 + $0x7d0] sm:$0xf]
    %v1915 = vld [vmem:[#allocation2 + $0x7d4] sm:$0xf]
    %v1916 = vld [vmem:[#allocation2 + $0x7d8] sm:$0xf]
    %v1917 = vld [vmem:[#allocation2 + $0x7dc] sm:$0xf]
    %v1918 = vld [vmem:[#allocation2 + $0x7e0] sm:$0xf]
    %v1919 = vld [vmem:[#allocation2 + $0x7e4] sm:$0xf]
    %v1920 = vld [vmem:[#allocation2 + $0x7e8] sm:$0xf]
    %v1921 = vld [vmem:[#allocation2 + $0x7ec] sm:$0xf]
    %v1922 = vld [vmem:[#allocation2 + $0x7f0] sm:$0xf]
    %v1923 = vld [vmem:[#allocation2 + $0x7f4] sm:$0xf]
    %v1924 = vld [vmem:[#allocation2 + $0x7f8] sm:$0xf]
    %v1925 = vld [vmem:[#allocation2 + $0x7fc] sm:$0xf]
    %v1926 = vld [vmem:[%s3] sm:$0x1]
    %v1928 = vlaneseq
    %v1929 = vshrl.u32 %v1928, 7
    %v1930 = vsub.s32 0, %v1929
    %v1931 = vrot.slane %v1926, %v1930
    %v2445 = vunpack.c.l.b16 %v1414
    %v2446 = vunpack.c.l.b16 %v1415
    %v2447 = vunpack.c.l.b16 %v1416
    %v2448 = vunpack.c.l.b16 %v1417
    %v2449 = vunpack.c.l.b16 %v1418
    %v2450 = vunpack.c.l.b16 %v1419
    %v2451 = vunpack.c.l.b16 %v1420
    %v2452 = vunpack.c.l.b16 %v1421
    %v2453 = vunpack.c.l.b16 %v1422
    %v2454 = vunpack.c.l.b16 %v1423
    %v2455 = vunpack.c.l.b16 %v1424
    %v2456 = vunpack.c.l.b16 %v1425
    %v2457 = vunpack.c.l.b16 %v1426
    %v2458 = vunpack.c.l.b16 %v1427
    %v2459 = vunpack.c.l.b16 %v1428
    %v2460 = vunpack.c.l.b16 %v1429
    %v2461 = vunpack.c.l.b16 %v1430
    %v2462 = vunpack.c.l.b16 %v1431
    %v2463 = vunpack.c.l.b16 %v1432
    %v2464 = vunpack.c.l.b16 %v1433
    %v2465 = vunpack.c.l.b16 %v1434
    %v2466 = vunpack.c.l.b16 %v1435
    %v2467 = vunpack.c.l.b16 %v1436
    %v2468 = vunpack.c.l.b16 %v1437
    %v2469 = vunpack.c.l.b16 %v1438
    %v2470 = vunpack.c.l.b16 %v1439
    %v2471 = vunpack.c.l.b16 %v1440
    %v2472 = vunpack.c.l.b16 %v1441
    %v2473 = vunpack.c.l.b16 %v1442
    %v2474 = vunpack.c.l.b16 %v1443
    %v2475 = vunpack.c.l.b16 %v1444
    %v2476 = vunpack.c.l.b16 %v1445
    %v2477 = vunpack.c.l.b16 %v1446
    %v2478 = vunpack.c.l.b16 %v1447
    %v2479 = vunpack.c.l.b16 %v1448
    %v2480 = vunpack.c.l.b16 %v1449
    %v2481 = vunpack.c.l.b16 %v1450
    %v2482 = vunpack.c.l.b16 %v1451
    %v2483 = vunpack.c.l.b16 %v1452
    %v2484 = vunpack.c.l.b16 %v1453
    %v2485 = vunpack.c.l.b16 %v1454
    %v2486 = vunpack.c.l.b16 %v1455
    %v2487 = vunpack.c.l.b16 %v1456
    %v2488 = vunpack.c.l.b16 %v1457
    %v2489 = vunpack.c.l.b16 %v1458
    %v2490 = vunpack.c.l.b16 %v1459
    %v2491 = vunpack.c.l.b16 %v1460
    %v2492 = vunpack.c.l.b16 %v1461
    %v2493 = vunpack.c.l.b16 %v1462
    %v2494 = vunpack.c.l.b16 %v1463
    %v2495 = vunpack.c.l.b16 %v1464
    %v2496 = vunpack.c.l.b16 %v1465
    %v2497 = vunpack.c.l.b16 %v1466
    %v2498 = vunpack.c.l.b16 %v1467
    %v2499 = vunpack.c.l.b16 %v1468
    %v2500 = vunpack.c.l.b16 %v1469
    %v2501 = vunpack.c.l.b16 %v1470
    %v2502 = vunpack.c.l.b16 %v1471
    %v2503 = vunpack.c.l.b16 %v1472
    %v2504 = vunpack.c.l.b16 %v1473
    %v2505 = vunpack.c.l.b16 %v1474
    %v2506 = vunpack.c.l.b16 %v1475
    %v2507 = vunpack.c.l.b16 %v1476
    %v2508 = vunpack.c.l.b16 %v1477
    %v2509 = vunpack.c.l.b16 %v1478
    %v2510 = vunpack.c.l.b16 %v1479
    %v2511 = vunpack.c.l.b16 %v1480
    %v2512 = vunpack.c.l.b16 %v1481
    %v2513 = vunpack.c.l.b16 %v1482
    %v2514 = vunpack.c.l.b16 %v1483
    %v2515 = vunpack.c.l.b16 %v1484
    %v2516 = vunpack.c.l.b16 %v1485
    %v2517 = vunpack.c.l.b16 %v1486
    %v2518 = vunpack.c.l.b16 %v1487
    %v2519 = vunpack.c.l.b16 %v1488
    %v2520 = vunpack.c.l.b16 %v1489
    %v2521 = vunpack.c.l.b16 %v1490
    %v2522 = vunpack.c.l.b16 %v1491
    %v2523 = vunpack.c.l.b16 %v1492
    %v2524 = vunpack.c.l.b16 %v1493
    %v2525 = vunpack.c.l.b16 %v1494
    %v2526 = vunpack.c.l.b16 %v1495
    %v2527 = vunpack.c.l.b16 %v1496
    %v2528 = vunpack.c.l.b16 %v1497
    %v2529 = vunpack.c.l.b16 %v1498
    %v2530 = vunpack.c.l.b16 %v1499
    %v2531 = vunpack.c.l.b16 %v1500
    %v2532 = vunpack.c.l.b16 %v1501
    %v2533 = vunpack.c.l.b16 %v1502
    %v2534 = vunpack.c.l.b16 %v1503
    %v2535 = vunpack.c.l.b16 %v1504
    %v2536 = vunpack.c.l.b16 %v1505
    %v2537 = vunpack.c.l.b16 %v1506
    %v2538 = vunpack.c.l.b16 %v1507
    %v2539 = vunpack.c.l.b16 %v1508
    %v2540 = vunpack.c.l.b16 %v1509
    %v2541 = vunpack.c.l.b16 %v1510
    %v2542 = vunpack.c.l.b16 %v1511
    %v2543 = vunpack.c.l.b16 %v1512
    %v2544 = vunpack.c.l.b16 %v1513
    %v2545 = vunpack.c.l.b16 %v1514
    %v2546 = vunpack.c.l.b16 %v1515
    %v2547 = vunpack.c.l.b16 %v1516
    %v2548 = vunpack.c.l.b16 %v1517
    %v2549 = vunpack.c.l.b16 %v1518
    %v2550 = vunpack.c.l.b16 %v1519
    %v2551 = vunpack.c.l.b16 %v1520
    %v2552 = vunpack.c.l.b16 %v1521
    %v2553 = vunpack.c.l.b16 %v1522
    %v2554 = vunpack.c.l.b16 %v1523
    %v2555 = vunpack.c.l.b16 %v1524
    %v2556 = vunpack.c.l.b16 %v1525
    %v2557 = vunpack.c.l.b16 %v1526
    %v2558 = vunpack.c.l.b16 %v1527
    %v2559 = vunpack.c.l.b16 %v1528
    %v2560 = vunpack.c.l.b16 %v1529
    %v2561 = vunpack.c.l.b16 %v1530
    %v2562 = vunpack.c.l.b16 %v1531
    %v2563 = vunpack.c.l.b16 %v1532
    %v2564 = vunpack.c.l.b16 %v1533
    %v2565 = vunpack.c.l.b16 %v1534
    %v2566 = vunpack.c.l.b16 %v1535
    %v2567 = vunpack.c.l.b16 %v1536
    %v2568 = vunpack.c.l.b16 %v1537
    %v2569 = vunpack.c.l.b16 %v1538
    %v2570 = vunpack.c.l.b16 %v1539
    %v2571 = vunpack.c.l.b16 %v1540
    %v2572 = vunpack.c.l.b16 %v1541
    %v2573 = vunpack.c.l.b16 %v1542
    %v2574 = vunpack.c.l.b16 %v1543
    %v2575 = vunpack.c.l.b16 %v1544
    %v2576 = vunpack.c.l.b16 %v1545
    %v2577 = vunpack.c.l.b16 %v1546
    %v2578 = vunpack.c.l.b16 %v1547
    %v2579 = vunpack.c.l.b16 %v1548
    %v2580 = vunpack.c.l.b16 %v1549
    %v2581 = vunpack.c.l.b16 %v1550
    %v2582 = vunpack.c.l.b16 %v1551
    %v2583 = vunpack.c.l.b16 %v1552
    %v2584 = vunpack.c.l.b16 %v1553
    %v2585 = vunpack.c.l.b16 %v1554
    %v2586 = vunpack.c.l.b16 %v1555
    %v2587 = vunpack.c.l.b16 %v1556
    %v2588 = vunpack.c.l.b16 %v1557
    %v2589 = vunpack.c.l.b16 %v1558
    %v2590 = vunpack.c.l.b16 %v1559
    %v2591 = vunpack.c.l.b16 %v1560
    %v2592 = vunpack.c.l.b16 %v1561
    %v2593 = vunpack.c.l.b16 %v1562
    %v2594 = vunpack.c.l.b16 %v1563
    %v2595 = vunpack.c.l.b16 %v1564
    %v2596 = vunpack.c.l.b16 %v1565
    %v2597 = vunpack.c.l.b16 %v1566
    %v2598 = vunpack.c.l.b16 %v1567
    %v2599 = vunpack.c.l.b16 %v1568
    %v2600 = vunpack.c.l.b16 %v1569
    %v2601 = vunpack.c.l.b16 %v1570
    %v2602 = vunpack.c.l.b16 %v1571
    %v2603 = vunpack.c.l.b16 %v1572
    %v2604 = vunpack.c.l.b16 %v1573
    %v2605 = vunpack.c.l.b16 %v1574
    %v2606 = vunpack.c.l.b16 %v1575
    %v2607 = vunpack.c.l.b16 %v1576
    %v2608 = vunpack.c.l.b16 %v1577
    %v2609 = vunpack.c.l.b16 %v1578
    %v2610 = vunpack.c.l.b16 %v1579
    %v2611 = vunpack.c.l.b16 %v1580
    %v2612 = vunpack.c.l.b16 %v1581
    %v2613 = vunpack.c.l.b16 %v1582
    %v2614 = vunpack.c.l.b16 %v1583
    %v2615 = vunpack.c.l.b16 %v1584
    %v2616 = vunpack.c.l.b16 %v1585
    %v2617 = vunpack.c.l.b16 %v1586
    %v2618 = vunpack.c.l.b16 %v1587
    %v2619 = vunpack.c.l.b16 %v1588
    %v2620 = vunpack.c.l.b16 %v1589
    %v2621 = vunpack.c.l.b16 %v1590
    %v2622 = vunpack.c.l.b16 %v1591
    %v2623 = vunpack.c.l.b16 %v1592
    %v2624 = vunpack.c.l.b16 %v1593
    %v2625 = vunpack.c.l.b16 %v1594
    %v2626 = vunpack.c.l.b16 %v1595
    %v2627 = vunpack.c.l.b16 %v1596
    %v2628 = vunpack.c.l.b16 %v1597
    %v2629 = vunpack.c.l.b16 %v1598
    %v2630 = vunpack.c.l.b16 %v1599
    %v2631 = vunpack.c.l.b16 %v1600
    %v2632 = vunpack.c.l.b16 %v1601
    %v2633 = vunpack.c.l.b16 %v1602
    %v2634 = vunpack.c.l.b16 %v1603
    %v2635 = vunpack.c.l.b16 %v1604
    %v2636 = vunpack.c.l.b16 %v1605
    %v2637 = vunpack.c.l.b16 %v1606
    %v2638 = vunpack.c.l.b16 %v1607
    %v2639 = vunpack.c.l.b16 %v1608
    %v2640 = vunpack.c.l.b16 %v1609
    %v2641 = vunpack.c.l.b16 %v1610
    %v2642 = vunpack.c.l.b16 %v1611
    %v2643 = vunpack.c.l.b16 %v1612
    %v2644 = vunpack.c.l.b16 %v1613
    %v2645 = vunpack.c.l.b16 %v1614
    %v2646 = vunpack.c.l.b16 %v1615
    %v2647 = vunpack.c.l.b16 %v1616
    %v2648 = vunpack.c.l.b16 %v1617
    %v2649 = vunpack.c.l.b16 %v1618
    %v2650 = vunpack.c.l.b16 %v1619
    %v2651 = vunpack.c.l.b16 %v1620
    %v2652 = vunpack.c.l.b16 %v1621
    %v2653 = vunpack.c.l.b16 %v1622
    %v2654 = vunpack.c.l.b16 %v1623
    %v2655 = vunpack.c.l.b16 %v1624
    %v2656 = vunpack.c.l.b16 %v1625
    %v2657 = vunpack.c.l.b16 %v1626
    %v2658 = vunpack.c.l.b16 %v1627
    %v2659 = vunpack.c.l.b16 %v1628
    %v2660 = vunpack.c.l.b16 %v1629
    %v2661 = vunpack.c.l.b16 %v1630
    %v2662 = vunpack.c.l.b16 %v1631
    %v2663 = vunpack.c.l.b16 %v1632
    %v2664 = vunpack.c.l.b16 %v1633
    %v2665 = vunpack.c.l.b16 %v1634
    %v2666 = vunpack.c.l.b16 %v1635
    %v2667 = vunpack.c.l.b16 %v1636
    %v2668 = vunpack.c.l.b16 %v1637
    %v2669 = vunpack.c.l.b16 %v1638
    %v2670 = vunpack.c.l.b16 %v1639
    %v2671 = vunpack.c.l.b16 %v1640
    %v2672 = vunpack.c.l.b16 %v1641
    %v2673 = vunpack.c.l.b16 %v1642
    %v2674 = vunpack.c.l.b16 %v1643
    %v2675 = vunpack.c.l.b16 %v1644
    %v2676 = vunpack.c.l.b16 %v1645
    %v2677 = vunpack.c.l.b16 %v1646
    %v2678 = vunpack.c.l.b16 %v1647
    %v2679 = vunpack.c.l.b16 %v1648
    %v2680 = vunpack.c.l.b16 %v1649
    %v2681 = vunpack.c.l.b16 %v1650
    %v2682 = vunpack.c.l.b16 %v1651
    %v2683 = vunpack.c.l.b16 %v1652
    %v2684 = vunpack.c.l.b16 %v1653
    %v2685 = vunpack.c.l.b16 %v1654
    %v2686 = vunpack.c.l.b16 %v1655
    %v2687 = vunpack.c.l.b16 %v1656
    %v2688 = vunpack.c.l.b16 %v1657
    %v2689 = vunpack.c.l.b16 %v1658
    %v2690 = vunpack.c.l.b16 %v1659
    %v2691 = vunpack.c.l.b16 %v1660
    %v2692 = vunpack.c.l.b16 %v1661
    %v2693 = vunpack.c.l.b16 %v1662
    %v2694 = vunpack.c.l.b16 %v1663
    %v2695 = vunpack.c.l.b16 %v1664
    %v2696 = vunpack.c.l.b16 %v1665
    %v2697 = vunpack.c.l.b16 %v1666
    %v2698 = vunpack.c.l.b16 %v1667
    %v2699 = vunpack.c.l.b16 %v1668
    %v2700 = vunpack.c.l.b16 %v1669
    %v2701 = vunpack.c.l.b16 %v1670
    %v2702 = vunpack.c.l.b16 %v1671
    %v2703 = vunpack.c.l.b16 %v1672
    %v2704 = vunpack.c.l.b16 %v1673
    %v2705 = vunpack.c.l.b16 %v1674
    %v2706 = vunpack.c.l.b16 %v1675
    %v2707 = vunpack.c.l.b16 %v1676
    %v2708 = vunpack.c.l.b16 %v1677
    %v2709 = vunpack.c.l.b16 %v1678
    %v2710 = vunpack.c.l.b16 %v1679
    %v2711 = vunpack.c.l.b16 %v1680
    %v2712 = vunpack.c.l.b16 %v1681
    %v2713 = vunpack.c.l.b16 %v1682
    %v2714 = vunpack.c.l.b16 %v1683
    %v2715 = vunpack.c.l.b16 %v1684
    %v2716 = vunpack.c.l.b16 %v1685
    %v2717 = vunpack.c.l.b16 %v1686
    %v2718 = vunpack.c.l.b16 %v1687
    %v2719 = vunpack.c.l.b16 %v1688
    %v2720 = vunpack.c.l.b16 %v1689
    %v2721 = vunpack.c.l.b16 %v1690
    %v2722 = vunpack.c.l.b16 %v1691
    %v2723 = vunpack.c.l.b16 %v1692
    %v2724 = vunpack.c.l.b16 %v1693
    %v2725 = vunpack.c.l.b16 %v1694
    %v2726 = vunpack.c.l.b16 %v1695
    %v2727 = vunpack.c.l.b16 %v1696
    %v2728 = vunpack.c.l.b16 %v1697
    %v2729 = vunpack.c.l.b16 %v1698
    %v2730 = vunpack.c.l.b16 %v1699
    %v2731 = vunpack.c.l.b16 %v1700
    %v2732 = vunpack.c.l.b16 %v1701
    %v2733 = vunpack.c.l.b16 %v1702
    %v2734 = vunpack.c.l.b16 %v1703
    %v2735 = vunpack.c.l.b16 %v1704
    %v2736 = vunpack.c.l.b16 %v1705
    %v2737 = vunpack.c.l.b16 %v1706
    %v2738 = vunpack.c.l.b16 %v1707
    %v2739 = vunpack.c.l.b16 %v1708
    %v2740 = vunpack.c.l.b16 %v1709
    %v2741 = vunpack.c.l.b16 %v1710
    %v2742 = vunpack.c.l.b16 %v1711
    %v2743 = vunpack.c.l.b16 %v1712
    %v2744 = vunpack.c.l.b16 %v1713
    %v2745 = vunpack.c.l.b16 %v1714
    %v2746 = vunpack.c.l.b16 %v1715
    %v2747 = vunpack.c.l.b16 %v1716
    %v2748 = vunpack.c.l.b16 %v1717
    %v2749 = vunpack.c.l.b16 %v1718
    %v2750 = vunpack.c.l.b16 %v1719
    %v2751 = vunpack.c.l.b16 %v1720
    %v2752 = vunpack.c.l.b16 %v1721
    %v2753 = vunpack.c.l.b16 %v1722
    %v2754 = vunpack.c.l.b16 %v1723
    %v2755 = vunpack.c.l.b16 %v1724
    %v2756 = vunpack.c.l.b16 %v1725
    %v2757 = vunpack.c.l.b16 %v1726
    %v2758 = vunpack.c.l.b16 %v1727
    %v2759 = vunpack.c.l.b16 %v1728
    %v2760 = vunpack.c.l.b16 %v1729
    %v2761 = vunpack.c.l.b16 %v1730
    %v2762 = vunpack.c.l.b16 %v1731
    %v2763 = vunpack.c.l.b16 %v1732
    %v2764 = vunpack.c.l.b16 %v1733
    %v2765 = vunpack.c.l.b16 %v1734
    %v2766 = vunpack.c.l.b16 %v1735
    %v2767 = vunpack.c.l.b16 %v1736
    %v2768 = vunpack.c.l.b16 %v1737
    %v2769 = vunpack.c.l.b16 %v1738
    %v2770 = vunpack.c.l.b16 %v1739
    %v2771 = vunpack.c.l.b16 %v1740
    %v2772 = vunpack.c.l.b16 %v1741
    %v2773 = vunpack.c.l.b16 %v1742
    %v2774 = vunpack.c.l.b16 %v1743
    %v2775 = vunpack.c.l.b16 %v1744
    %v2776 = vunpack.c.l.b16 %v1745
    %v2777 = vunpack.c.l.b16 %v1746
    %v2778 = vunpack.c.l.b16 %v1747
    %v2779 = vunpack.c.l.b16 %v1748
    %v2780 = vunpack.c.l.b16 %v1749
    %v2781 = vunpack.c.l.b16 %v1750
    %v2782 = vunpack.c.l.b16 %v1751
    %v2783 = vunpack.c.l.b16 %v1752
    %v2784 = vunpack.c.l.b16 %v1753
    %v2785 = vunpack.c.l.b16 %v1754
    %v2786 = vunpack.c.l.b16 %v1755
    %v2787 = vunpack.c.l.b16 %v1756
    %v2788 = vunpack.c.l.b16 %v1757
    %v2789 = vunpack.c.l.b16 %v1758
    %v2790 = vunpack.c.l.b16 %v1759
    %v2791 = vunpack.c.l.b16 %v1760
    %v2792 = vunpack.c.l.b16 %v1761
    %v2793 = vunpack.c.l.b16 %v1762
    %v2794 = vunpack.c.l.b16 %v1763
    %v2795 = vunpack.c.l.b16 %v1764
    %v2796 = vunpack.c.l.b16 %v1765
    %v2797 = vunpack.c.l.b16 %v1766
    %v2798 = vunpack.c.l.b16 %v1767
    %v2799 = vunpack.c.l.b16 %v1768
    %v2800 = vunpack.c.l.b16 %v1769
    %v2801 = vunpack.c.l.b16 %v1770
    %v2802 = vunpack.c.l.b16 %v1771
    %v2803 = vunpack.c.l.b16 %v1772
    %v2804 = vunpack.c.l.b16 %v1773
    %v2805 = vunpack.c.l.b16 %v1774
    %v2806 = vunpack.c.l.b16 %v1775
    %v2807 = vunpack.c.l.b16 %v1776
    %v2808 = vunpack.c.l.b16 %v1777
    %v2809 = vunpack.c.l.b16 %v1778
    %v2810 = vunpack.c.l.b16 %v1779
    %v2811 = vunpack.c.l.b16 %v1780
    %v2812 = vunpack.c.l.b16 %v1781
    %v2813 = vunpack.c.l.b16 %v1782
    %v2814 = vunpack.c.l.b16 %v1783
    %v2815 = vunpack.c.l.b16 %v1784
    %v2816 = vunpack.c.l.b16 %v1785
    %v2817 = vunpack.c.l.b16 %v1786
    %v2818 = vunpack.c.l.b16 %v1787
    %v2819 = vunpack.c.l.b16 %v1788
    %v2820 = vunpack.c.l.b16 %v1789
    %v2821 = vunpack.c.l.b16 %v1790
    %v2822 = vunpack.c.l.b16 %v1791
    %v2823 = vunpack.c.l.b16 %v1792
    %v2824 = vunpack.c.l.b16 %v1793
    %v2825 = vunpack.c.l.b16 %v1794
    %v2826 = vunpack.c.l.b16 %v1795
    %v2827 = vunpack.c.l.b16 %v1796
    %v2828 = vunpack.c.l.b16 %v1797
    %v2829 = vunpack.c.l.b16 %v1798
    %v2830 = vunpack.c.l.b16 %v1799
    %v2831 = vunpack.c.l.b16 %v1800
    %v2832 = vunpack.c.l.b16 %v1801
    %v2833 = vunpack.c.l.b16 %v1802
    %v2834 = vunpack.c.l.b16 %v1803
    %v2835 = vunpack.c.l.b16 %v1804
    %v2836 = vunpack.c.l.b16 %v1805
    %v2837 = vunpack.c.l.b16 %v1806
    %v2838 = vunpack.c.l.b16 %v1807
    %v2839 = vunpack.c.l.b16 %v1808
    %v2840 = vunpack.c.l.b16 %v1809
    %v2841 = vunpack.c.l.b16 %v1810
    %v2842 = vunpack.c.l.b16 %v1811
    %v2843 = vunpack.c.l.b16 %v1812
    %v2844 = vunpack.c.l.b16 %v1813
    %v2845 = vunpack.c.l.b16 %v1814
    %v2846 = vunpack.c.l.b16 %v1815
    %v2847 = vunpack.c.l.b16 %v1816
    %v2848 = vunpack.c.l.b16 %v1817
    %v2849 = vunpack.c.l.b16 %v1818
    %v2850 = vunpack.c.l.b16 %v1819
    %v2851 = vunpack.c.l.b16 %v1820
    %v2852 = vunpack.c.l.b16 %v1821
    %v2853 = vunpack.c.l.b16 %v1822
    %v2854 = vunpack.c.l.b16 %v1823
    %v2855 = vunpack.c.l.b16 %v1824
    %v2856 = vunpack.c.l.b16 %v1825
    %v2857 = vunpack.c.l.b16 %v1826
    %v2858 = vunpack.c.l.b16 %v1827
    %v2859 = vunpack.c.l.b16 %v1828
    %v2860 = vunpack.c.l.b16 %v1829
    %v2861 = vunpack.c.l.b16 %v1830
    %v2862 = vunpack.c.l.b16 %v1831
    %v2863 = vunpack.c.l.b16 %v1832
    %v2864 = vunpack.c.l.b16 %v1833
    %v2865 = vunpack.c.l.b16 %v1834
    %v2866 = vunpack.c.l.b16 %v1835
    %v2867 = vunpack.c.l.b16 %v1836
    %v2868 = vunpack.c.l.b16 %v1837
    %v2869 = vunpack.c.l.b16 %v1838
    %v2870 = vunpack.c.l.b16 %v1839
    %v2871 = vunpack.c.l.b16 %v1840
    %v2872 = vunpack.c.l.b16 %v1841
    %v2873 = vunpack.c.l.b16 %v1842
    %v2874 = vunpack.c.l.b16 %v1843
    %v2875 = vunpack.c.l.b16 %v1844
    %v2876 = vunpack.c.l.b16 %v1845
    %v2877 = vunpack.c.l.b16 %v1846
    %v2878 = vunpack.c.l.b16 %v1847
    %v2879 = vunpack.c.l.b16 %v1848
    %v2880 = vunpack.c.l.b16 %v1849
    %v2881 = vunpack.c.l.b16 %v1850
    %v2882 = vunpack.c.l.b16 %v1851
    %v2883 = vunpack.c.l.b16 %v1852
    %v2884 = vunpack.c.l.b16 %v1853
    %v2885 = vunpack.c.l.b16 %v1854
    %v2886 = vunpack.c.l.b16 %v1855
    %v2887 = vunpack.c.l.b16 %v1856
    %v2888 = vunpack.c.l.b16 %v1857
    %v2889 = vunpack.c.l.b16 %v1858
    %v2890 = vunpack.c.l.b16 %v1859
    %v2891 = vunpack.c.l.b16 %v1860
    %v2892 = vunpack.c.l.b16 %v1861
    %v2893 = vunpack.c.l.b16 %v1862
    %v2894 = vunpack.c.l.b16 %v1863
    %v2895 = vunpack.c.l.b16 %v1864
    %v2896 = vunpack.c.l.b16 %v1865
    %v2897 = vunpack.c.l.b16 %v1866
    %v2898 = vunpack.c.l.b16 %v1867
    %v2899 = vunpack.c.l.b16 %v1868
    %v2900 = vunpack.c.l.b16 %v1869
    %v2901 = vunpack.c.l.b16 %v1870
    %v2902 = vunpack.c.l.b16 %v1871
    %v2903 = vunpack.c.l.b16 %v1872
    %v2904 = vunpack.c.l.b16 %v1873
    %v2905 = vunpack.c.l.b16 %v1874
    %v2906 = vunpack.c.l.b16 %v1875
    %v2907 = vunpack.c.l.b16 %v1876
    %v2908 = vunpack.c.l.b16 %v1877
    %v2909 = vunpack.c.l.b16 %v1878
    %v2910 = vunpack.c.l.b16 %v1879
    %v2911 = vunpack.c.l.b16 %v1880
    %v2912 = vunpack.c.l.b16 %v1881
    %v2913 = vunpack.c.l.b16 %v1882
    %v2914 = vunpack.c.l.b16 %v1883
    %v2915 = vunpack.c.l.b16 %v1884
    %v2916 = vunpack.c.l.b16 %v1885
    %v2917 = vunpack.c.l.b16 %v1886
    %v2918 = vunpack.c.l.b16 %v1887
    %v2919 = vunpack.c.l.b16 %v1888
    %v2920 = vunpack.c.l.b16 %v1889
    %v2921 = vunpack.c.l.b16 %v1890
    %v2922 = vunpack.c.l.b16 %v1891
    %v2923 = vunpack.c.l.b16 %v1892
    %v2924 = vunpack.c.l.b16 %v1893
    %v2925 = vunpack.c.l.b16 %v1894
    %v2926 = vunpack.c.l.b16 %v1895
    %v2927 = vunpack.c.l.b16 %v1896
    %v2928 = vunpack.c.l.b16 %v1897
    %v2929 = vunpack.c.l.b16 %v1898
    %v2930 = vunpack.c.l.b16 %v1899
    %v2931 = vunpack.c.l.b16 %v1900
    %v2932 = vunpack.c.l.b16 %v1901
    %v2933 = vunpack.c.l.b16 %v1902
    %v2934 = vunpack.c.l.b16 %v1903
    %v2935 = vunpack.c.l.b16 %v1904
    %v2936 = vunpack.c.l.b16 %v1905
    %v2937 = vunpack.c.l.b16 %v1906
    %v2938 = vunpack.c.l.b16 %v1907
    %v2939 = vunpack.c.l.b16 %v1908
    %v2940 = vunpack.c.l.b16 %v1909
    %v2941 = vunpack.c.l.b16 %v1910
    %v2942 = vunpack.c.l.b16 %v1911
    %v2943 = vunpack.c.l.b16 %v1912
    %v2944 = vunpack.c.l.b16 %v1913
    %v2945 = vunpack.c.l.b16 %v1914
    %v2946 = vunpack.c.l.b16 %v1915
    %v2947 = vunpack.c.l.b16 %v1916
    %v2948 = vunpack.c.l.b16 %v1917
    %v2949 = vunpack.c.l.b16 %v1918
    %v2950 = vunpack.c.l.b16 %v1919
    %v2951 = vunpack.c.l.b16 %v1920
    %v2952 = vunpack.c.l.b16 %v1921
    %v2953 = vunpack.c.l.b16 %v1922
    %v2954 = vunpack.c.l.b16 %v1923
    %v2955 = vunpack.c.l.b16 %v1924
    %v2956 = vunpack.c.l.b16 %v1925
    %v2957 = vpack.c.b16 %v2446, %v2445
    %v2958 = vpack.c.b16 %v2448, %v2447
    %v2959 = vpack.c.b16 %v2450, %v2449
    %v2960 = vpack.c.b16 %v2452, %v2451
    %v2961 = vpack.c.b16 %v2454, %v2453
    %v2962 = vpack.c.b16 %v2456, %v2455
    %v2963 = vpack.c.b16 %v2458, %v2457
    %v2964 = vpack.c.b16 %v2460, %v2459
    %v2965 = vpack.c.b16 %v2462, %v2461
    %v2966 = vpack.c.b16 %v2464, %v2463
    %v2967 = vpack.c.b16 %v2466, %v2465
    %v2968 = vpack.c.b16 %v2468, %v2467
    %v2969 = vpack.c.b16 %v2470, %v2469
    %v2970 = vpack.c.b16 %v2472, %v2471
    %v2971 = vpack.c.b16 %v2474, %v2473
    %v2972 = vpack.c.b16 %v2476, %v2475
    %v2973 = vpack.c.b16 %v2478, %v2477
    %v2974 = vpack.c.b16 %v2480, %v2479
    %v2975 = vpack.c.b16 %v2482, %v2481
    %v2976 = vpack.c.b16 %v2484, %v2483
    %v2977 = vpack.c.b16 %v2486, %v2485
    %v2978 = vpack.c.b16 %v2488, %v2487
    %v2979 = vpack.c.b16 %v2490, %v2489
    %v2980 = vpack.c.b16 %v2492, %v2491
    %v2981 = vpack.c.b16 %v2494, %v2493
    %v2982 = vpack.c.b16 %v2496, %v2495
    %v2983 = vpack.c.b16 %v2498, %v2497
    %v2984 = vpack.c.b16 %v2500, %v2499
    %v2985 = vpack.c.b16 %v2502, %v2501
    %v2986 = vpack.c.b16 %v2504, %v2503
    %v2987 = vpack.c.b16 %v2506, %v2505
    %v2988 = vpack.c.b16 %v2508, %v2507
    %v2989 = vpack.c.b16 %v2510, %v2509
    %v2990 = vpack.c.b16 %v2512, %v2511
    %v2991 = vpack.c.b16 %v2514, %v2513
    %v2992 = vpack.c.b16 %v2516, %v2515
    %v2993 = vpack.c.b16 %v2518, %v2517
    %v2994 = vpack.c.b16 %v2520, %v2519
    %v2995 = vpack.c.b16 %v2522, %v2521
    %v2996 = vpack.c.b16 %v2524, %v2523
    %v2997 = vpack.c.b16 %v2526, %v2525
    %v2998 = vpack.c.b16 %v2528, %v2527
    %v2999 = vpack.c.b16 %v2530, %v2529
    %v3000 = vpack.c.b16 %v2532, %v2531
    %v3001 = vpack.c.b16 %v2534, %v2533
    %v3002 = vpack.c.b16 %v2536, %v2535
    %v3003 = vpack.c.b16 %v2538, %v2537
    %v3004 = vpack.c.b16 %v2540, %v2539
    %v3005 = vpack.c.b16 %v2542, %v2541
    %v3006 = vpack.c.b16 %v2544, %v2543
    %v3007 = vpack.c.b16 %v2546, %v2545
    %v3008 = vpack.c.b16 %v2548, %v2547
    %v3009 = vpack.c.b16 %v2550, %v2549
    %v3010 = vpack.c.b16 %v2552, %v2551
    %v3011 = vpack.c.b16 %v2554, %v2553
    %v3012 = vpack.c.b16 %v2556, %v2555
    %v3013 = vpack.c.b16 %v2558, %v2557
    %v3014 = vpack.c.b16 %v2560, %v2559
    %v3015 = vpack.c.b16 %v2562, %v2561
    %v3016 = vpack.c.b16 %v2564, %v2563
    %v3017 = vpack.c.b16 %v2566, %v2565
    %v3018 = vpack.c.b16 %v2568, %v2567
    %v3019 = vpack.c.b16 %v2570, %v2569
    %v3020 = vpack.c.b16 %v2572, %v2571
    %v3021 = vpack.c.b16 %v2574, %v2573
    %v3022 = vpack.c.b16 %v2576, %v2575
    %v3023 = vpack.c.b16 %v2578, %v2577
    %v3024 = vpack.c.b16 %v2580, %v2579
    %v3025 = vpack.c.b16 %v2582, %v2581
    %v3026 = vpack.c.b16 %v2584, %v2583
    %v3027 = vpack.c.b16 %v2586, %v2585
    %v3028 = vpack.c.b16 %v2588, %v2587
    %v3029 = vpack.c.b16 %v2590, %v2589
    %v3030 = vpack.c.b16 %v2592, %v2591
    %v3031 = vpack.c.b16 %v2594, %v2593
    %v3032 = vpack.c.b16 %v2596, %v2595
    %v3033 = vpack.c.b16 %v2598, %v2597
    %v3034 = vpack.c.b16 %v2600, %v2599
    %v3035 = vpack.c.b16 %v2602, %v2601
    %v3036 = vpack.c.b16 %v2604, %v2603
    %v3037 = vpack.c.b16 %v2606, %v2605
    %v3038 = vpack.c.b16 %v2608, %v2607
    %v3039 = vpack.c.b16 %v2610, %v2609
    %v3040 = vpack.c.b16 %v2612, %v2611
    %v3041 = vpack.c.b16 %v2614, %v2613
    %v3042 = vpack.c.b16 %v2616, %v2615
    %v3043 = vpack.c.b16 %v2618, %v2617
    %v3044 = vpack.c.b16 %v2620, %v2619
    %v3045 = vpack.c.b16 %v2622, %v2621
    %v3046 = vpack.c.b16 %v2624, %v2623
    %v3047 = vpack.c.b16 %v2626, %v2625
    %v3048 = vpack.c.b16 %v2628, %v2627
    %v3049 = vpack.c.b16 %v2630, %v2629
    %v3050 = vpack.c.b16 %v2632, %v2631
    %v3051 = vpack.c.b16 %v2634, %v2633
    %v3052 = vpack.c.b16 %v2636, %v2635
    %v3053 = vpack.c.b16 %v2638, %v2637
    %v3054 = vpack.c.b16 %v2640, %v2639
    %v3055 = vpack.c.b16 %v2642, %v2641
    %v3056 = vpack.c.b16 %v2644, %v2643
    %v3057 = vpack.c.b16 %v2646, %v2645
    %v3058 = vpack.c.b16 %v2648, %v2647
    %v3059 = vpack.c.b16 %v2650, %v2649
    %v3060 = vpack.c.b16 %v2652, %v2651
    %v3061 = vpack.c.b16 %v2654, %v2653
    %v3062 = vpack.c.b16 %v2656, %v2655
    %v3063 = vpack.c.b16 %v2658, %v2657
    %v3064 = vpack.c.b16 %v2660, %v2659
    %v3065 = vpack.c.b16 %v2662, %v2661
    %v3066 = vpack.c.b16 %v2664, %v2663
    %v3067 = vpack.c.b16 %v2666, %v2665
    %v3068 = vpack.c.b16 %v2668, %v2667
    %v3069 = vpack.c.b16 %v2670, %v2669
    %v3070 = vpack.c.b16 %v2672, %v2671
    %v3071 = vpack.c.b16 %v2674, %v2673
    %v3072 = vpack.c.b16 %v2676, %v2675
    %v3073 = vpack.c.b16 %v2678, %v2677
    %v3074 = vpack.c.b16 %v2680, %v2679
    %v3075 = vpack.c.b16 %v2682, %v2681
    %v3076 = vpack.c.b16 %v2684, %v2683
    %v3077 = vpack.c.b16 %v2686, %v2685
    %v3078 = vpack.c.b16 %v2688, %v2687
    %v3079 = vpack.c.b16 %v2690, %v2689
    %v3080 = vpack.c.b16 %v2692, %v2691
    %v3081 = vpack.c.b16 %v2694, %v2693
    %v3082 = vpack.c.b16 %v2696, %v2695
    %v3083 = vpack.c.b16 %v2698, %v2697
    %v3084 = vpack.c.b16 %v2700, %v2699
    %v3085 = vpack.c.b16 %v2702, %v2701
    %v3086 = vpack.c.b16 %v2704, %v2703
    %v3087 = vpack.c.b16 %v2706, %v2705
    %v3088 = vpack.c.b16 %v2708, %v2707
    %v3089 = vpack.c.b16 %v2710, %v2709
    %v3090 = vpack.c.b16 %v2712, %v2711
    %v3091 = vpack.c.b16 %v2714, %v2713
    %v3092 = vpack.c.b16 %v2716, %v2715
    %v3093 = vpack.c.b16 %v2718, %v2717
    %v3094 = vpack.c.b16 %v2720, %v2719
    %v3095 = vpack.c.b16 %v2722, %v2721
    %v3096 = vpack.c.b16 %v2724, %v2723
    %v3097 = vpack.c.b16 %v2726, %v2725
    %v3098 = vpack.c.b16 %v2728, %v2727
    %v3099 = vpack.c.b16 %v2730, %v2729
    %v3100 = vpack.c.b16 %v2732, %v2731
    %v3101 = vpack.c.b16 %v2734, %v2733
    %v3102 = vpack.c.b16 %v2736, %v2735
    %v3103 = vpack.c.b16 %v2738, %v2737
    %v3104 = vpack.c.b16 %v2740, %v2739
    %v3105 = vpack.c.b16 %v2742, %v2741
    %v3106 = vpack.c.b16 %v2744, %v2743
    %v3107 = vpack.c.b16 %v2746, %v2745
    %v3108 = vpack.c.b16 %v2748, %v2747
    %v3109 = vpack.c.b16 %v2750, %v2749
    %v3110 = vpack.c.b16 %v2752, %v2751
    %v3111 = vpack.c.b16 %v2754, %v2753
    %v3112 = vpack.c.b16 %v2756, %v2755
    %v3113 = vpack.c.b16 %v2758, %v2757
    %v3114 = vpack.c.b16 %v2760, %v2759
    %v3115 = vpack.c.b16 %v2762, %v2761
    %v3116 = vpack.c.b16 %v2764, %v2763
    %v3117 = vpack.c.b16 %v2766, %v2765
    %v3118 = vpack.c.b16 %v2768, %v2767
    %v3119 = vpack.c.b16 %v2770, %v2769
    %v3120 = vpack.c.b16 %v2772, %v2771
    %v3121 = vpack.c.b16 %v2774, %v2773
    %v3122 = vpack.c.b16 %v2776, %v2775
    %v3123 = vpack.c.b16 %v2778, %v2777
    %v3124 = vpack.c.b16 %v2780, %v2779
    %v3125 = vpack.c.b16 %v2782, %v2781
    %v3126 = vpack.c.b16 %v2784, %v2783
    %v3127 = vpack.c.b16 %v2786, %v2785
    %v3128 = vpack.c.b16 %v2788, %v2787
    %v3129 = vpack.c.b16 %v2790, %v2789
    %v3130 = vpack.c.b16 %v2792, %v2791
    %v3131 = vpack.c.b16 %v2794, %v2793
    %v3132 = vpack.c.b16 %v2796, %v2795
    %v3133 = vpack.c.b16 %v2798, %v2797
    %v3134 = vpack.c.b16 %v2800, %v2799
    %v3135 = vpack.c.b16 %v2802, %v2801
    %v3136 = vpack.c.b16 %v2804, %v2803
    %v3137 = vpack.c.b16 %v2806, %v2805
    %v3138 = vpack.c.b16 %v2808, %v2807
    %v3139 = vpack.c.b16 %v2810, %v2809
    %v3140 = vpack.c.b16 %v2812, %v2811
    %v3141 = vpack.c.b16 %v2814, %v2813
    %v3142 = vpack.c.b16 %v2816, %v2815
    %v3143 = vpack.c.b16 %v2818, %v2817
    %v3144 = vpack.c.b16 %v2820, %v2819
    %v3145 = vpack.c.b16 %v2822, %v2821
    %v3146 = vpack.c.b16 %v2824, %v2823
    %v3147 = vpack.c.b16 %v2826, %v2825
    %v3148 = vpack.c.b16 %v2828, %v2827
    %v3149 = vpack.c.b16 %v2830, %v2829
    %v3150 = vpack.c.b16 %v2832, %v2831
    %v3151 = vpack.c.b16 %v2834, %v2833
    %v3152 = vpack.c.b16 %v2836, %v2835
    %v3153 = vpack.c.b16 %v2838, %v2837
    %v3154 = vpack.c.b16 %v2840, %v2839
    %v3155 = vpack.c.b16 %v2842, %v2841
    %v3156 = vpack.c.b16 %v2844, %v2843
    %v3157 = vpack.c.b16 %v2846, %v2845
    %v3158 = vpack.c.b16 %v2848, %v2847
    %v3159 = vpack.c.b16 %v2850, %v2849
    %v3160 = vpack.c.b16 %v2852, %v2851
    %v3161 = vpack.c.b16 %v2854, %v2853
    %v3162 = vpack.c.b16 %v2856, %v2855
    %v3163 = vpack.c.b16 %v2858, %v2857
    %v3164 = vpack.c.b16 %v2860, %v2859
    %v3165 = vpack.c.b16 %v2862, %v2861
    %v3166 = vpack.c.b16 %v2864, %v2863
    %v3167 = vpack.c.b16 %v2866, %v2865
    %v3168 = vpack.c.b16 %v2868, %v2867
    %v3169 = vpack.c.b16 %v2870, %v2869
    %v3170 = vpack.c.b16 %v2872, %v2871
    %v3171 = vpack.c.b16 %v2874, %v2873
    %v3172 = vpack.c.b16 %v2876, %v2875
    %v3173 = vpack.c.b16 %v2878, %v2877
    %v3174 = vpack.c.b16 %v2880, %v2879
    %v3175 = vpack.c.b16 %v2882, %v2881
    %v3176 = vpack.c.b16 %v2884, %v2883
    %v3177 = vpack.c.b16 %v2886, %v2885
    %v3178 = vpack.c.b16 %v2888, %v2887
    %v3179 = vpack.c.b16 %v2890, %v2889
    %v3180 = vpack.c.b16 %v2892, %v2891
    %v3181 = vpack.c.b16 %v2894, %v2893
    %v3182 = vpack.c.b16 %v2896, %v2895
    %v3183 = vpack.c.b16 %v2898, %v2897
    %v3184 = vpack.c.b16 %v2900, %v2899
    %v3185 = vpack.c.b16 %v2902, %v2901
    %v3186 = vpack.c.b16 %v2904, %v2903
    %v3187 = vpack.c.b16 %v2906, %v2905
    %v3188 = vpack.c.b16 %v2908, %v2907
    %v3189 = vpack.c.b16 %v2910, %v2909
    %v3190 = vpack.c.b16 %v2912, %v2911
    %v3191 = vpack.c.b16 %v2914, %v2913
    %v3192 = vpack.c.b16 %v2916, %v2915
    %v3193 = vpack.c.b16 %v2918, %v2917
    %v3194 = vpack.c.b16 %v2920, %v2919
    %v3195 = vpack.c.b16 %v2922, %v2921
    %v3196 = vpack.c.b16 %v2924, %v2923
    %v3197 = vpack.c.b16 %v2926, %v2925
    %v3198 = vpack.c.b16 %v2928, %v2927
    %v3199 = vpack.c.b16 %v2930, %v2929
    %v3200 = vpack.c.b16 %v2932, %v2931
    %v3201 = vpack.c.b16 %v2934, %v2933
    %v3202 = vpack.c.b16 %v2936, %v2935
    %v3203 = vpack.c.b16 %v2938, %v2937
    %v3204 = vpack.c.b16 %v2940, %v2939
    %v3205 = vpack.c.b16 %v2942, %v2941
    %v3206 = vpack.c.b16 %v2944, %v2943
    %v3207 = vpack.c.b16 %v2946, %v2945
    %v3208 = vpack.c.b16 %v2948, %v2947
    %v3209 = vpack.c.b16 %v2950, %v2949
    %v3210 = vpack.c.b16 %v2952, %v2951
    %v3211 = vpack.c.b16 %v2954, %v2953
    %v3212 = vpack.c.b16 %v2956, %v2955
    %3469 = vmatprep.subr.bf16.mxu0 0
    %3470 = vmatpush1.bf16.msra.mxu0 %v2964
    %3471 = vmatprep.subr.bf16.mxu0 0
    %3472 = vmatpush1.bf16.msra.mxu0 %v2963
    %3473 = vmatprep.subr.bf16.mxu0 0
    %3474 = vmatpush1.bf16.msra.mxu0 %v2962
    %3475 = vmatprep.subr.bf16.mxu0 0
    %3476 = vmatpush1.bf16.msra.mxu0 %v2961
    %3477 = vmatprep.subr.bf16.mxu0 0
    %3478 = vmatpush1.bf16.msra.mxu0 %v2960
    %3479 = vmatprep.subr.bf16.mxu0 0
    %3480 = vmatpush1.bf16.msra.mxu0 %v2959
    %3481 = vmatprep.subr.bf16.mxu0 0
    %3482 = vmatpush1.bf16.msra.mxu0 %v2958
    %3483 = vmatprep.subr.bf16.mxu0 0
    %3484 = vmatpush1.bf16.msra.mxu0 %v2957
    %3485 = vmatprep.subr.bf16.mxu0 0
    %3486 = vmatpush2.bf16.msra.mxu0 %v2972
    %3487 = vmatprep.subr.bf16.mxu0 0
    %3488 = vmatpush2.bf16.msra.mxu0 %v2971
    %3489 = vmatprep.subr.bf16.mxu0 0
    %3490 = vmatpush2.bf16.msra.mxu0 %v2970
    %3491 = vmatprep.subr.bf16.mxu0 0
    %3492 = vmatpush2.bf16.msra.mxu0 %v2969
    %3493 = vmatprep.subr.bf16.mxu0 0
    %3494 = vmatpush2.bf16.msra.mxu0 %v2968
    %3495 = vmatprep.subr.bf16.mxu0 0
    %3496 = vmatpush2.bf16.msra.mxu0 %v2967
    %3497 = vmatprep.subr.bf16.mxu0 0
    %3498 = vmatpush2.bf16.msra.mxu0 %v2966
    %3499 = vmatprep.subr.bf16.mxu0 0
    %3500 = vmatpush2.bf16.msra.mxu0 %v2965
    %3501 = vmatprep.mubr.bf16.mxu0 %v1383
    %3502 = vmatmul.mubr.bf16.gmra.mxu0 %v1382
    %v3503 = vpop.f32.mrf.mxu0
    %v3504 = vadd.f32 %v1931, %v3503
    %v3505 = vpop.f32.mrf.mxu0
    %v3506 = vpop.f32.mrf.mxu0
    %v3507 = vpop.f32.mrf.mxu0
    %3508 = vdwg.mxu0
    %3509 = vmatprep.subr.bf16.mxu0 0
    %3510 = vmatpush1.bf16.msra.mxu0 %v2980
    %3511 = vmatprep.subr.bf16.mxu0 0
    %3512 = vmatpush1.bf16.msra.mxu0 %v2979
    %3513 = vmatprep.subr.bf16.mxu0 0
    %3514 = vmatpush1.bf16.msra.mxu0 %v2978
    %3515 = vmatprep.subr.bf16.mxu0 0
    %3516 = vmatpush1.bf16.msra.mxu0 %v2977
    %3517 = vmatprep.subr.bf16.mxu0 0
    %3518 = vmatpush1.bf16.msra.mxu0 %v2976
    %3519 = vmatprep.subr.bf16.mxu0 0
    %3520 = vmatpush1.bf16.msra.mxu0 %v2975
    %3521 = vmatprep.subr.bf16.mxu0 0
    %3522 = vmatpush1.bf16.msra.mxu0 %v2974
    %3523 = vmatprep.subr.bf16.mxu0 0
    %3524 = vmatpush1.bf16.msra.mxu0 %v2973
    %3525 = vmatprep.subr.bf16.mxu0 0
    %3526 = vmatpush2.bf16.msra.mxu0 %v2988
    %3527 = vmatprep.subr.bf16.mxu0 0
    %3528 = vmatpush2.bf16.msra.mxu0 %v2987
    %3529 = vmatprep.subr.bf16.mxu0 0
    %3530 = vmatpush2.bf16.msra.mxu0 %v2986
    %3531 = vmatprep.subr.bf16.mxu0 0
    %3532 = vmatpush2.bf16.msra.mxu0 %v2985
    %3533 = vmatprep.subr.bf16.mxu0 0
    %3534 = vmatpush2.bf16.msra.mxu0 %v2984
    %3535 = vmatprep.subr.bf16.mxu0 0
    %3536 = vmatpush2.bf16.msra.mxu0 %v2983
    %3537 = vmatprep.subr.bf16.mxu0 0
    %3538 = vmatpush2.bf16.msra.mxu0 %v2982
    %3539 = vmatprep.subr.bf16.mxu0 0
    %3540 = vmatpush2.bf16.msra.mxu0 %v2981
    %3541 = vmatprep.mubr.bf16.mxu0 %v1385
    %3542 = vmatmul.mubr.bf16.gmra.mxu0 %v1384
    %v3543 = vpop.f32.mrf.mxu0
    %v3544 = vadd.f32 %v3504, %v3543
    %v3545 = vpop.f32.mrf.mxu0
    %v3546 = vpop.f32.mrf.mxu0
    %v3547 = vpop.f32.mrf.mxu0
    %3548 = vdwg.mxu0
    %3549 = vmatprep.subr.bf16.mxu0 0
    %3550 = vmatpush1.bf16.msra.mxu0 %v2996
    %3551 = vmatprep.subr.bf16.mxu0 0
    %3552 = vmatpush1.bf16.msra.mxu0 %v2995
    %3553 = vmatprep.subr.bf16.mxu0 0
    %3554 = vmatpush1.bf16.msra.mxu0 %v2994
    %3555 = vmatprep.subr.bf16.mxu0 0
    %3556 = vmatpush1.bf16.msra.mxu0 %v2993
    %3557 = vmatprep.subr.bf16.mxu0 0
    %3558 = vmatpush1.bf16.msra.mxu0 %v2992
    %3559 = vmatprep.subr.bf16.mxu0 0
    %3560 = vmatpush1.bf16.msra.mxu0 %v2991
    %3561 = vmatprep.subr.bf16.mxu0 0
    %3562 = vmatpush1.bf16.msra.mxu0 %v2990
    %3563 = vmatprep.subr.bf16.mxu0 0
    %3564 = vmatpush1.bf16.msra.mxu0 %v2989
    %3565 = vmatprep.subr.bf16.mxu0 0
    %3566 = vmatpush2.bf16.msra.mxu0 %v3004
    %3567 = vmatprep.subr.bf16.mxu0 0
    %3568 = vmatpush2.bf16.msra.mxu0 %v3003
    %3569 = vmatprep.subr.bf16.mxu0 0
    %3570 = vmatpush2.bf16.msra.mxu0 %v3002
    %3571 = vmatprep.subr.bf16.mxu0 0
    %3572 = vmatpush2.bf16.msra.mxu0 %v3001
    %3573 = vmatprep.subr.bf16.mxu0 0
    %3574 = vmatpush2.bf16.msra.mxu0 %v3000
    %3575 = vmatprep.subr.bf16.mxu0 0
    %3576 = vmatpush2.bf16.msra.mxu0 %v2999
    %3577 = vmatprep.subr.bf16.mxu0 0
    %3578 = vmatpush2.bf16.msra.mxu0 %v2998
    %3579 = vmatprep.subr.bf16.mxu0 0
    %3580 = vmatpush2.bf16.msra.mxu0 %v2997
    %3581 = vmatprep.mubr.bf16.mxu0 %v1387
    %3582 = vmatmul.mubr.bf16.gmra.mxu0 %v1386
    %v3583 = vpop.f32.mrf.mxu0
    %v3584 = vadd.f32 %v3544, %v3583
    %v3585 = vpop.f32.mrf.mxu0
    %v3586 = vpop.f32.mrf.mxu0
    %v3587 = vpop.f32.mrf.mxu0
    %3588 = vdwg.mxu0
    %3589 = vmatprep.subr.bf16.mxu0 0
    %3590 = vmatpush1.bf16.msra.mxu0 %v3012
    %3591 = vmatprep.subr.bf16.mxu0 0
    %3592 = vmatpush1.bf16.msra.mxu0 %v3011
    %3593 = vmatprep.subr.bf16.mxu0 0
    %3594 = vmatpush1.bf16.msra.mxu0 %v3010
    %3595 = vmatprep.subr.bf16.mxu0 0
    %3596 = vmatpush1.bf16.msra.mxu0 %v3009
    %3597 = vmatprep.subr.bf16.mxu0 0
    %3598 = vmatpush1.bf16.msra.mxu0 %v3008
    %3599 = vmatprep.subr.bf16.mxu0 0
    %3600 = vmatpush1.bf16.msra.mxu0 %v3007
    %3601 = vmatprep.subr.bf16.mxu0 0
    %3602 = vmatpush1.bf16.msra.mxu0 %v3006
    %3603 = vmatprep.subr.bf16.mxu0 0
    %3604 = vmatpush1.bf16.msra.mxu0 %v3005
    %3605 = vmatprep.subr.bf16.mxu0 0
    %3606 = vmatpush2.bf16.msra.mxu0 %v3020
    %3607 = vmatprep.subr.bf16.mxu0 0
    %3608 = vmatpush2.bf16.msra.mxu0 %v3019
    %3609 = vmatprep.subr.bf16.mxu0 0
    %3610 = vmatpush2.bf16.msra.mxu0 %v3018
    %3611 = vmatprep.subr.bf16.mxu0 0
    %3612 = vmatpush2.bf16.msra.mxu0 %v3017
    %3613 = vmatprep.subr.bf16.mxu0 0
    %3614 = vmatpush2.bf16.msra.mxu0 %v3016
    %3615 = vmatprep.subr.bf16.mxu0 0
    %3616 = vmatpush2.bf16.msra.mxu0 %v3015
    %3617 = vmatprep.subr.bf16.mxu0 0
    %3618 = vmatpush2.bf16.msra.mxu0 %v3014
    %3619 = vmatprep.subr.bf16.mxu0 0
    %3620 = vmatpush2.bf16.msra.mxu0 %v3013
    %3621 = vmatprep.mubr.bf16.mxu0 %v1389
    %3622 = vmatmul.mubr.bf16.gmra.mxu0 %v1388
    %v3623 = vpop.f32.mrf.mxu0
    %v3624 = vadd.f32 %v3584, %v3623
    %v3625 = vpop.f32.mrf.mxu0
    %v3626 = vpop.f32.mrf.mxu0
    %v3627 = vpop.f32.mrf.mxu0
    %3628 = vdwg.mxu0
    %3629 = vmatprep.subr.bf16.mxu0 0
    %3630 = vmatpush1.bf16.msra.mxu0 %v3028
    %3631 = vmatprep.subr.bf16.mxu0 0
    %3632 = vmatpush1.bf16.msra.mxu0 %v3027
    %3633 = vmatprep.subr.bf16.mxu0 0
    %3634 = vmatpush1.bf16.msra.mxu0 %v3026
    %3635 = vmatprep.subr.bf16.mxu0 0
    %3636 = vmatpush1.bf16.msra.mxu0 %v3025
    %3637 = vmatprep.subr.bf16.mxu0 0
    %3638 = vmatpush1.bf16.msra.mxu0 %v3024
    %3639 = vmatprep.subr.bf16.mxu0 0
    %3640 = vmatpush1.bf16.msra.mxu0 %v3023
    %3641 = vmatprep.subr.bf16.mxu0 0
    %3642 = vmatpush1.bf16.msra.mxu0 %v3022
    %3643 = vmatprep.subr.bf16.mxu0 0
    %3644 = vmatpush1.bf16.msra.mxu0 %v3021
    %3645 = vmatprep.subr.bf16.mxu0 0
    %3646 = vmatpush2.bf16.msra.mxu0 %v3036
    %3647 = vmatprep.subr.bf16.mxu0 0
    %3648 = vmatpush2.bf16.msra.mxu0 %v3035
    %3649 = vmatprep.subr.bf16.mxu0 0
    %3650 = vmatpush2.bf16.msra.mxu0 %v3034
    %3651 = vmatprep.subr.bf16.mxu0 0
    %3652 = vmatpush2.bf16.msra.mxu0 %v3033
    %3653 = vmatprep.subr.bf16.mxu0 0
    %3654 = vmatpush2.bf16.msra.mxu0 %v3032
    %3655 = vmatprep.subr.bf16.mxu0 0
    %3656 = vmatpush2.bf16.msra.mxu0 %v3031
    %3657 = vmatprep.subr.bf16.mxu0 0
    %3658 = vmatpush2.bf16.msra.mxu0 %v3030
    %3659 = vmatprep.subr.bf16.mxu0 0
    %3660 = vmatpush2.bf16.msra.mxu0 %v3029
    %3661 = vmatprep.mubr.bf16.mxu0 %v1391
    %3662 = vmatmul.mubr.bf16.gmra.mxu0 %v1390
    %v3663 = vpop.f32.mrf.mxu0
    %v3664 = vadd.f32 %v3624, %v3663
    %v3665 = vpop.f32.mrf.mxu0
    %v3666 = vpop.f32.mrf.mxu0
    %v3667 = vpop.f32.mrf.mxu0
    %3668 = vdwg.mxu0
    %3669 = vmatprep.subr.bf16.mxu0 0
    %3670 = vmatpush1.bf16.msra.mxu0 %v3044
    %3671 = vmatprep.subr.bf16.mxu0 0
    %3672 = vmatpush1.bf16.msra.mxu0 %v3043
    %3673 = vmatprep.subr.bf16.mxu0 0
    %3674 = vmatpush1.bf16.msra.mxu0 %v3042
    %3675 = vmatprep.subr.bf16.mxu0 0
    %3676 = vmatpush1.bf16.msra.mxu0 %v3041
    %3677 = vmatprep.subr.bf16.mxu0 0
    %3678 = vmatpush1.bf16.msra.mxu0 %v3040
    %3679 = vmatprep.subr.bf16.mxu0 0
    %3680 = vmatpush1.bf16.msra.mxu0 %v3039
    %3681 = vmatprep.subr.bf16.mxu0 0
    %3682 = vmatpush1.bf16.msra.mxu0 %v3038
    %3683 = vmatprep.subr.bf16.mxu0 0
    %3684 = vmatpush1.bf16.msra.mxu0 %v3037
    %3685 = vmatprep.subr.bf16.mxu0 0
    %3686 = vmatpush2.bf16.msra.mxu0 %v3052
    %3687 = vmatprep.subr.bf16.mxu0 0
    %3688 = vmatpush2.bf16.msra.mxu0 %v3051
    %3689 = vmatprep.subr.bf16.mxu0 0
    %3690 = vmatpush2.bf16.msra.mxu0 %v3050
    %3691 = vmatprep.subr.bf16.mxu0 0
    %3692 = vmatpush2.bf16.msra.mxu0 %v3049
    %3693 = vmatprep.subr.bf16.mxu0 0
    %3694 = vmatpush2.bf16.msra.mxu0 %v3048
    %3695 = vmatprep.subr.bf16.mxu0 0
    %3696 = vmatpush2.bf16.msra.mxu0 %v3047
    %3697 = vmatprep.subr.bf16.mxu0 0
    %3698 = vmatpush2.bf16.msra.mxu0 %v3046
    %3699 = vmatprep.subr.bf16.mxu0 0
    %3700 = vmatpush2.bf16.msra.mxu0 %v3045
    %3701 = vmatprep.mubr.bf16.mxu0 %v1393
    %3702 = vmatmul.mubr.bf16.gmra.mxu0 %v1392
    %v3703 = vpop.f32.mrf.mxu0
    %v3704 = vadd.f32 %v3664, %v3703
    %v3705 = vpop.f32.mrf.mxu0
    %v3706 = vpop.f32.mrf.mxu0
    %v3707 = vpop.f32.mrf.mxu0
    %3708 = vdwg.mxu0
    %3709 = vmatprep.subr.bf16.mxu0 0
    %3710 = vmatpush1.bf16.msra.mxu0 %v3060
    %3711 = vmatprep.subr.bf16.mxu0 0
    %3712 = vmatpush1.bf16.msra.mxu0 %v3059
    %3713 = vmatprep.subr.bf16.mxu0 0
    %3714 = vmatpush1.bf16.msra.mxu0 %v3058
    %3715 = vmatprep.subr.bf16.mxu0 0
    %3716 = vmatpush1.bf16.msra.mxu0 %v3057
    %3717 = vmatprep.subr.bf16.mxu0 0
    %3718 = vmatpush1.bf16.msra.mxu0 %v3056
    %3719 = vmatprep.subr.bf16.mxu0 0
    %3720 = vmatpush1.bf16.msra.mxu0 %v3055
    %3721 = vmatprep.subr.bf16.mxu0 0
    %3722 = vmatpush1.bf16.msra.mxu0 %v3054
    %3723 = vmatprep.subr.bf16.mxu0 0
    %3724 = vmatpush1.bf16.msra.mxu0 %v3053
    %3725 = vmatprep.subr.bf16.mxu0 0
    %3726 = vmatpush2.bf16.msra.mxu0 %v3068
    %3727 = vmatprep.subr.bf16.mxu0 0
    %3728 = vmatpush2.bf16.msra.mxu0 %v3067
    %3729 = vmatprep.subr.bf16.mxu0 0
    %3730 = vmatpush2.bf16.msra.mxu0 %v3066
    %3731 = vmatprep.subr.bf16.mxu0 0
    %3732 = vmatpush2.bf16.msra.mxu0 %v3065
    %3733 = vmatprep.subr.bf16.mxu0 0
    %3734 = vmatpush2.bf16.msra.mxu0 %v3064
    %3735 = vmatprep.subr.bf16.mxu0 0
    %3736 = vmatpush2.bf16.msra.mxu0 %v3063
    %3737 = vmatprep.subr.bf16.mxu0 0
    %3738 = vmatpush2.bf16.msra.mxu0 %v3062
    %3739 = vmatprep.subr.bf16.mxu0 0
    %3740 = vmatpush2.bf16.msra.mxu0 %v3061
    %3741 = vmatprep.mubr.bf16.mxu0 %v1395
    %3742 = vmatmul.mubr.bf16.gmra.mxu0 %v1394
    %v3743 = vpop.f32.mrf.mxu0
    %v3744 = vadd.f32 %v3704, %v3743
    %v3745 = vpop.f32.mrf.mxu0
    %v3746 = vpop.f32.mrf.mxu0
    %v3747 = vpop.f32.mrf.mxu0
    %3748 = vdwg.mxu0
    %3749 = vmatprep.subr.bf16.mxu0 0
    %3750 = vmatpush1.bf16.msra.mxu0 %v3076
    %3751 = vmatprep.subr.bf16.mxu0 0
    %3752 = vmatpush1.bf16.msra.mxu0 %v3075
    %3753 = vmatprep.subr.bf16.mxu0 0
    %3754 = vmatpush1.bf16.msra.mxu0 %v3074
    %3755 = vmatprep.subr.bf16.mxu0 0
    %3756 = vmatpush1.bf16.msra.mxu0 %v3073
    %3757 = vmatprep.subr.bf16.mxu0 0
    %3758 = vmatpush1.bf16.msra.mxu0 %v3072
    %3759 = vmatprep.subr.bf16.mxu0 0
    %3760 = vmatpush1.bf16.msra.mxu0 %v3071
    %3761 = vmatprep.subr.bf16.mxu0 0
    %3762 = vmatpush1.bf16.msra.mxu0 %v3070
    %3763 = vmatprep.subr.bf16.mxu0 0
    %3764 = vmatpush1.bf16.msra.mxu0 %v3069
    %3765 = vmatprep.subr.bf16.mxu0 0
    %3766 = vmatpush2.bf16.msra.mxu0 %v3084
    %3767 = vmatprep.subr.bf16.mxu0 0
    %3768 = vmatpush2.bf16.msra.mxu0 %v3083
    %3769 = vmatprep.subr.bf16.mxu0 0
    %3770 = vmatpush2.bf16.msra.mxu0 %v3082
    %3771 = vmatprep.subr.bf16.mxu0 0
    %3772 = vmatpush2.bf16.msra.mxu0 %v3081
    %3773 = vmatprep.subr.bf16.mxu0 0
    %3774 = vmatpush2.bf16.msra.mxu0 %v3080
    %3775 = vmatprep.subr.bf16.mxu0 0
    %3776 = vmatpush2.bf16.msra.mxu0 %v3079
    %3777 = vmatprep.subr.bf16.mxu0 0
    %3778 = vmatpush2.bf16.msra.mxu0 %v3078
    %3779 = vmatprep.subr.bf16.mxu0 0
    %3780 = vmatpush2.bf16.msra.mxu0 %v3077
    %3781 = vmatprep.mubr.bf16.mxu0 %v1397
    %3782 = vmatmul.mubr.bf16.gmra.mxu0 %v1396
    %v3783 = vpop.f32.mrf.mxu0
    %v3784 = vadd.f32 %v3744, %v3783
    %v3785 = vpop.f32.mrf.mxu0
    %v3786 = vpop.f32.mrf.mxu0
    %v3787 = vpop.f32.mrf.mxu0
    %3788 = vdwg.mxu0
    %3789 = vmatprep.subr.bf16.mxu0 0
    %3790 = vmatpush1.bf16.msra.mxu0 %v3092
    %3791 = vmatprep.subr.bf16.mxu0 0
    %3792 = vmatpush1.bf16.msra.mxu0 %v3091
    %3793 = vmatprep.subr.bf16.mxu0 0
    %3794 = vmatpush1.bf16.msra.mxu0 %v3090
    %3795 = vmatprep.subr.bf16.mxu0 0
    %3796 = vmatpush1.bf16.msra.mxu0 %v3089
    %3797 = vmatprep.subr.bf16.mxu0 0
    %3798 = vmatpush1.bf16.msra.mxu0 %v3088
    %3799 = vmatprep.subr.bf16.mxu0 0
    %3800 = vmatpush1.bf16.msra.mxu0 %v3087
    %3801 = vmatprep.subr.bf16.mxu0 0
    %3802 = vmatpush1.bf16.msra.mxu0 %v3086
    %3803 = vmatprep.subr.bf16.mxu0 0
    %3804 = vmatpush1.bf16.msra.mxu0 %v3085
    %3805 = vmatprep.subr.bf16.mxu0 0
    %3806 = vmatpush2.bf16.msra.mxu0 %v3100
    %3807 = vmatprep.subr.bf16.mxu0 0
    %3808 = vmatpush2.bf16.msra.mxu0 %v3099
    %3809 = vmatprep.subr.bf16.mxu0 0
    %3810 = vmatpush2.bf16.msra.mxu0 %v3098
    %3811 = vmatprep.subr.bf16.mxu0 0
    %3812 = vmatpush2.bf16.msra.mxu0 %v3097
    %3813 = vmatprep.subr.bf16.mxu0 0
    %3814 = vmatpush2.bf16.msra.mxu0 %v3096
    %3815 = vmatprep.subr.bf16.mxu0 0
    %3816 = vmatpush2.bf16.msra.mxu0 %v3095
    %3817 = vmatprep.subr.bf16.mxu0 0
    %3818 = vmatpush2.bf16.msra.mxu0 %v3094
    %3819 = vmatprep.subr.bf16.mxu0 0
    %3820 = vmatpush2.bf16.msra.mxu0 %v3093
    %3821 = vmatprep.mubr.bf16.mxu0 %v1399
    %3822 = vmatmul.mubr.bf16.gmra.mxu0 %v1398
    %v3823 = vpop.f32.mrf.mxu0
    %v3824 = vadd.f32 %v3784, %v3823
    %v3825 = vpop.f32.mrf.mxu0
    %v3826 = vpop.f32.mrf.mxu0
    %v3827 = vpop.f32.mrf.mxu0
    %3828 = vdwg.mxu0
    %3829 = vmatprep.subr.bf16.mxu0 0
    %3830 = vmatpush1.bf16.msra.mxu0 %v3108
    %3831 = vmatprep.subr.bf16.mxu0 0
    %3832 = vmatpush1.bf16.msra.mxu0 %v3107
    %3833 = vmatprep.subr.bf16.mxu0 0
    %3834 = vmatpush1.bf16.msra.mxu0 %v3106
    %3835 = vmatprep.subr.bf16.mxu0 0
    %3836 = vmatpush1.bf16.msra.mxu0 %v3105
    %3837 = vmatprep.subr.bf16.mxu0 0
    %3838 = vmatpush1.bf16.msra.mxu0 %v3104
    %3839 = vmatprep.subr.bf16.mxu0 0
    %3840 = vmatpush1.bf16.msra.mxu0 %v3103
    %3841 = vmatprep.subr.bf16.mxu0 0
    %3842 = vmatpush1.bf16.msra.mxu0 %v3102
    %3843 = vmatprep.subr.bf16.mxu0 0
    %3844 = vmatpush1.bf16.msra.mxu0 %v3101
    %3845 = vmatprep.subr.bf16.mxu0 0
    %3846 = vmatpush2.bf16.msra.mxu0 %v3116
    %3847 = vmatprep.subr.bf16.mxu0 0
    %3848 = vmatpush2.bf16.msra.mxu0 %v3115
    %3849 = vmatprep.subr.bf16.mxu0 0
    %3850 = vmatpush2.bf16.msra.mxu0 %v3114
    %3851 = vmatprep.subr.bf16.mxu0 0
    %3852 = vmatpush2.bf16.msra.mxu0 %v3113
    %3853 = vmatprep.subr.bf16.mxu0 0
    %3854 = vmatpush2.bf16.msra.mxu0 %v3112
    %3855 = vmatprep.subr.bf16.mxu0 0
    %3856 = vmatpush2.bf16.msra.mxu0 %v3111
    %3857 = vmatprep.subr.bf16.mxu0 0
    %3858 = vmatpush2.bf16.msra.mxu0 %v3110
    %3859 = vmatprep.subr.bf16.mxu0 0
    %3860 = vmatpush2.bf16.msra.mxu0 %v3109
    %3861 = vmatprep.mubr.bf16.mxu0 %v1401
    %3862 = vmatmul.mubr.bf16.gmra.mxu0 %v1400
    %v3863 = vpop.f32.mrf.mxu0
    %v3864 = vadd.f32 %v3824, %v3863
    %v3865 = vpop.f32.mrf.mxu0
    %v3866 = vpop.f32.mrf.mxu0
    %v3867 = vpop.f32.mrf.mxu0
    %3868 = vdwg.mxu0
    %3869 = vmatprep.subr.bf16.mxu0 0
    %3870 = vmatpush1.bf16.msra.mxu0 %v3124
    %3871 = vmatprep.subr.bf16.mxu0 0
    %3872 = vmatpush1.bf16.msra.mxu0 %v3123
    %3873 = vmatprep.subr.bf16.mxu0 0
    %3874 = vmatpush1.bf16.msra.mxu0 %v3122
    %3875 = vmatprep.subr.bf16.mxu0 0
    %3876 = vmatpush1.bf16.msra.mxu0 %v3121
    %3877 = vmatprep.subr.bf16.mxu0 0
    %3878 = vmatpush1.bf16.msra.mxu0 %v3120
    %3879 = vmatprep.subr.bf16.mxu0 0
    %3880 = vmatpush1.bf16.msra.mxu0 %v3119
    %3881 = vmatprep.subr.bf16.mxu0 0
    %3882 = vmatpush1.bf16.msra.mxu0 %v3118
    %3883 = vmatprep.subr.bf16.mxu0 0
    %3884 = vmatpush1.bf16.msra.mxu0 %v3117
    %3885 = vmatprep.subr.bf16.mxu0 0
    %3886 = vmatpush2.bf16.msra.mxu0 %v3132
    %3887 = vmatprep.subr.bf16.mxu0 0
    %3888 = vmatpush2.bf16.msra.mxu0 %v3131
    %3889 = vmatprep.subr.bf16.mxu0 0
    %3890 = vmatpush2.bf16.msra.mxu0 %v3130
    %3891 = vmatprep.subr.bf16.mxu0 0
    %3892 = vmatpush2.bf16.msra.mxu0 %v3129
    %3893 = vmatprep.subr.bf16.mxu0 0
    %3894 = vmatpush2.bf16.msra.mxu0 %v3128
    %3895 = vmatprep.subr.bf16.mxu0 0
    %3896 = vmatpush2.bf16.msra.mxu0 %v3127
    %3897 = vmatprep.subr.bf16.mxu0 0
    %3898 = vmatpush2.bf16.msra.mxu0 %v3126
    %3899 = vmatprep.subr.bf16.mxu0 0
    %3900 = vmatpush2.bf16.msra.mxu0 %v3125
    %3901 = vmatprep.mubr.bf16.mxu0 %v1403
    %3902 = vmatmul.mubr.bf16.gmra.mxu0 %v1402
    %v3903 = vpop.f32.mrf.mxu0
    %v3904 = vadd.f32 %v3864, %v3903
    %v3905 = vpop.f32.mrf.mxu0
    %v3906 = vpop.f32.mrf.mxu0
    %v3907 = vpop.f32.mrf.mxu0
    %3908 = vdwg.mxu0
    %3909 = vmatprep.subr.bf16.mxu0 0
    %3910 = vmatpush1.bf16.msra.mxu0 %v3140
    %3911 = vmatprep.subr.bf16.mxu0 0
    %3912 = vmatpush1.bf16.msra.mxu0 %v3139
    %3913 = vmatprep.subr.bf16.mxu0 0
    %3914 = vmatpush1.bf16.msra.mxu0 %v3138
    %3915 = vmatprep.subr.bf16.mxu0 0
    %3916 = vmatpush1.bf16.msra.mxu0 %v3137
    %3917 = vmatprep.subr.bf16.mxu0 0
    %3918 = vmatpush1.bf16.msra.mxu0 %v3136
    %3919 = vmatprep.subr.bf16.mxu0 0
    %3920 = vmatpush1.bf16.msra.mxu0 %v3135
    %3921 = vmatprep.subr.bf16.mxu0 0
    %3922 = vmatpush1.bf16.msra.mxu0 %v3134
    %3923 = vmatprep.subr.bf16.mxu0 0
    %3924 = vmatpush1.bf16.msra.mxu0 %v3133
    %3925 = vmatprep.subr.bf16.mxu0 0
    %3926 = vmatpush2.bf16.msra.mxu0 %v3148
    %3927 = vmatprep.subr.bf16.mxu0 0
    %3928 = vmatpush2.bf16.msra.mxu0 %v3147
    %3929 = vmatprep.subr.bf16.mxu0 0
    %3930 = vmatpush2.bf16.msra.mxu0 %v3146
    %3931 = vmatprep.subr.bf16.mxu0 0
    %3932 = vmatpush2.bf16.msra.mxu0 %v3145
    %3933 = vmatprep.subr.bf16.mxu0 0
    %3934 = vmatpush2.bf16.msra.mxu0 %v3144
    %3935 = vmatprep.subr.bf16.mxu0 0
    %3936 = vmatpush2.bf16.msra.mxu0 %v3143
    %3937 = vmatprep.subr.bf16.mxu0 0
    %3938 = vmatpush2.bf16.msra.mxu0 %v3142
    %3939 = vmatprep.subr.bf16.mxu0 0
    %3940 = vmatpush2.bf16.msra.mxu0 %v3141
    %3941 = vmatprep.mubr.bf16.mxu0 %v1405
    %3942 = vmatmul.mubr.bf16.gmra.mxu0 %v1404
    %v3943 = vpop.f32.mrf.mxu0
    %v3944 = vadd.f32 %v3904, %v3943
    %v3945 = vpop.f32.mrf.mxu0
    %v3946 = vpop.f32.mrf.mxu0
    %v3947 = vpop.f32.mrf.mxu0
    %3948 = vdwg.mxu0
    %3949 = vmatprep.subr.bf16.mxu0 0
    %3950 = vmatpush1.bf16.msra.mxu0 %v3156
    %3951 = vmatprep.subr.bf16.mxu0 0
    %3952 = vmatpush1.bf16.msra.mxu0 %v3155
    %3953 = vmatprep.subr.bf16.mxu0 0
    %3954 = vmatpush1.bf16.msra.mxu0 %v3154
    %3955 = vmatprep.subr.bf16.mxu0 0
    %3956 = vmatpush1.bf16.msra.mxu0 %v3153
    %3957 = vmatprep.subr.bf16.mxu0 0
    %3958 = vmatpush1.bf16.msra.mxu0 %v3152
    %3959 = vmatprep.subr.bf16.mxu0 0
    %3960 = vmatpush1.bf16.msra.mxu0 %v3151
    %3961 = vmatprep.subr.bf16.mxu0 0
    %3962 = vmatpush1.bf16.msra.mxu0 %v3150
    %3963 = vmatprep.subr.bf16.mxu0 0
    %3964 = vmatpush1.bf16.msra.mxu0 %v3149
    %3965 = vmatprep.subr.bf16.mxu0 0
    %3966 = vmatpush2.bf16.msra.mxu0 %v3164
    %3967 = vmatprep.subr.bf16.mxu0 0
    %3968 = vmatpush2.bf16.msra.mxu0 %v3163
    %3969 = vmatprep.subr.bf16.mxu0 0
    %3970 = vmatpush2.bf16.msra.mxu0 %v3162
    %3971 = vmatprep.subr.bf16.mxu0 0
    %3972 = vmatpush2.bf16.msra.mxu0 %v3161
    %3973 = vmatprep.subr.bf16.mxu0 0
    %3974 = vmatpush2.bf16.msra.mxu0 %v3160
    %3975 = vmatprep.subr.bf16.mxu0 0
    %3976 = vmatpush2.bf16.msra.mxu0 %v3159
    %3977 = vmatprep.subr.bf16.mxu0 0
    %3978 = vmatpush2.bf16.msra.mxu0 %v3158
    %3979 = vmatprep.subr.bf16.mxu0 0
    %3980 = vmatpush2.bf16.msra.mxu0 %v3157
    %3981 = vmatprep.mubr.bf16.mxu0 %v1407
    %3982 = vmatmul.mubr.bf16.gmra.mxu0 %v1406
    %v3983 = vpop.f32.mrf.mxu0
    %v3984 = vadd.f32 %v3944, %v3983
    %v3985 = vpop.f32.mrf.mxu0
    %v3986 = vpop.f32.mrf.mxu0
    %v3987 = vpop.f32.mrf.mxu0
    %3988 = vdwg.mxu0
    %3989 = vmatprep.subr.bf16.mxu0 0
    %3990 = vmatpush1.bf16.msra.mxu0 %v3172
    %3991 = vmatprep.subr.bf16.mxu0 0
    %3992 = vmatpush1.bf16.msra.mxu0 %v3171
    %3993 = vmatprep.subr.bf16.mxu0 0
    %3994 = vmatpush1.bf16.msra.mxu0 %v3170
    %3995 = vmatprep.subr.bf16.mxu0 0
    %3996 = vmatpush1.bf16.msra.mxu0 %v3169
    %3997 = vmatprep.subr.bf16.mxu0 0
    %3998 = vmatpush1.bf16.msra.mxu0 %v3168
    %3999 = vmatprep.subr.bf16.mxu0 0
    %4000 = vmatpush1.bf16.msra.mxu0 %v3167
    %4001 = vmatprep.subr.bf16.mxu0 0
    %4002 = vmatpush1.bf16.msra.mxu0 %v3166
    %4003 = vmatprep.subr.bf16.mxu0 0
    %4004 = vmatpush1.bf16.msra.mxu0 %v3165
    %4005 = vmatprep.subr.bf16.mxu0 0
    %4006 = vmatpush2.bf16.msra.mxu0 %v3180
    %4007 = vmatprep.subr.bf16.mxu0 0
    %4008 = vmatpush2.bf16.msra.mxu0 %v3179
    %4009 = vmatprep.subr.bf16.mxu0 0
    %4010 = vmatpush2.bf16.msra.mxu0 %v3178
    %4011 = vmatprep.subr.bf16.mxu0 0
    %4012 = vmatpush2.bf16.msra.mxu0 %v3177
    %4013 = vmatprep.subr.bf16.mxu0 0
    %4014 = vmatpush2.bf16.msra.mxu0 %v3176
    %4015 = vmatprep.subr.bf16.mxu0 0
    %4016 = vmatpush2.bf16.msra.mxu0 %v3175
    %4017 = vmatprep.subr.bf16.mxu0 0
    %4018 = vmatpush2.bf16.msra.mxu0 %v3174
    %4019 = vmatprep.subr.bf16.mxu0 0
    %4020 = vmatpush2.bf16.msra.mxu0 %v3173
    %4021 = vmatprep.mubr.bf16.mxu0 %v1409
    %4022 = vmatmul.mubr.bf16.gmra.mxu0 %v1408
    %v4023 = vpop.f32.mrf.mxu0
    %v4024 = vadd.f32 %v3984, %v4023
    %v4025 = vpop.f32.mrf.mxu0
    %v4026 = vpop.f32.mrf.mxu0
    %v4027 = vpop.f32.mrf.mxu0
    %4028 = vdwg.mxu0
    %4029 = vmatprep.subr.bf16.mxu0 0
    %4030 = vmatpush1.bf16.msra.mxu0 %v3188
    %4031 = vmatprep.subr.bf16.mxu0 0
    %4032 = vmatpush1.bf16.msra.mxu0 %v3187
    %4033 = vmatprep.subr.bf16.mxu0 0
    %4034 = vmatpush1.bf16.msra.mxu0 %v3186
    %4035 = vmatprep.subr.bf16.mxu0 0
    %4036 = vmatpush1.bf16.msra.mxu0 %v3185
    %4037 = vmatprep.subr.bf16.mxu0 0
    %4038 = vmatpush1.bf16.msra.mxu0 %v3184
    %4039 = vmatprep.subr.bf16.mxu0 0
    %4040 = vmatpush1.bf16.msra.mxu0 %v3183
    %4041 = vmatprep.subr.bf16.mxu0 0
    %4042 = vmatpush1.bf16.msra.mxu0 %v3182
    %4043 = vmatprep.subr.bf16.mxu0 0
    %4044 = vmatpush1.bf16.msra.mxu0 %v3181
    %4045 = vmatprep.subr.bf16.mxu0 0
    %4046 = vmatpush2.bf16.msra.mxu0 %v3196
    %4047 = vmatprep.subr.bf16.mxu0 0
    %4048 = vmatpush2.bf16.msra.mxu0 %v3195
    %4049 = vmatprep.subr.bf16.mxu0 0
    %4050 = vmatpush2.bf16.msra.mxu0 %v3194
    %4051 = vmatprep.subr.bf16.mxu0 0
    %4052 = vmatpush2.bf16.msra.mxu0 %v3193
    %4053 = vmatprep.subr.bf16.mxu0 0
    %4054 = vmatpush2.bf16.msra.mxu0 %v3192
    %4055 = vmatprep.subr.bf16.mxu0 0
    %4056 = vmatpush2.bf16.msra.mxu0 %v3191
    %4057 = vmatprep.subr.bf16.mxu0 0
    %4058 = vmatpush2.bf16.msra.mxu0 %v3190
    %4059 = vmatprep.subr.bf16.mxu0 0
    %4060 = vmatpush2.bf16.msra.mxu0 %v3189
    %4061 = vmatprep.mubr.bf16.mxu0 %v1411
    %4062 = vmatmul.mubr.bf16.gmra.mxu0 %v1410
    %v4063 = vpop.f32.mrf.mxu0
    %v4064 = vadd.f32 %v4024, %v4063
    %v4065 = vpop.f32.mrf.mxu0
    %v4066 = vpop.f32.mrf.mxu0
    %v4067 = vpop.f32.mrf.mxu0
    %4068 = vdwg.mxu0
    %4069 = vmatprep.subr.bf16.mxu0 0
    %4070 = vmatpush1.bf16.msra.mxu0 %v3204
    %4071 = vmatprep.subr.bf16.mxu0 0
    %4072 = vmatpush1.bf16.msra.mxu0 %v3203
    %4073 = vmatprep.subr.bf16.mxu0 0
    %4074 = vmatpush1.bf16.msra.mxu0 %v3202
    %4075 = vmatprep.subr.bf16.mxu0 0
    %4076 = vmatpush1.bf16.msra.mxu0 %v3201
    %4077 = vmatprep.subr.bf16.mxu0 0
    %4078 = vmatpush1.bf16.msra.mxu0 %v3200
    %4079 = vmatprep.subr.bf16.mxu0 0
    %4080 = vmatpush1.bf16.msra.mxu0 %v3199
    %4081 = vmatprep.subr.bf16.mxu0 0
    %4082 = vmatpush1.bf16.msra.mxu0 %v3198
    %4083 = vmatprep.subr.bf16.mxu0 0
    %4084 = vmatpush1.bf16.msra.mxu0 %v3197
    %4085 = vmatprep.subr.bf16.mxu0 0
    %4086 = vmatpush2.bf16.msra.mxu0 %v3212
    %4087 = vmatprep.subr.bf16.mxu0 0
    %4088 = vmatpush2.bf16.msra.mxu0 %v3211
    %4089 = vmatprep.subr.bf16.mxu0 0
    %4090 = vmatpush2.bf16.msra.mxu0 %v3210
    %4091 = vmatprep.subr.bf16.mxu0 0
    %4092 = vmatpush2.bf16.msra.mxu0 %v3209
    %4093 = vmatprep.subr.bf16.mxu0 0
    %4094 = vmatpush2.bf16.msra.mxu0 %v3208
    %4095 = vmatprep.subr.bf16.mxu0 0
    %4096 = vmatpush2.bf16.msra.mxu0 %v3207
    %4097 = vmatprep.subr.bf16.mxu0 0
    %4098 = vmatpush2.bf16.msra.mxu0 %v3206
    %4099 = vmatprep.subr.bf16.mxu0 0
    %4100 = vmatpush2.bf16.msra.mxu0 %v3205
    %4101 = vmatprep.mubr.bf16.mxu0 %v1413
    %4102 = vmatmul.mubr.bf16.gmra.mxu0 %v1412
    %v4103 = vpop.f32.mrf.mxu0
    %v4104 = vadd.f32 %v4064, %v4103
    %v4105 = vpop.f32.mrf.mxu0
    %v4106 = vpop.f32.mrf.mxu0
    %v4107 = vpop.f32.mrf.mxu0
    %4108 = vdwg.mxu0
    %4109 = vst [vmem:[#allocation5] sm:$0x3] %v4104
    // Predicated region
    $region22: #{tinybagnet_forward.1} parent=1 // pred_check
      _
    $region23: #{tinybagnet_forward.1} parent=1 // pred_check_branch
      %4111 = sbr.rel (0) target = $region25
    $region24: #{tinybagnet_forward.1} parent=1 // pred_region
      %s4113 = ssub.s32 32, 32
      %4114 = vsyncadd [#allocation4], %s4113
      %s4116 = sshll.u32 [#allocation5], 4
      %s4117 = int_to_ptr.vmem [resolvable:$true] %s4116
      %4119 = dma.vmem_to_hbm [thread:$0]  %s4117, 32, %s4, [#allocation4]
    $region25: #{tinybagnet_forward.1} parent=1 // pred_fallthru
      _
    // Predicated region
    $region26: #{tinybagnet_forward.1} parent=1 // pred_check
      _
    $region27: #{tinybagnet_forward.1} parent=1 // pred_check_branch
      %4121 = sbr.rel (0) target = $region29
    $region28: #{tinybagnet_forward.1} parent=1 // pred_region
      %4122 = dma.done [#allocation4], 32
    $region29: #{tinybagnet_forward.1} parent=1 // pred_fallthru
      _
    %4123 = vsyncpa [#allocation3], 1
    %4124 = vsyncpa [#allocation4], 1

</llo_original>
